<compile_context>
chip_gen: v7x
topology: tpu7x:2x2x1
jax: 0.10.0
libtpu: 0.0.40
codegen_flags: <defaults>
</compile_context>

<pallas_src>
import numpy as np

import jax
import jax.numpy as jnp
from jax import lax
from jax.experimental import pallas as pl
from jax.experimental.pallas import tpu as pltpu


# ------------------------- param preprocessing ------------------------------

def _prepare_conv(w_oihw, b, size, k=5):
    """Fold kj-window / Cin / W-pool phase into matmul weights.

    Returns:
      M        (2k, W*Cin, Wp*Cout)  column weights, index with 2*ki + phase
      bias_row (1, Wp*Cout)
      rowsel   (2, Hp, Ho)           one-hot H-pool row selectors
    """
    Cout, Cin = int(w_oihw.shape[0]), int(w_oihw.shape[1])
    W = size
    Ho = Wo = size - k + 1
    Hp, Wp = Ho // 2, Wo // 2
    wt = jnp.transpose(w_oihw, (2, 3, 1, 0)).astype(jnp.float32)  # (ki,kj,ci,co)

    # sel[d, wj, kj, pw] = 1  iff  wj == 2*pw + d + kj
    # (folds the kj window, VALID conv and W-pool phase d into one weight).
    sel = np.zeros((2, W, k, Wp), np.float32)
    for d in range(2):
        for pw in range(Wp):
            for kj in range(k):
                sel[d, 2 * pw + d + kj, kj, pw] = 1.0
    M = jnp.einsum("dwjp,ijco->idwcpo", jnp.asarray(sel), wt)
    M = M.reshape(k * 2, W * Cin, Wp * Cout)            # index with 2*ki + d

    bias_row = jnp.tile(b.astype(jnp.float32), Wp).reshape(1, Wp * Cout)

    # rowsel[d, ph, h] = 1  iff  h == 2*ph + d   (one-hot H-pool selectors).
    rsel = np.zeros((2, Hp, Ho), np.float32)
    for d in range(2):
        for ph in range(Hp):
            rsel[d, ph, 2 * ph + d] = 1.0
    return M, bias_row, jnp.asarray(rsel)


def prepare_params(params):
    conv1 = _prepare_conv(params["w1"], params["b1"], size=32)
    conv2 = _prepare_conv(params["w2"], params["b2"], size=14)

    # fc1 rows: torch flatten order is (c, h, w); our slab flatten is (h, w, c).
    wf1 = params["wf1"].reshape(16, 5, 5, 120)
    wf1 = jnp.transpose(wf1, (1, 2, 0, 3)).reshape(5, 80, 120)   # (h, w*c, out)
    wf1 = jnp.pad(wf1, ((0, 0), (0, 0), (0, 8)))                 # (5, 80, 128)
    bf1 = jnp.pad(params["bf1"], (0, 8)).reshape(1, 128)
    wf2 = jnp.pad(params["wf2"], ((0, 8), (0, 44)))              # (128, 128)
    bf2 = jnp.pad(params["bf2"], (0, 44)).reshape(1, 128)
    wf3 = jnp.pad(params["wf3"], ((0, 44), (0, 0)))              # (128, 10)
    bf3 = params["bf3"].reshape(1, 10)
    return {"conv1": conv1, "conv2": conv2,
            "fc": (wf1, bf1, wf2, bf2, wf3, bf3)}


# ----------------------------- fused kernel ---------------------------------

def _conv_relu_pool(X, m_ref, b_ref, rs_ref, k):
    """(H, W*Cin) slab -> pooled (Hp, Wp*Cout) slab, all on the MXU."""
    H = X.shape[0]
    Ho = H - k + 1                              # conv output rows
    n_out = m_ref.shape[-1]                     # Wp * Cout
    acc_e = jnp.zeros((Ho, n_out), jnp.float32)     # even-W pool phase
    acc_o = jnp.zeros((Ho, n_out), jnp.float32)     # odd-W  pool phase
    for ki in range(k):                             # static, unrolled
        rows = X[ki:ki + Ho, :]                     # static slice (Ho, W*Cin)
        acc_e = acc_e + jnp.dot(rows, m_ref[2 * ki + 0],
                                preferred_element_type=jnp.float32)
        acc_o = acc_o + jnp.dot(rows, m_ref[2 * ki + 1],
                                preferred_element_type=jnp.float32)
    # W-direction pool, then bias + ReLU (max / +bias / relu commute).
    y = jnp.maximum(jnp.maximum(acc_e, acc_o) + b_ref[...], 0.0)
    # H-direction pool via one-hot row-selection matmuls.
    top = jnp.dot(rs_ref[0], y, preferred_element_type=jnp.float32)
    bot = jnp.dot(rs_ref[1], y, preferred_element_type=jnp.float32)
    return jnp.maximum(top, bot)


def _lenet_kernel(x_ref, m1_ref, b1_ref, rs1_ref, m2_ref, b2_ref, rs2_ref,
                  w1_ref, c1_ref, w2_ref, c2_ref, w3_ref, c3_ref, o_ref):
    """One batch sample: (32, 32) image -> (1, 10) logits, fully fused."""
    y1 = _conv_relu_pool(x_ref[...], m1_ref, b1_ref, rs1_ref, k=5)   # (14, 84)
    y2 = _conv_relu_pool(y1, m2_ref, b2_ref, rs2_ref, k=5)           # (5, 80)

    # fc1: the flatten is folded into the weight layout -> 5 row-slab matmuls.
    h = c1_ref[...]                                                  # (1, 128)
    for r in range(5):
        h = h + jnp.dot(y2[r:r + 1, :], w1_ref[r],
                        preferred_element_type=jnp.float32)
    h = jnp.maximum(h, 0.0)
    h = jnp.maximum(jnp.dot(h, w2_ref[...],
                            preferred_element_type=jnp.float32) + c2_ref[...],
                    0.0)                                             # (1, 128)
    out = jnp.dot(h, w3_ref[...],
                  preferred_element_type=jnp.float32) + c3_ref[...]  # (1, 10)
    o_ref[...] = out.astype(o_ref.dtype)


# ------------------------------ forward pass --------------------------------

def net_forward(prepared, x_nchw):
    """LeNet forward.  x: (N, 1, 32, 32) float32 NCHW -> (N, 10)."""
    N = x_nchw.shape[0]
    assert x_nchw.shape[1:] == (1, 32, 32)
    x = x_nchw.reshape(N, 32, 32)                   # Cin=1 -> (H, W*Cin) slab

    m1, b1, rs1 = prepared["conv1"]
    m2, b2, rs2 = prepared["conv2"]
    w1, c1, w2, c2, w3, c3 = prepared["fc"]

    def const(a):
        zero = (0,) * a.ndim
        return pl.BlockSpec(a.shape, lambda n, z=zero: z)

    out = pl.pallas_call(
        _lenet_kernel,
        out_shape=jax.ShapeDtypeStruct((N, 1, 10), jnp.float32),
        grid=(N,),
        in_specs=[
            pl.BlockSpec((None, 32, 32), lambda n: (n, 0, 0)),
            const(m1), const(b1), const(rs1),
            const(m2), const(b2), const(rs2),
            const(w1), const(c1), const(w2), const(c2), const(w3), const(c3),
        ],
        out_specs=pl.BlockSpec((None, 1, 10), lambda n: (n, 0, 0)),
        compiler_params=pltpu.CompilerParams(
            dimension_semantics=("parallel",)),
    )(x, m1, b1, rs1, m2, b2, rs2, w1, c1, w2, c2, w3, c3)
    return out.reshape(N, 10)


def init_params(key):
    """Deterministic, PyTorch-like uniform(-1/sqrt(fan_in), 1/sqrt(fan_in))."""
    keys = jax.random.split(key, 10)

    def u(k, shape, fan_in):
        bound = 1.0 / jnp.sqrt(fan_in)
        return jax.random.uniform(k, shape, jnp.float32, -bound, bound)

    return {
        "w1": u(keys[0], (6, 1, 5, 5), 1 * 5 * 5),
        "b1": u(keys[1], (6,), 1 * 5 * 5),
        "w2": u(keys[2], (16, 6, 5, 5), 6 * 5 * 5),
        "b2": u(keys[3], (16,), 6 * 5 * 5),
        "wf1": u(keys[4], (400, 120), 400),
        "bf1": u(keys[5], (120,), 400),
        "wf2": u(keys[6], (120, 84), 120),
        "bf2": u(keys[7], (84,), 120),
        "wf3": u(keys[8], (84, 10), 84),
        "bf3": u(keys[9], (10,), 84),
    }


# ------------------------- pure-JAX reference check -------------------------

def reference_forward(params, x_nchw):
    def conv(x, w, b):
        y = lax.conv_general_dilated(
            x, w, window_strides=(1, 1), padding="VALID",
            dimension_numbers=("NCHW", "OIHW", "NCHW"))
        return jax.nn.relu(y + b[None, :, None, None])

    def pool(x):
        return lax.reduce_window(x, -jnp.inf, lax.max,
                                 (1, 1, 2, 2), (1, 1, 2, 2), "VALID")

    x = pool(conv(x_nchw, params["w1"], params["b1"]))
    x = pool(conv(x, params["w2"], params["b2"]))
    x = x.reshape(x.shape[0], -1)
    x = jax.nn.relu(x @ params["wf1"] + params["bf1"])
    x = jax.nn.relu(x @ params["wf2"] + params["bf2"])
    return x @ params["wf3"] + params["bf3"]


if __name__ == "__main__":
    key = jax.random.PRNGKey(0)
    k_x, k_p = jax.random.split(key)
    # Spatial size must be 32x32 so that fc1 sees 16*5*5 features (as in Net).
    x = jax.random.normal(k_x, (2, 1, 32, 32), jnp.float32)
    params = init_params(k_p)
    prepared = prepare_params(params)

    out = jax.jit(net_forward)(prepared, x)
    out = jax.block_until_ready(out)

    ref = reference_forward(params, x)
    assert out.shape == (2, 10), out.shape
    assert jnp.allclose(out, ref, atol=2e-3, rtol=2e-3), "mismatch vs reference"

    print("KERNEL_OK")
</pallas_src>

<mosaic_0001>
module attributes {stable_mosaic.version = 11 : i64} {
  func.func @_lenet_kernel(%arg0: i32, %arg1: memref<1x32x32xf32, #tpu.memory_space<vmem>>, %arg2: memref<10x32x84xf32, #tpu.memory_space<vmem>>, %arg3: memref<1x84xf32, #tpu.memory_space<vmem>>, %arg4: memref<2x14x28xf32, #tpu.memory_space<vmem>>, %arg5: memref<10x84x80xf32, #tpu.memory_space<vmem>>, %arg6: memref<1x80xf32, #tpu.memory_space<vmem>>, %arg7: memref<2x5x10xf32, #tpu.memory_space<vmem>>, %arg8: memref<5x80x128xf32, #tpu.memory_space<vmem>>, %arg9: memref<1x128xf32, #tpu.memory_space<vmem>>, %arg10: memref<128x128xf32, #tpu.memory_space<vmem>>, %arg11: memref<1x128xf32, #tpu.memory_space<vmem>>, %arg12: memref<128x10xf32, #tpu.memory_space<vmem>>, %arg13: memref<1x10xf32, #tpu.memory_space<vmem>>, %arg14: memref<1x1x10xf32, #tpu.memory_space<vmem>>) attributes {dimension_semantics = [#tpu.dimension_semantics<parallel>], iteration_bounds = array<i64: 2>, scalar_prefetch = 0 : i64, scratch_operands = 0 : i64, tpu.core_type = #tpu.core_type<tc>, window_params = [{transform_indices = @transform_0, window_bounds = array<i64: 1, 32, 32>}, {pipeline_mode = #tpu.pipeline_mode<synchronous>, transform_indices = @transform_1, window_bounds = array<i64: 10, 32, 84>}, {pipeline_mode = #tpu.pipeline_mode<synchronous>, transform_indices = @transform_2, window_bounds = array<i64: 1, 84>}, {pipeline_mode = #tpu.pipeline_mode<synchronous>, transform_indices = @transform_3, window_bounds = array<i64: 2, 14, 28>}, {pipeline_mode = #tpu.pipeline_mode<synchronous>, transform_indices = @transform_4, window_bounds = array<i64: 10, 84, 80>}, {pipeline_mode = #tpu.pipeline_mode<synchronous>, transform_indices = @transform_5, window_bounds = array<i64: 1, 80>}, {pipeline_mode = #tpu.pipeline_mode<synchronous>, transform_indices = @transform_6, window_bounds = array<i64: 2, 5, 10>}, {pipeline_mode = #tpu.pipeline_mode<synchronous>, transform_indices = @transform_7, window_bounds = array<i64: 5, 80, 128>}, {pipeline_mode = #tpu.pipeline_mode<synchronous>, transform_indices = @transform_8, window_bounds = array<i64: 1, 128>}, {pipeline_mode = #tpu.pipeline_mode<synchronous>, transform_indices = @transform_9, window_bounds = array<i64: 128, 128>}, {pipeline_mode = #tpu.pipeline_mode<synchronous>, transform_indices = @transform_10, window_bounds = array<i64: 1, 128>}, {pipeline_mode = #tpu.pipeline_mode<synchronous>, transform_indices = @transform_11, window_bounds = array<i64: 128, 10>}, {pipeline_mode = #tpu.pipeline_mode<synchronous>, transform_indices = @transform_12, window_bounds = array<i64: 1, 10>}, {transform_indices = @transform_13, window_bounds = array<i64: 1, 1, 10>}]} {
    %c0 = arith.constant 0 : index
    %c0_0 = arith.constant 0 : index
    %c0_1 = arith.constant 0 : index
    %0 = vector.load %arg1[%c0, %c0_0, %c0_1] : memref<1x32x32xf32, #tpu.memory_space<vmem>>, vector<1x32x32xf32>
    %1 = vector.shape_cast %0 : vector<1x32x32xf32> to vector<32x32xf32>
    %cst = arith.constant 0.000000e+00 : f32
    %2 = vector.broadcast %cst : f32 to vector<28x84xf32>
    %cst_2 = arith.constant 0.000000e+00 : f32
    %3 = vector.broadcast %cst_2 : f32 to vector<28x84xf32>
    %4 = vector.extract_strided_slice %1 {offsets = [0, 0], sizes = [28, 32], strides = [1, 1]} : vector<32x32xf32> to vector<28x32xf32>
    %c0_3 = arith.constant 0 : index
    %c0_4 = arith.constant 0 : index
    %c0_5 = arith.constant 0 : index
    %5 = vector.load %arg2[%c0_3, %c0_4, %c0_5] : memref<10x32x84xf32, #tpu.memory_space<vmem>>, vector<1x32x84xf32>
    %6 = vector.shape_cast %5 : vector<1x32x84xf32> to vector<32x84xf32>
    %cst_6 = arith.constant dense<0.000000e+00> : vector<28x84xf32>
    %7 = tpu.matmul %4, %6, %cst_6 {dimension_numbers = #tpu.dot_dimension_numbers<[1], [0], [0], [1], [0, 0, 1, 1], [], []>} : vector<28x32xf32>, vector<32x84xf32>, vector<28x84xf32> -> vector<28x84xf32>
    %8 = arith.addf %2, %7 : vector<28x84xf32>
    %c1 = arith.constant 1 : index
    %c0_7 = arith.constant 0 : index
    %c0_8 = arith.constant 0 : index
    %9 = vector.load %arg2[%c1, %c0_7, %c0_8] : memref<10x32x84xf32, #tpu.memory_space<vmem>>, vector<1x32x84xf32>
    %10 = vector.shape_cast %9 : vector<1x32x84xf32> to vector<32x84xf32>
    %cst_9 = arith.constant dense<0.000000e+00> : vector<28x84xf32>
    %11 = tpu.matmul %4, %10, %cst_9 {dimension_numbers = #tpu.dot_dimension_numbers<[1], [0], [0], [1], [0, 0, 1, 1], [], []>} : vector<28x32xf32>, vector<32x84xf32>, vector<28x84xf32> -> vector<28x84xf32>
    %12 = arith.addf %3, %11 : vector<28x84xf32>
    %13 = vector.extract_strided_slice %1 {offsets = [1, 0], sizes = [28, 32], strides = [1, 1]} : vector<32x32xf32> to vector<28x32xf32>
    %c2 = arith.constant 2 : index
    %c0_10 = arith.constant 0 : index
    %c0_11 = arith.constant 0 : index
    %14 = vector.load %arg2[%c2, %c0_10, %c0_11] : memref<10x32x84xf32, #tpu.memory_space<vmem>>, vector<1x32x84xf32>
    %15 = vector.shape_cast %14 : vector<1x32x84xf32> to vector<32x84xf32>
    %cst_12 = arith.constant dense<0.000000e+00> : vector<28x84xf32>
    %16 = tpu.matmul %13, %15, %cst_12 {dimension_numbers = #tpu.dot_dimension_numbers<[1], [0], [0], [1], [0, 0, 1, 1], [], []>} : vector<28x32xf32>, vector<32x84xf32>, vector<28x84xf32> -> vector<28x84xf32>
    %17 = arith.addf %8, %16 : vector<28x84xf32>
    %c3 = arith.constant 3 : index
    %c0_13 = arith.constant 0 : index
    %c0_14 = arith.constant 0 : index
    %18 = vector.load %arg2[%c3, %c0_13, %c0_14] : memref<10x32x84xf32, #tpu.memory_space<vmem>>, vector<1x32x84xf32>
    %19 = vector.shape_cast %18 : vector<1x32x84xf32> to vector<32x84xf32>
    %cst_15 = arith.constant dense<0.000000e+00> : vector<28x84xf32>
    %20 = tpu.matmul %13, %19, %cst_15 {dimension_numbers = #tpu.dot_dimension_numbers<[1], [0], [0], [1], [0, 0, 1, 1], [], []>} : vector<28x32xf32>, vector<32x84xf32>, vector<28x84xf32> -> vector<28x84xf32>
    %21 = arith.addf %12, %20 : vector<28x84xf32>
    %22 = vector.extract_strided_slice %1 {offsets = [2, 0], sizes = [28, 32], strides = [1, 1]} : vector<32x32xf32> to vector<28x32xf32>
    %c4 = arith.constant 4 : index
    %c0_16 = arith.constant 0 : index
    %c0_17 = arith.constant 0 : index
    %23 = vector.load %arg2[%c4, %c0_16, %c0_17] : memref<10x32x84xf32, #tpu.memory_space<vmem>>, vector<1x32x84xf32>
    %24 = vector.shape_cast %23 : vector<1x32x84xf32> to vector<32x84xf32>
    %cst_18 = arith.constant dense<0.000000e+00> : vector<28x84xf32>
    %25 = tpu.matmul %22, %24, %cst_18 {dimension_numbers = #tpu.dot_dimension_numbers<[1], [0], [0], [1], [0, 0, 1, 1], [], []>} : vector<28x32xf32>, vector<32x84xf32>, vector<28x84xf32> -> vector<28x84xf32>
    %26 = arith.addf %17, %25 : vector<28x84xf32>
    %c5 = arith.constant 5 : index
    %c0_19 = arith.constant 0 : index
    %c0_20 = arith.constant 0 : index
    %27 = vector.load %arg2[%c5, %c0_19, %c0_20] : memref<10x32x84xf32, #tpu.memory_space<vmem>>, vector<1x32x84xf32>
    %28 = vector.shape_cast %27 : vector<1x32x84xf32> to vector<32x84xf32>
    %cst_21 = arith.constant dense<0.000000e+00> : vector<28x84xf32>
    %29 = tpu.matmul %22, %28, %cst_21 {dimension_numbers = #tpu.dot_dimension_numbers<[1], [0], [0], [1], [0, 0, 1, 1], [], []>} : vector<28x32xf32>, vector<32x84xf32>, vector<28x84xf32> -> vector<28x84xf32>
    %30 = arith.addf %21, %29 : vector<28x84xf32>
    %31 = vector.extract_strided_slice %1 {offsets = [3, 0], sizes = [28, 32], strides = [1, 1]} : vector<32x32xf32> to vector<28x32xf32>
    %c6 = arith.constant 6 : index
    %c0_22 = arith.constant 0 : index
    %c0_23 = arith.constant 0 : index
    %32 = vector.load %arg2[%c6, %c0_22, %c0_23] : memref<10x32x84xf32, #tpu.memory_space<vmem>>, vector<1x32x84xf32>
    %33 = vector.shape_cast %32 : vector<1x32x84xf32> to vector<32x84xf32>
    %cst_24 = arith.constant dense<0.000000e+00> : vector<28x84xf32>
    %34 = tpu.matmul %31, %33, %cst_24 {dimension_numbers = #tpu.dot_dimension_numbers<[1], [0], [0], [1], [0, 0, 1, 1], [], []>} : vector<28x32xf32>, vector<32x84xf32>, vector<28x84xf32> -> vector<28x84xf32>
    %35 = arith.addf %26, %34 : vector<28x84xf32>
    %c7 = arith.constant 7 : index
    %c0_25 = arith.constant 0 : index
    %c0_26 = arith.constant 0 : index
    %36 = vector.load %arg2[%c7, %c0_25, %c0_26] : memref<10x32x84xf32, #tpu.memory_space<vmem>>, vector<1x32x84xf32>
    %37 = vector.shape_cast %36 : vector<1x32x84xf32> to vector<32x84xf32>
    %cst_27 = arith.constant dense<0.000000e+00> : vector<28x84xf32>
    %38 = tpu.matmul %31, %37, %cst_27 {dimension_numbers = #tpu.dot_dimension_numbers<[1], [0], [0], [1], [0, 0, 1, 1], [], []>} : vector<28x32xf32>, vector<32x84xf32>, vector<28x84xf32> -> vector<28x84xf32>
    %39 = arith.addf %30, %38 : vector<28x84xf32>
    %40 = vector.extract_strided_slice %1 {offsets = [4, 0], sizes = [28, 32], strides = [1, 1]} : vector<32x32xf32> to vector<28x32xf32>
    %c8 = arith.constant 8 : index
    %c0_28 = arith.constant 0 : index
    %c0_29 = arith.constant 0 : index
    %41 = vector.load %arg2[%c8, %c0_28, %c0_29] : memref<10x32x84xf32, #tpu.memory_space<vmem>>, vector<1x32x84xf32>
    %42 = vector.shape_cast %41 : vector<1x32x84xf32> to vector<32x84xf32>
    %cst_30 = arith.constant dense<0.000000e+00> : vector<28x84xf32>
    %43 = tpu.matmul %40, %42, %cst_30 {dimension_numbers = #tpu.dot_dimension_numbers<[1], [0], [0], [1], [0, 0, 1, 1], [], []>} : vector<28x32xf32>, vector<32x84xf32>, vector<28x84xf32> -> vector<28x84xf32>
    %44 = arith.addf %35, %43 : vector<28x84xf32>
    %c9 = arith.constant 9 : index
    %c0_31 = arith.constant 0 : index
    %c0_32 = arith.constant 0 : index
    %45 = vector.load %arg2[%c9, %c0_31, %c0_32] : memref<10x32x84xf32, #tpu.memory_space<vmem>>, vector<1x32x84xf32>
    %46 = vector.shape_cast %45 : vector<1x32x84xf32> to vector<32x84xf32>
    %cst_33 = arith.constant dense<0.000000e+00> : vector<28x84xf32>
    %47 = tpu.matmul %40, %46, %cst_33 {dimension_numbers = #tpu.dot_dimension_numbers<[1], [0], [0], [1], [0, 0, 1, 1], [], []>} : vector<28x32xf32>, vector<32x84xf32>, vector<28x84xf32> -> vector<28x84xf32>
    %48 = arith.addf %39, %47 : vector<28x84xf32>
    %49 = arith.maximumf %44, %48 : vector<28x84xf32>
    %c0_34 = arith.constant 0 : index
    %c0_35 = arith.constant 0 : index
    %50 = vector.load %arg3[%c0_34, %c0_35] : memref<1x84xf32, #tpu.memory_space<vmem>>, vector<1x84xf32>
    %51 = vector.broadcast %50 : vector<1x84xf32> to vector<28x84xf32>
    %52 = arith.addf %49, %51 : vector<28x84xf32>
    %cst_36 = arith.constant 0.000000e+00 : f32
    %53 = vector.broadcast %cst_36 : f32 to vector<28x84xf32>
    %54 = arith.maximumf %52, %53 : vector<28x84xf32>
    %c0_37 = arith.constant 0 : index
    %c0_38 = arith.constant 0 : index
    %c0_39 = arith.constant 0 : index
    %55 = vector.load %arg4[%c0_37, %c0_38, %c0_39] : memref<2x14x28xf32, #tpu.memory_space<vmem>>, vector<1x14x28xf32>
    %56 = vector.shape_cast %55 : vector<1x14x28xf32> to vector<14x28xf32>
    %cst_40 = arith.constant dense<0.000000e+00> : vector<14x84xf32>
    %57 = tpu.matmul %56, %54, %cst_40 {dimension_numbers = #tpu.dot_dimension_numbers<[1], [0], [0], [1], [0, 0, 1, 1], [], []>} : vector<14x28xf32>, vector<28x84xf32>, vector<14x84xf32> -> vector<14x84xf32>
    %c1_41 = arith.constant 1 : index
    %c0_42 = arith.constant 0 : index
    %c0_43 = arith.constant 0 : index
    %58 = vector.load %arg4[%c1_41, %c0_42, %c0_43] : memref<2x14x28xf32, #tpu.memory_space<vmem>>, vector<1x14x28xf32>
    %59 = vector.shape_cast %58 : vector<1x14x28xf32> to vector<14x28xf32>
    %cst_44 = arith.constant dense<0.000000e+00> : vector<14x84xf32>
    %60 = tpu.matmul %59, %54, %cst_44 {dimension_numbers = #tpu.dot_dimension_numbers<[1], [0], [0], [1], [0, 0, 1, 1], [], []>} : vector<14x28xf32>, vector<28x84xf32>, vector<14x84xf32> -> vector<14x84xf32>
    %61 = arith.maximumf %57, %60 : vector<14x84xf32>
    %cst_45 = arith.constant 0.000000e+00 : f32
    %62 = vector.broadcast %cst_45 : f32 to vector<10x80xf32>
    %cst_46 = arith.constant 0.000000e+00 : f32
    %63 = vector.broadcast %cst_46 : f32 to vector<10x80xf32>
    %64 = vector.extract_strided_slice %61 {offsets = [0, 0], sizes = [10, 84], strides = [1, 1]} : vector<14x84xf32> to vector<10x84xf32>
    %c0_47 = arith.constant 0 : index
    %c0_48 = arith.constant 0 : index
    %c0_49 = arith.constant 0 : index
    %65 = vector.load %arg5[%c0_47, %c0_48, %c0_49] : memref<10x84x80xf32, #tpu.memory_space<vmem>>, vector<1x84x80xf32>
    %66 = vector.shape_cast %65 : vector<1x84x80xf32> to vector<84x80xf32>
    %cst_50 = arith.constant dense<0.000000e+00> : vector<10x80xf32>
    %67 = tpu.matmul %64, %66, %cst_50 {dimension_numbers = #tpu.dot_dimension_numbers<[1], [0], [0], [1], [0, 0, 1, 1], [], []>} : vector<10x84xf32>, vector<84x80xf32>, vector<10x80xf32> -> vector<10x80xf32>
    %68 = arith.addf %62, %67 : vector<10x80xf32>
    %c1_51 = arith.constant 1 : index
    %c0_52 = arith.constant 0 : index
    %c0_53 = arith.constant 0 : index
    %69 = vector.load %arg5[%c1_51, %c0_52, %c0_53] : memref<10x84x80xf32, #tpu.memory_space<vmem>>, vector<1x84x80xf32>
    %70 = vector.shape_cast %69 : vector<1x84x80xf32> to vector<84x80xf32>
    %cst_54 = arith.constant dense<0.000000e+00> : vector<10x80xf32>
    %71 = tpu.matmul %64, %70, %cst_54 {dimension_numbers = #tpu.dot_dimension_numbers<[1], [0], [0], [1], [0, 0, 1, 1], [], []>} : vector<10x84xf32>, vector<84x80xf32>, vector<10x80xf32> -> vector<10x80xf32>
    %72 = arith.addf %63, %71 : vector<10x80xf32>
    %73 = vector.extract_strided_slice %61 {offsets = [1, 0], sizes = [10, 84], strides = [1, 1]} : vector<14x84xf32> to vector<10x84xf32>
    %c2_55 = arith.constant 2 : index
    %c0_56 = arith.constant 0 : index
    %c0_57 = arith.constant 0 : index
    %74 = vector.load %arg5[%c2_55, %c0_56, %c0_57] : memref<10x84x80xf32, #tpu.memory_space<vmem>>, vector<1x84x80xf32>
    %75 = vector.shape_cast %74 : vector<1x84x80xf32> to vector<84x80xf32>
    %cst_58 = arith.constant dense<0.000000e+00> : vector<10x80xf32>
    %76 = tpu.matmul %73, %75, %cst_58 {dimension_numbers = #tpu.dot_dimension_numbers<[1], [0], [0], [1], [0, 0, 1, 1], [], []>} : vector<10x84xf32>, vector<84x80xf32>, vector<10x80xf32> -> vector<10x80xf32>
    %77 = arith.addf %68, %76 : vector<10x80xf32>
    %c3_59 = arith.constant 3 : index
    %c0_60 = arith.constant 0 : index
    %c0_61 = arith.constant 0 : index
    %78 = vector.load %arg5[%c3_59, %c0_60, %c0_61] : memref<10x84x80xf32, #tpu.memory_space<vmem>>, vector<1x84x80xf32>
    %79 = vector.shape_cast %78 : vector<1x84x80xf32> to vector<84x80xf32>
    %cst_62 = arith.constant dense<0.000000e+00> : vector<10x80xf32>
    %80 = tpu.matmul %73, %79, %cst_62 {dimension_numbers = #tpu.dot_dimension_numbers<[1], [0], [0], [1], [0, 0, 1, 1], [], []>} : vector<10x84xf32>, vector<84x80xf32>, vector<10x80xf32> -> vector<10x80xf32>
    %81 = arith.addf %72, %80 : vector<10x80xf32>
    %82 = vector.extract_strided_slice %61 {offsets = [2, 0], sizes = [10, 84], strides = [1, 1]} : vector<14x84xf32> to vector<10x84xf32>
    %c4_63 = arith.constant 4 : index
    %c0_64 = arith.constant 0 : index
    %c0_65 = arith.constant 0 : index
    %83 = vector.load %arg5[%c4_63, %c0_64, %c0_65] : memref<10x84x80xf32, #tpu.memory_space<vmem>>, vector<1x84x80xf32>
    %84 = vector.shape_cast %83 : vector<1x84x80xf32> to vector<84x80xf32>
    %cst_66 = arith.constant dense<0.000000e+00> : vector<10x80xf32>
    %85 = tpu.matmul %82, %84, %cst_66 {dimension_numbers = #tpu.dot_dimension_numbers<[1], [0], [0], [1], [0, 0, 1, 1], [], []>} : vector<10x84xf32>, vector<84x80xf32>, vector<10x80xf32> -> vector<10x80xf32>
    %86 = arith.addf %77, %85 : vector<10x80xf32>
    %c5_67 = arith.constant 5 : index
    %c0_68 = arith.constant 0 : index
    %c0_69 = arith.constant 0 : index
    %87 = vector.load %arg5[%c5_67, %c0_68, %c0_69] : memref<10x84x80xf32, #tpu.memory_space<vmem>>, vector<1x84x80xf32>
    %88 = vector.shape_cast %87 : vector<1x84x80xf32> to vector<84x80xf32>
    %cst_70 = arith.constant dense<0.000000e+00> : vector<10x80xf32>
    %89 = tpu.matmul %82, %88, %cst_70 {dimension_numbers = #tpu.dot_dimension_numbers<[1], [0], [0], [1], [0, 0, 1, 1], [], []>} : vector<10x84xf32>, vector<84x80xf32>, vector<10x80xf32> -> vector<10x80xf32>
    %90 = arith.addf %81, %89 : vector<10x80xf32>
    %91 = vector.extract_strided_slice %61 {offsets = [3, 0], sizes = [10, 84], strides = [1, 1]} : vector<14x84xf32> to vector<10x84xf32>
    %c6_71 = arith.constant 6 : index
    %c0_72 = arith.constant 0 : index
    %c0_73 = arith.constant 0 : index
    %92 = vector.load %arg5[%c6_71, %c0_72, %c0_73] : memref<10x84x80xf32, #tpu.memory_space<vmem>>, vector<1x84x80xf32>
    %93 = vector.shape_cast %92 : vector<1x84x80xf32> to vector<84x80xf32>
    %cst_74 = arith.constant dense<0.000000e+00> : vector<10x80xf32>
    %94 = tpu.matmul %91, %93, %cst_74 {dimension_numbers = #tpu.dot_dimension_numbers<[1], [0], [0], [1], [0, 0, 1, 1], [], []>} : vector<10x84xf32>, vector<84x80xf32>, vector<10x80xf32> -> vector<10x80xf32>
    %95 = arith.addf %86, %94 : vector<10x80xf32>
    %c7_75 = arith.constant 7 : index
    %c0_76 = arith.constant 0 : index
    %c0_77 = arith.constant 0 : index
    %96 = vector.load %arg5[%c7_75, %c0_76, %c0_77] : memref<10x84x80xf32, #tpu.memory_space<vmem>>, vector<1x84x80xf32>
    %97 = vector.shape_cast %96 : vector<1x84x80xf32> to vector<84x80xf32>
    %cst_78 = arith.constant dense<0.000000e+00> : vector<10x80xf32>
    %98 = tpu.matmul %91, %97, %cst_78 {dimension_numbers = #tpu.dot_dimension_numbers<[1], [0], [0], [1], [0, 0, 1, 1], [], []>} : vector<10x84xf32>, vector<84x80xf32>, vector<10x80xf32> -> vector<10x80xf32>
    %99 = arith.addf %90, %98 : vector<10x80xf32>
    %100 = vector.extract_strided_slice %61 {offsets = [4, 0], sizes = [10, 84], strides = [1, 1]} : vector<14x84xf32> to vector<10x84xf32>
    %c8_79 = arith.constant 8 : index
    %c0_80 = arith.constant 0 : index
    %c0_81 = arith.constant 0 : index
    %101 = vector.load %arg5[%c8_79, %c0_80, %c0_81] : memref<10x84x80xf32, #tpu.memory_space<vmem>>, vector<1x84x80xf32>
    %102 = vector.shape_cast %101 : vector<1x84x80xf32> to vector<84x80xf32>
    %cst_82 = arith.constant dense<0.000000e+00> : vector<10x80xf32>
    %103 = tpu.matmul %100, %102, %cst_82 {dimension_numbers = #tpu.dot_dimension_numbers<[1], [0], [0], [1], [0, 0, 1, 1], [], []>} : vector<10x84xf32>, vector<84x80xf32>, vector<10x80xf32> -> vector<10x80xf32>
    %104 = arith.addf %95, %103 : vector<10x80xf32>
    %c9_83 = arith.constant 9 : index
    %c0_84 = arith.constant 0 : index
    %c0_85 = arith.constant 0 : index
    %105 = vector.load %arg5[%c9_83, %c0_84, %c0_85] : memref<10x84x80xf32, #tpu.memory_space<vmem>>, vector<1x84x80xf32>
    %106 = vector.shape_cast %105 : vector<1x84x80xf32> to vector<84x80xf32>
    %cst_86 = arith.constant dense<0.000000e+00> : vector<10x80xf32>
    %107 = tpu.matmul %100, %106, %cst_86 {dimension_numbers = #tpu.dot_dimension_numbers<[1], [0], [0], [1], [0, 0, 1, 1], [], []>} : vector<10x84xf32>, vector<84x80xf32>, vector<10x80xf32> -> vector<10x80xf32>
    %108 = arith.addf %99, %107 : vector<10x80xf32>
    %109 = arith.maximumf %104, %108 : vector<10x80xf32>
    %c0_87 = arith.constant 0 : index
    %c0_88 = arith.constant 0 : index
    %110 = vector.load %arg6[%c0_87, %c0_88] : memref<1x80xf32, #tpu.memory_space<vmem>>, vector<1x80xf32>
    %111 = vector.broadcast %110 : vector<1x80xf32> to vector<10x80xf32>
    %112 = arith.addf %109, %111 : vector<10x80xf32>
    %cst_89 = arith.constant 0.000000e+00 : f32
    %113 = vector.broadcast %cst_89 : f32 to vector<10x80xf32>
    %114 = arith.maximumf %112, %113 : vector<10x80xf32>
    %c0_90 = arith.constant 0 : index
    %c0_91 = arith.constant 0 : index
    %c0_92 = arith.constant 0 : index
    %115 = vector.load %arg7[%c0_90, %c0_91, %c0_92] : memref<2x5x10xf32, #tpu.memory_space<vmem>>, vector<1x5x10xf32>
    %116 = vector.shape_cast %115 : vector<1x5x10xf32> to vector<5x10xf32>
    %cst_93 = arith.constant dense<0.000000e+00> : vector<5x80xf32>
    %117 = tpu.matmul %116, %114, %cst_93 {dimension_numbers = #tpu.dot_dimension_numbers<[1], [0], [0], [1], [0, 0, 1, 1], [], []>} : vector<5x10xf32>, vector<10x80xf32>, vector<5x80xf32> -> vector<5x80xf32>
    %c1_94 = arith.constant 1 : index
    %c0_95 = arith.constant 0 : index
    %c0_96 = arith.constant 0 : index
    %118 = vector.load %arg7[%c1_94, %c0_95, %c0_96] : memref<2x5x10xf32, #tpu.memory_space<vmem>>, vector<1x5x10xf32>
    %119 = vector.shape_cast %118 : vector<1x5x10xf32> to vector<5x10xf32>
    %cst_97 = arith.constant dense<0.000000e+00> : vector<5x80xf32>
    %120 = tpu.matmul %119, %114, %cst_97 {dimension_numbers = #tpu.dot_dimension_numbers<[1], [0], [0], [1], [0, 0, 1, 1], [], []>} : vector<5x10xf32>, vector<10x80xf32>, vector<5x80xf32> -> vector<5x80xf32>
    %121 = arith.maximumf %117, %120 : vector<5x80xf32>
    %c0_98 = arith.constant 0 : index
    %c0_99 = arith.constant 0 : index
    %122 = vector.load %arg9[%c0_98, %c0_99] : memref<1x128xf32, #tpu.memory_space<vmem>>, vector<1x128xf32>
    %123 = vector.extract_strided_slice %121 {offsets = [0, 0], sizes = [1, 80], strides = [1, 1]} : vector<5x80xf32> to vector<1x80xf32>
    %c0_100 = arith.constant 0 : index
    %c0_101 = arith.constant 0 : index
    %c0_102 = arith.constant 0 : index
    %124 = vector.load %arg8[%c0_100, %c0_101, %c0_102] : memref<5x80x128xf32, #tpu.memory_space<vmem>>, vector<1x80x128xf32>
    %125 = vector.shape_cast %124 : vector<1x80x128xf32> to vector<80x128xf32>
    %cst_103 = arith.constant dense<0.000000e+00> : vector<1x128xf32>
    %126 = tpu.matmul %123, %125, %cst_103 {dimension_numbers = #tpu.dot_dimension_numbers<[1], [0], [0], [1], [0, 0, 1, 1], [], []>} : vector<1x80xf32>, vector<80x128xf32>, vector<1x128xf32> -> vector<1x128xf32>
    %127 = arith.addf %122, %126 : vector<1x128xf32>
    %128 = vector.extract_strided_slice %121 {offsets = [1, 0], sizes = [1, 80], strides = [1, 1]} : vector<5x80xf32> to vector<1x80xf32>
    %c1_104 = arith.constant 1 : index
    %c0_105 = arith.constant 0 : index
    %c0_106 = arith.constant 0 : index
    %129 = vector.load %arg8[%c1_104, %c0_105, %c0_106] : memref<5x80x128xf32, #tpu.memory_space<vmem>>, vector<1x80x128xf32>
    %130 = vector.shape_cast %129 : vector<1x80x128xf32> to vector<80x128xf32>
    %cst_107 = arith.constant dense<0.000000e+00> : vector<1x128xf32>
    %131 = tpu.matmul %128, %130, %cst_107 {dimension_numbers = #tpu.dot_dimension_numbers<[1], [0], [0], [1], [0, 0, 1, 1], [], []>} : vector<1x80xf32>, vector<80x128xf32>, vector<1x128xf32> -> vector<1x128xf32>
    %132 = arith.addf %127, %131 : vector<1x128xf32>
    %133 = vector.extract_strided_slice %121 {offsets = [2, 0], sizes = [1, 80], strides = [1, 1]} : vector<5x80xf32> to vector<1x80xf32>
    %c2_108 = arith.constant 2 : index
    %c0_109 = arith.constant 0 : index
    %c0_110 = arith.constant 0 : index
    %134 = vector.load %arg8[%c2_108, %c0_109, %c0_110] : memref<5x80x128xf32, #tpu.memory_space<vmem>>, vector<1x80x128xf32>
    %135 = vector.shape_cast %134 : vector<1x80x128xf32> to vector<80x128xf32>
    %cst_111 = arith.constant dense<0.000000e+00> : vector<1x128xf32>
    %136 = tpu.matmul %133, %135, %cst_111 {dimension_numbers = #tpu.dot_dimension_numbers<[1], [0], [0], [1], [0, 0, 1, 1], [], []>} : vector<1x80xf32>, vector<80x128xf32>, vector<1x128xf32> -> vector<1x128xf32>
    %137 = arith.addf %132, %136 : vector<1x128xf32>
    %138 = vector.extract_strided_slice %121 {offsets = [3, 0], sizes = [1, 80], strides = [1, 1]} : vector<5x80xf32> to vector<1x80xf32>
    %c3_112 = arith.constant 3 : index
    %c0_113 = arith.constant 0 : index
    %c0_114 = arith.constant 0 : index
    %139 = vector.load %arg8[%c3_112, %c0_113, %c0_114] : memref<5x80x128xf32, #tpu.memory_space<vmem>>, vector<1x80x128xf32>
    %140 = vector.shape_cast %139 : vector<1x80x128xf32> to vector<80x128xf32>
    %cst_115 = arith.constant dense<0.000000e+00> : vector<1x128xf32>
    %141 = tpu.matmul %138, %140, %cst_115 {dimension_numbers = #tpu.dot_dimension_numbers<[1], [0], [0], [1], [0, 0, 1, 1], [], []>} : vector<1x80xf32>, vector<80x128xf32>, vector<1x128xf32> -> vector<1x128xf32>
    %142 = arith.addf %137, %141 : vector<1x128xf32>
    %143 = vector.extract_strided_slice %121 {offsets = [4, 0], sizes = [1, 80], strides = [1, 1]} : vector<5x80xf32> to vector<1x80xf32>
    %c4_116 = arith.constant 4 : index
    %c0_117 = arith.constant 0 : index
    %c0_118 = arith.constant 0 : index
    %144 = vector.load %arg8[%c4_116, %c0_117, %c0_118] : memref<5x80x128xf32, #tpu.memory_space<vmem>>, vector<1x80x128xf32>
    %145 = vector.shape_cast %144 : vector<1x80x128xf32> to vector<80x128xf32>
    %cst_119 = arith.constant dense<0.000000e+00> : vector<1x128xf32>
    %146 = tpu.matmul %143, %145, %cst_119 {dimension_numbers = #tpu.dot_dimension_numbers<[1], [0], [0], [1], [0, 0, 1, 1], [], []>} : vector<1x80xf32>, vector<80x128xf32>, vector<1x128xf32> -> vector<1x128xf32>
    %147 = arith.addf %142, %146 : vector<1x128xf32>
    %cst_120 = arith.constant 0.000000e+00 : f32
    %148 = vector.broadcast %cst_120 : f32 to vector<1x128xf32>
    %149 = arith.maximumf %147, %148 : vector<1x128xf32>
    %c0_121 = arith.constant 0 : index
    %c0_122 = arith.constant 0 : index
    %150 = vector.load %arg10[%c0_121, %c0_122] : memref<128x128xf32, #tpu.memory_space<vmem>>, vector<128x128xf32>
    %cst_123 = arith.constant dense<0.000000e+00> : vector<1x128xf32>
    %151 = tpu.matmul %149, %150, %cst_123 {dimension_numbers = #tpu.dot_dimension_numbers<[1], [0], [0], [1], [0, 0, 1, 1], [], []>} : vector<1x128xf32>, vector<128x128xf32>, vector<1x128xf32> -> vector<1x128xf32>
    %c0_124 = arith.constant 0 : index
    %c0_125 = arith.constant 0 : index
    %152 = vector.load %arg11[%c0_124, %c0_125] : memref<1x128xf32, #tpu.memory_space<vmem>>, vector<1x128xf32>
    %153 = arith.addf %151, %152 : vector<1x128xf32>
    %cst_126 = arith.constant 0.000000e+00 : f32
    %154 = vector.broadcast %cst_126 : f32 to vector<1x128xf32>
    %155 = arith.maximumf %153, %154 : vector<1x128xf32>
    %c0_127 = arith.constant 0 : index
    %c0_128 = arith.constant 0 : index
    %156 = vector.load %arg12[%c0_127, %c0_128] : memref<128x10xf32, #tpu.memory_space<vmem>>, vector<128x10xf32>
    %cst_129 = arith.constant dense<0.000000e+00> : vector<1x10xf32>
    %157 = tpu.matmul %155, %156, %cst_129 {dimension_numbers = #tpu.dot_dimension_numbers<[1], [0], [0], [1], [0, 0, 1, 1], [], []>} : vector<1x128xf32>, vector<128x10xf32>, vector<1x10xf32> -> vector<1x10xf32>
    %c0_130 = arith.constant 0 : index
    %c0_131 = arith.constant 0 : index
    %158 = vector.load %arg13[%c0_130, %c0_131] : memref<1x10xf32, #tpu.memory_space<vmem>>, vector<1x10xf32>
    %159 = arith.addf %157, %158 : vector<1x10xf32>
    %c0_132 = arith.constant 0 : index
    %c0_133 = arith.constant 0 : index
    %c0_134 = arith.constant 0 : index
    %160 = vector.load %arg14[%c0_132, %c0_133, %c0_134] : memref<1x1x10xf32, #tpu.memory_space<vmem>>, vector<1x1x10xf32>
    %161 = vector.shape_cast %160 : vector<1x1x10xf32> to vector<1x10xf32>
    %162 = vector.shape_cast %159 : vector<1x10xf32> to vector<1x1x10xf32>
    tpu.vector_store %arg14[%c0_132, %c0_133, %c0_134], %162 {strides = array<i32>} : memref<1x1x10xf32, #tpu.memory_space<vmem>>, vector<1x1x10xf32>,
    return
  }
  func.func @transform_0(%arg0: i32) -> (i32, i32, i32) {
    %c0_i32 = arith.constant 0 : i32
    %c0_i32_0 = arith.constant 0 : i32
    %c0_i32_1 = arith.constant 0 : i32
    return %arg0, %c0_i32, %c0_i32_0 : i32, i32, i32
  }
  func.func @transform_1(%arg0: i32) -> (i32, i32, i32) {
    %c0_i32 = arith.constant 0 : i32
    %c0_i32_0 = arith.constant 0 : i32
    %c0_i32_1 = arith.constant 0 : i32
    %c0_i32_2 = arith.constant 0 : i32
    return %c0_i32, %c0_i32_0, %c0_i32_1 : i32, i32, i32
  }
  func.func @transform_2(%arg0: i32) -> (i32, i32) {
    %c0_i32 = arith.constant 0 : i32
    %c0_i32_0 = arith.constant 0 : i32
    %c0_i32_1 = arith.constant 0 : i32
    return %c0_i32, %c0_i32_0 : i32, i32
  }
  func.func @transform_3(%arg0: i32) -> (i32, i32, i32) {
    %c0_i32 = arith.constant 0 : i32
    %c0_i32_0 = arith.constant 0 : i32
    %c0_i32_1 = arith.constant 0 : i32
    %c0_i32_2 = arith.constant 0 : i32
    return %c0_i32, %c0_i32_0, %c0_i32_1 : i32, i32, i32
  }
  func.func @transform_4(%arg0: i32) -> (i32, i32, i32) {
    %c0_i32 = arith.constant 0 : i32
    %c0_i32_0 = arith.constant 0 : i32
    %c0_i32_1 = arith.constant 0 : i32
    %c0_i32_2 = arith.constant 0 : i32
    return %c0_i32, %c0_i32_0, %c0_i32_1 : i32, i32, i32
  }
  func.func @transform_5(%arg0: i32) -> (i32, i32) {
    %c0_i32 = arith.constant 0 : i32
    %c0_i32_0 = arith.constant 0 : i32
    %c0_i32_1 = arith.constant 0 : i32
    return %c0_i32, %c0_i32_0 : i32, i32
  }
  func.func @transform_6(%arg0: i32) -> (i32, i32, i32) {
    %c0_i32 = arith.constant 0 : i32
    %c0_i32_0 = arith.constant 0 : i32
    %c0_i32_1 = arith.constant 0 : i32
    %c0_i32_2 = arith.constant 0 : i32
    return %c0_i32, %c0_i32_0, %c0_i32_1 : i32, i32, i32
  }
  func.func @transform_7(%arg0: i32) -> (i32, i32, i32) {
    %c0_i32 = arith.constant 0 : i32
    %c0_i32_0 = arith.constant 0 : i32
    %c0_i32_1 = arith.constant 0 : i32
    %c0_i32_2 = arith.constant 0 : i32
    return %c0_i32, %c0_i32_0, %c0_i32_1 : i32, i32, i32
  }
  func.func @transform_8(%arg0: i32) -> (i32, i32) {
    %c0_i32 = arith.constant 0 : i32
    %c0_i32_0 = arith.constant 0 : i32
    %c0_i32_1 = arith.constant 0 : i32
    return %c0_i32, %c0_i32_0 : i32, i32
  }
  func.func @transform_9(%arg0: i32) -> (i32, i32) {
    %c0_i32 = arith.constant 0 : i32
    %c0_i32_0 = arith.constant 0 : i32
    %c0_i32_1 = arith.constant 0 : i32
    return %c0_i32, %c0_i32_0 : i32, i32
  }
  func.func @transform_10(%arg0: i32) -> (i32, i32) {
    %c0_i32 = arith.constant 0 : i32
    %c0_i32_0 = arith.constant 0 : i32
    %c0_i32_1 = arith.constant 0 : i32
    return %c0_i32, %c0_i32_0 : i32, i32
  }
  func.func @transform_11(%arg0: i32) -> (i32, i32) {
    %c0_i32 = arith.constant 0 : i32
    %c0_i32_0 = arith.constant 0 : i32
    %c0_i32_1 = arith.constant 0 : i32
    return %c0_i32, %c0_i32_0 : i32, i32
  }
  func.func @transform_12(%arg0: i32) -> (i32, i32) {
    %c0_i32 = arith.constant 0 : i32
    %c0_i32_0 = arith.constant 0 : i32
    %c0_i32_1 = arith.constant 0 : i32
    return %c0_i32, %c0_i32_0 : i32, i32
  }
  func.func @transform_13(%arg0: i32) -> (i32, i32, i32) {
    %c0_i32 = arith.constant 0 : i32
    %c0_i32_0 = arith.constant 0 : i32
    %c0_i32_1 = arith.constant 0 : i32
    return %arg0, %c0_i32, %c0_i32_0 : i32, i32, i32
  }
}

</mosaic_0001>

<llo_original>
// kernel: net_forward.1
$region0: #{net_forward.1}
  #allocation0 [shape = 'u32[]', space=smem, size = 0x4, offset = 0x4, fixed_abs, tag = 'smem constant byte address 0x4 - core index']
  #allocation1 [shape = 'u32[144,128]{1,0:T(1,128)}', space=vmem, size = 0x12000, scoped, tag = 'internal scratch']
  %s0 = inlined_call_operand.vmem [shape: f32[2,32,32], index: 0, kind: input, shape index: {}]
  %s1 = inlined_call_operand.vmem [shape: f32[10,32,84], index: 1, kind: input, shape index: {}]
  %s2 = inlined_call_operand.vmem [shape: f32[1,84], index: 2, kind: input, shape index: {}]
  %s3 = inlined_call_operand.vmem [shape: f32[2,14,28], index: 3, kind: input, shape index: {}]
  %s4 = inlined_call_operand.vmem [shape: f32[10,84,80], index: 4, kind: input, shape index: {}]
  %s5 = inlined_call_operand.vmem [shape: f32[1,80], index: 5, kind: input, shape index: {}]
  %s6 = inlined_call_operand.vmem [shape: f32[2,5,10], index: 6, kind: input, shape index: {}]
  %s7 = inlined_call_operand.vmem [shape: f32[5,80,128], index: 7, kind: input, shape index: {}]
  %s8 = inlined_call_operand.vmem [shape: f32[1,128], index: 8, kind: input, shape index: {}]
  %s9 = inlined_call_operand.vmem [shape: f32[128,128], index: 9, kind: input, shape index: {}]
  %s10 = inlined_call_operand.vmem [shape: f32[1,128], index: 10, kind: input, shape index: {}]
  %s11 = inlined_call_operand.vmem [shape: f32[128,10], index: 11, kind: input, shape index: {}]
  %s12 = inlined_call_operand.vmem [shape: f32[1,10], index: 12, kind: input, shape index: {}]
  %s13 = inlined_call_operand.hbm [shape: f32[2,1,10], index: 13, kind: output, shape index: {}]
  %s14 = sld [smem:[#allocation0]]
  $region85: #{net_forward.1} parent=0
    _
  %s16 = ssub.s32 1, %s14
  %s17 = scalar_select 0, %s16, %s14
  $region1: #{net_forward.1} parent=0
    #allocation2 [shape = 'u8[1024]{0}', space=vmem, size = 0x400, scoped, tag = 'output window, operand 0']
    #allocation3 [shape = 's32[2]{0}', space=sflag, size = 0x8, scoped, tag = 'scoped memory for net_forward.1']
    %18 = vsyncpa [#allocation3], 0
    %s19 = scalar_lea.sflag [#allocation3], 1
    %20 = vsyncpa %s19, 0
    loop: start=0, step=1, limit=4
    $region2: #{net_forward.1} parent=1 // loop_pre_header
      _
    $region3: #{net_forward.1} parent=1 // loop_header
      %s22 = sphi 0, %s26
      %p23 = scmp.ge.s32.totalorder %s22, 4
      %s32 = sphi 0, %s34
      %s35 = sphi 0, %s32
      %s36 = sphi 0, %s35
      %s52 = sphi 0, %s36
      %s56 = sphi 0, %s56
      %s58 = sphi 0, %s56
      %s59 = sphi 0, %s58
      %s73 = sphi 0, %s59
      %s77 = sphi 0, %s77
      %s79 = sphi 0, %s77
      %s80 = sphi 0, %s79
      %s94 = sphi 0, %s80
      %s98 = sphi 0, %s98
      %s100 = sphi 0, %s98
      %s101 = sphi 0, %s100
      %s115 = sphi 0, %s101
      %s119 = sphi 0, %s119
      %s121 = sphi 0, %s119
      %s122 = sphi 0, %s121
      %s136 = sphi 0, %s122
      %s140 = sphi 0, %s140
      %s142 = sphi 0, %s140
      %s143 = sphi 0, %s142
      %s157 = sphi 0, %s143
      %s161 = sphi 0, %s161
      %s163 = sphi 0, %s161
      %s164 = sphi 0, %s163
      %s178 = sphi 0, %s164
      %s182 = sphi 0, %s182
      %s184 = sphi 0, %s182
      %s185 = sphi 0, %s184
      %s199 = sphi 0, %s185
      %s203 = sphi 0, %s203
      %s205 = sphi 0, %s203
      %s206 = sphi 0, %s205
      %s220 = sphi 0, %s206
      %s224 = sphi 0, %s224
      %s226 = sphi 0, %s224
      %s227 = sphi 0, %s226
      %s241 = sphi 0, %s227
      %s245 = sphi 0, %s245
      %s247 = sphi 0, %s245
      %s248 = sphi 0, %s247
      %s262 = sphi 0, %s248
      %s266 = sphi 0, %s266
      %s268 = sphi 0, %s266
      %s269 = sphi 0, %s268
      %s283 = sphi 0, %s269
      %s287 = sphi 0, %s287
      %s289 = sphi 0, %s287
      %s290 = sphi 0, %s289
      %s304 = sphi 0, %s290
      %s310 = sphi 0, %s312
      %s313 = sphi 0, %s310
      %s314 = sphi 0, %s313
      %s330 = sphi 0, %s314
    $region4: #{net_forward.1} parent=1 // loop_header_branch
      %25 = sbr.rel (%p23) target = $region8
    $region5: #{net_forward.1} parent=1 // loop_body
      %s27 = ssub.s32 %s22, 1
      %s28 = ssub.s32 %s22, 2
      %s29 = sadd.s32 %s22, 1
      %s30 = ssub.s32 %s22, %s29
      %p31 = scmp.eq.s32.totalorder %s30, 0
      %s33 = sadd.s32 %s32, 1
      %s34 = scalar_select %p31, %s32, %s33
      %p37 = pneg %p31
      %p38 = scmp.eq.s32.totalorder %s22, 1
      %p39 = por %p37, %p38
      %p40 = scmp.ne.s32.totalorder %s32, %s35
      %p41 = scmp.eq.s32.totalorder %s22, 0
      %p42 = por %p40, %p41
      %p43 = scmp.ne.s32.totalorder %s32, %s35
      %p44 = scmp.eq.s32.totalorder %s27, 1
      %p45 = por %p43, %p44
      %p46 = scmp.ne.s32.totalorder %s35, %s36
      %p47 = scmp.eq.s32.totalorder %s27, 0
      %p48 = por %p46, %p47
      %p49 = scmp.ne.s32.totalorder %s35, %s36
      %p50 = scmp.eq.s32.totalorder %s28, 1
      %p51 = por %p49, %p50
      %p53 = scmp.ne.s32.totalorder %s36, %s52
      %p54 = scmp.eq.s32.totalorder %s28, 0
      %p55 = por %p53, %p54
      %s57 = sadd.s32 %s56, 1
      %p60 = scmp.eq.s32.totalorder %s22, 1
      %p61 = scmp.ne.s32.totalorder %s56, %s58
      %p62 = scmp.eq.s32.totalorder %s22, 0
      %p63 = por %p61, %p62
      %p64 = scmp.ne.s32.totalorder %s56, %s58
      %p65 = scmp.eq.s32.totalorder %s27, 1
      %p66 = por %p64, %p65
      %p67 = scmp.ne.s32.totalorder %s58, %s59
      %p68 = scmp.eq.s32.totalorder %s27, 0
      %p69 = por %p67, %p68
      %p70 = scmp.ne.s32.totalorder %s58, %s59
      %p71 = scmp.eq.s32.totalorder %s28, 1
      %p72 = por %p70, %p71
      %p74 = scmp.ne.s32.totalorder %s59, %s73
      %p75 = scmp.eq.s32.totalorder %s28, 0
      %p76 = por %p74, %p75
      %s78 = sadd.s32 %s77, 1
      %p81 = scmp.eq.s32.totalorder %s22, 1
      %p82 = scmp.ne.s32.totalorder %s77, %s79
      %p83 = scmp.eq.s32.totalorder %s22, 0
      %p84 = por %p82, %p83
      %p85 = scmp.ne.s32.totalorder %s77, %s79
      %p86 = scmp.eq.s32.totalorder %s27, 1
      %p87 = por %p85, %p86
      %p88 = scmp.ne.s32.totalorder %s79, %s80
      %p89 = scmp.eq.s32.totalorder %s27, 0
      %p90 = por %p88, %p89
      %p91 = scmp.ne.s32.totalorder %s79, %s80
      %p92 = scmp.eq.s32.totalorder %s28, 1
      %p93 = por %p91, %p92
      %p95 = scmp.ne.s32.totalorder %s80, %s94
      %p96 = scmp.eq.s32.totalorder %s28, 0
      %p97 = por %p95, %p96
      %s99 = sadd.s32 %s98, 1
      %p102 = scmp.eq.s32.totalorder %s22, 1
      %p103 = scmp.ne.s32.totalorder %s98, %s100
      %p104 = scmp.eq.s32.totalorder %s22, 0
      %p105 = por %p103, %p104
      %p106 = scmp.ne.s32.totalorder %s98, %s100
      %p107 = scmp.eq.s32.totalorder %s27, 1
      %p108 = por %p106, %p107
      %p109 = scmp.ne.s32.totalorder %s100, %s101
      %p110 = scmp.eq.s32.totalorder %s27, 0
      %p111 = por %p109, %p110
      %p112 = scmp.ne.s32.totalorder %s100, %s101
      %p113 = scmp.eq.s32.totalorder %s28, 1
      %p114 = por %p112, %p113
      %p116 = scmp.ne.s32.totalorder %s101, %s115
      %p117 = scmp.eq.s32.totalorder %s28, 0
      %p118 = por %p116, %p117
      %s120 = sadd.s32 %s119, 1
      %p123 = scmp.eq.s32.totalorder %s22, 1
      %p124 = scmp.ne.s32.totalorder %s119, %s121
      %p125 = scmp.eq.s32.totalorder %s22, 0
      %p126 = por %p124, %p125
      %p127 = scmp.ne.s32.totalorder %s119, %s121
      %p128 = scmp.eq.s32.totalorder %s27, 1
      %p129 = por %p127, %p128
      %p130 = scmp.ne.s32.totalorder %s121, %s122
      %p131 = scmp.eq.s32.totalorder %s27, 0
      %p132 = por %p130, %p131
      %p133 = scmp.ne.s32.totalorder %s121, %s122
      %p134 = scmp.eq.s32.totalorder %s28, 1
      %p135 = por %p133, %p134
      %p137 = scmp.ne.s32.totalorder %s122, %s136
      %p138 = scmp.eq.s32.totalorder %s28, 0
      %p139 = por %p137, %p138
      %s141 = sadd.s32 %s140, 1
      %p144 = scmp.eq.s32.totalorder %s22, 1
      %p145 = scmp.ne.s32.totalorder %s140, %s142
      %p146 = scmp.eq.s32.totalorder %s22, 0
      %p147 = por %p145, %p146
      %p148 = scmp.ne.s32.totalorder %s140, %s142
      %p149 = scmp.eq.s32.totalorder %s27, 1
      %p150 = por %p148, %p149
      %p151 = scmp.ne.s32.totalorder %s142, %s143
      %p152 = scmp.eq.s32.totalorder %s27, 0
      %p153 = por %p151, %p152
      %p154 = scmp.ne.s32.totalorder %s142, %s143
      %p155 = scmp.eq.s32.totalorder %s28, 1
      %p156 = por %p154, %p155
      %p158 = scmp.ne.s32.totalorder %s143, %s157
      %p159 = scmp.eq.s32.totalorder %s28, 0
      %p160 = por %p158, %p159
      %s162 = sadd.s32 %s161, 1
      %p165 = scmp.eq.s32.totalorder %s22, 1
      %p166 = scmp.ne.s32.totalorder %s161, %s163
      %p167 = scmp.eq.s32.totalorder %s22, 0
      %p168 = por %p166, %p167
      %p169 = scmp.ne.s32.totalorder %s161, %s163
      %p170 = scmp.eq.s32.totalorder %s27, 1
      %p171 = por %p169, %p170
      %p172 = scmp.ne.s32.totalorder %s163, %s164
      %p173 = scmp.eq.s32.totalorder %s27, 0
      %p174 = por %p172, %p173
      %p175 = scmp.ne.s32.totalorder %s163, %s164
      %p176 = scmp.eq.s32.totalorder %s28, 1
      %p177 = por %p175, %p176
      %p179 = scmp.ne.s32.totalorder %s164, %s178
      %p180 = scmp.eq.s32.totalorder %s28, 0
      %p181 = por %p179, %p180
      %s183 = sadd.s32 %s182, 1
      %p186 = scmp.eq.s32.totalorder %s22, 1
      %p187 = scmp.ne.s32.totalorder %s182, %s184
      %p188 = scmp.eq.s32.totalorder %s22, 0
      %p189 = por %p187, %p188
      %p190 = scmp.ne.s32.totalorder %s182, %s184
      %p191 = scmp.eq.s32.totalorder %s27, 1
      %p192 = por %p190, %p191
      %p193 = scmp.ne.s32.totalorder %s184, %s185
      %p194 = scmp.eq.s32.totalorder %s27, 0
      %p195 = por %p193, %p194
      %p196 = scmp.ne.s32.totalorder %s184, %s185
      %p197 = scmp.eq.s32.totalorder %s28, 1
      %p198 = por %p196, %p197
      %p200 = scmp.ne.s32.totalorder %s185, %s199
      %p201 = scmp.eq.s32.totalorder %s28, 0
      %p202 = por %p200, %p201
      %s204 = sadd.s32 %s203, 1
      %p207 = scmp.eq.s32.totalorder %s22, 1
      %p208 = scmp.ne.s32.totalorder %s203, %s205
      %p209 = scmp.eq.s32.totalorder %s22, 0
      %p210 = por %p208, %p209
      %p211 = scmp.ne.s32.totalorder %s203, %s205
      %p212 = scmp.eq.s32.totalorder %s27, 1
      %p213 = por %p211, %p212
      %p214 = scmp.ne.s32.totalorder %s205, %s206
      %p215 = scmp.eq.s32.totalorder %s27, 0
      %p216 = por %p214, %p215
      %p217 = scmp.ne.s32.totalorder %s205, %s206
      %p218 = scmp.eq.s32.totalorder %s28, 1
      %p219 = por %p217, %p218
      %p221 = scmp.ne.s32.totalorder %s206, %s220
      %p222 = scmp.eq.s32.totalorder %s28, 0
      %p223 = por %p221, %p222
      %s225 = sadd.s32 %s224, 1
      %p228 = scmp.eq.s32.totalorder %s22, 1
      %p229 = scmp.ne.s32.totalorder %s224, %s226
      %p230 = scmp.eq.s32.totalorder %s22, 0
      %p231 = por %p229, %p230
      %p232 = scmp.ne.s32.totalorder %s224, %s226
      %p233 = scmp.eq.s32.totalorder %s27, 1
      %p234 = por %p232, %p233
      %p235 = scmp.ne.s32.totalorder %s226, %s227
      %p236 = scmp.eq.s32.totalorder %s27, 0
      %p237 = por %p235, %p236
      %p238 = scmp.ne.s32.totalorder %s226, %s227
      %p239 = scmp.eq.s32.totalorder %s28, 1
      %p240 = por %p238, %p239
      %p242 = scmp.ne.s32.totalorder %s227, %s241
      %p243 = scmp.eq.s32.totalorder %s28, 0
      %p244 = por %p242, %p243
      %s246 = sadd.s32 %s245, 1
      %p249 = scmp.eq.s32.totalorder %s22, 1
      %p250 = scmp.ne.s32.totalorder %s245, %s247
      %p251 = scmp.eq.s32.totalorder %s22, 0
      %p252 = por %p250, %p251
      %p253 = scmp.ne.s32.totalorder %s245, %s247
      %p254 = scmp.eq.s32.totalorder %s27, 1
      %p255 = por %p253, %p254
      %p256 = scmp.ne.s32.totalorder %s247, %s248
      %p257 = scmp.eq.s32.totalorder %s27, 0
      %p258 = por %p256, %p257
      %p259 = scmp.ne.s32.totalorder %s247, %s248
      %p260 = scmp.eq.s32.totalorder %s28, 1
      %p261 = por %p259, %p260
      %p263 = scmp.ne.s32.totalorder %s248, %s262
      %p264 = scmp.eq.s32.totalorder %s28, 0
      %p265 = por %p263, %p264
      %s267 = sadd.s32 %s266, 1
      %p270 = scmp.eq.s32.totalorder %s22, 1
      %p271 = scmp.ne.s32.totalorder %s266, %s268
      %p272 = scmp.eq.s32.totalorder %s22, 0
      %p273 = por %p271, %p272
      %p274 = scmp.ne.s32.totalorder %s266, %s268
      %p275 = scmp.eq.s32.totalorder %s27, 1
      %p276 = por %p274, %p275
      %p277 = scmp.ne.s32.totalorder %s268, %s269
      %p278 = scmp.eq.s32.totalorder %s27, 0
      %p279 = por %p277, %p278
      %p280 = scmp.ne.s32.totalorder %s268, %s269
      %p281 = scmp.eq.s32.totalorder %s28, 1
      %p282 = por %p280, %p281
      %p284 = scmp.ne.s32.totalorder %s269, %s283
      %p285 = scmp.eq.s32.totalorder %s28, 0
      %p286 = por %p284, %p285
      %s288 = sadd.s32 %s287, 1
      %p291 = scmp.eq.s32.totalorder %s22, 1
      %p292 = scmp.ne.s32.totalorder %s287, %s289
      %p293 = scmp.eq.s32.totalorder %s22, 0
      %p294 = por %p292, %p293
      %p295 = scmp.ne.s32.totalorder %s287, %s289
      %p296 = scmp.eq.s32.totalorder %s27, 1
      %p297 = por %p295, %p296
      %p298 = scmp.ne.s32.totalorder %s289, %s290
      %p299 = scmp.eq.s32.totalorder %s27, 0
      %p300 = por %p298, %p299
      %p301 = scmp.ne.s32.totalorder %s289, %s290
      %p302 = scmp.eq.s32.totalorder %s28, 1
      %p303 = por %p301, %p302
      %p305 = scmp.ne.s32.totalorder %s290, %s304
      %p306 = scmp.eq.s32.totalorder %s28, 0
      %p307 = por %p305, %p306
      %s308 = ssub.s32 %s22, %s29
      %p309 = scmp.eq.s32.totalorder %s308, 0
      %s311 = sadd.s32 %s310, 1
      %s312 = scalar_select %p309, %s310, %s311
      %p315 = pneg %p309
      %p316 = scmp.eq.s32.totalorder %s22, 1
      %p317 = por %p315, %p316
      %p318 = scmp.ne.s32.totalorder %s310, %s313
      %p319 = scmp.eq.s32.totalorder %s22, 0
      %p320 = por %p318, %p319
      %p321 = scmp.ne.s32.totalorder %s310, %s313
      %p322 = scmp.eq.s32.totalorder %s27, 1
      %p323 = por %p321, %p322
      %p324 = scmp.ne.s32.totalorder %s313, %s314
      %p325 = scmp.eq.s32.totalorder %s27, 0
      %p326 = por %p324, %p325
      %p327 = scmp.ne.s32.totalorder %s313, %s314
      %p328 = scmp.eq.s32.totalorder %s28, 1
      %p329 = por %p327, %p328
      %p331 = scmp.ne.s32.totalorder %s314, %s330
      %p332 = scmp.eq.s32.totalorder %s28, 0
      %p333 = por %p331, %p332
      %p334 = scmp.le.s32.totalorder 1, %s22
      %p335 = scmp.lt.s32.totalorder %s22, 3
      %p336 = pnand %p334, %p335
      %p337 = pneg %p336
      // Predicated region
      $region9: #{net_forward.1} parent=5 // pred_check
        _
      $region10: #{net_forward.1} parent=5 // pred_check_branch
        %339 = sbr.rel (%p336) target = $region12
      $region11: #{net_forward.1} parent=5 // pred_region
        %s340 = ssub.s32 %s22, 1
        // Predicated region
        $region13: #{net_forward.1} parent=11 // pred_check
          %p341 = pneg %p69
        $region14: #{net_forward.1} parent=11 // pred_check_branch
          %343 = sbr.rel (%p341) target = $region16
        $region15: #{net_forward.1} parent=11 // pred_region
          _
        $region16: #{net_forward.1} parent=11 // pred_fallthru
          _
        // Predicated region
        $region17: #{net_forward.1} parent=11 // pred_check
          %p344 = pneg %p90
        $region18: #{net_forward.1} parent=11 // pred_check_branch
          %346 = sbr.rel (%p344) target = $region20
        $region19: #{net_forward.1} parent=11 // pred_region
          _
        $region20: #{net_forward.1} parent=11 // pred_fallthru
          _
        // Predicated region
        $region21: #{net_forward.1} parent=11 // pred_check
          %p347 = pneg %p111
        $region22: #{net_forward.1} parent=11 // pred_check_branch
          %349 = sbr.rel (%p347) target = $region24
        $region23: #{net_forward.1} parent=11 // pred_region
          _
        $region24: #{net_forward.1} parent=11 // pred_fallthru
          _
        // Predicated region
        $region25: #{net_forward.1} parent=11 // pred_check
          %p350 = pneg %p132
        $region26: #{net_forward.1} parent=11 // pred_check_branch
          %352 = sbr.rel (%p350) target = $region28
        $region27: #{net_forward.1} parent=11 // pred_region
          _
        $region28: #{net_forward.1} parent=11 // pred_fallthru
          _
        // Predicated region
        $region29: #{net_forward.1} parent=11 // pred_check
          %p353 = pneg %p153
        $region30: #{net_forward.1} parent=11 // pred_check_branch
          %355 = sbr.rel (%p353) target = $region32
        $region31: #{net_forward.1} parent=11 // pred_region
          _
        $region32: #{net_forward.1} parent=11 // pred_fallthru
          _
        // Predicated region
        $region33: #{net_forward.1} parent=11 // pred_check
          %p356 = pneg %p174
        $region34: #{net_forward.1} parent=11 // pred_check_branch
          %358 = sbr.rel (%p356) target = $region36
        $region35: #{net_forward.1} parent=11 // pred_region
          _
        $region36: #{net_forward.1} parent=11 // pred_fallthru
          _
        // Predicated region
        $region37: #{net_forward.1} parent=11 // pred_check
          %p359 = pneg %p195
        $region38: #{net_forward.1} parent=11 // pred_check_branch
          %361 = sbr.rel (%p359) target = $region40
        $region39: #{net_forward.1} parent=11 // pred_region
          _
        $region40: #{net_forward.1} parent=11 // pred_fallthru
          _
        // Predicated region
        $region41: #{net_forward.1} parent=11 // pred_check
          %p362 = pneg %p216
        $region42: #{net_forward.1} parent=11 // pred_check_branch
          %364 = sbr.rel (%p362) target = $region44
        $region43: #{net_forward.1} parent=11 // pred_region
          _
        $region44: #{net_forward.1} parent=11 // pred_fallthru
          _
        // Predicated region
        $region45: #{net_forward.1} parent=11 // pred_check
          %p365 = pneg %p237
        $region46: #{net_forward.1} parent=11 // pred_check_branch
          %367 = sbr.rel (%p365) target = $region48
        $region47: #{net_forward.1} parent=11 // pred_region
          _
        $region48: #{net_forward.1} parent=11 // pred_fallthru
          _
        // Predicated region
        $region49: #{net_forward.1} parent=11 // pred_check
          %p368 = pneg %p258
        $region50: #{net_forward.1} parent=11 // pred_check_branch
          %370 = sbr.rel (%p368) target = $region52
        $region51: #{net_forward.1} parent=11 // pred_region
          _
        $region52: #{net_forward.1} parent=11 // pred_fallthru
          _
        // Predicated region
        $region53: #{net_forward.1} parent=11 // pred_check
          %p371 = pneg %p279
        $region54: #{net_forward.1} parent=11 // pred_check_branch
          %373 = sbr.rel (%p371) target = $region56
        $region55: #{net_forward.1} parent=11 // pred_region
          _
        $region56: #{net_forward.1} parent=11 // pred_fallthru
          _
        // Predicated region
        $region57: #{net_forward.1} parent=11 // pred_check
          %p374 = pneg %p300
        $region58: #{net_forward.1} parent=11 // pred_check_branch
          %376 = sbr.rel (%p374) target = $region60
        $region59: #{net_forward.1} parent=11 // pred_region
          _
        $region60: #{net_forward.1} parent=11 // pred_fallthru
          _
      $region12: #{net_forward.1} parent=5 // pred_fallthru
        _
      %p377 = scmp.lt.s32.totalorder %s22, 2
      // Predicated region
      $region61: #{net_forward.1} parent=5 // pred_check
        %p378 = pneg %p377
      $region62: #{net_forward.1} parent=5 // pred_check_branch
        %380 = sbr.rel (%p378) target = $region64
      $region63: #{net_forward.1} parent=5 // pred_region
        // Predicated region
        $region65: #{net_forward.1} parent=63 // pred_check
          %p381 = pneg %p42
        $region66: #{net_forward.1} parent=63 // pred_check_branch
          %383 = sbr.rel (%p381) target = $region68
        $region67: #{net_forward.1} parent=63 // pred_region
          %p384 = scmp.lt.s32.totalorder %s22, 1
          %s385 = scalar_select %p384, %s22, 1
          %s386 = smul.addr %s385, 4
          %s387 = smul.addr %s386, 8
          %s388 = scalar_lea.vmem %s0, %s387
        $region68: #{net_forward.1} parent=63 // pred_fallthru
          _
      $region64: #{net_forward.1} parent=5 // pred_fallthru
        _
      %p389 = scmp.le.s32.totalorder 1, %s22
      %p390 = scmp.lt.s32.totalorder %s22, 3
      %p391 = pnand %p389, %p390
      %p392 = pneg %p391
      // Predicated region
      $region69: #{net_forward.1} parent=5 // pred_check
        _
      $region70: #{net_forward.1} parent=5 // pred_check_branch
        %394 = sbr.rel (%p391) target = $region72
      $region71: #{net_forward.1} parent=5 // pred_region
        %s395 = ssub.s32 %s22, 1
        %p396 = scmp.lt.s32.totalorder %s27, 1
        %s397 = scalar_select %p396, %s27, 1
        %s398 = smul.addr %s397, 4
        %s399 = smul.addr %s398, 8
        %s400 = scalar_lea.vmem %s0, %s399
        %p401 = pneg %p48
        %p402 = pneg %p45
        %p403 = pneg %p69
        %p404 = pneg %p66
        %p405 = pneg %p90
        %p406 = pneg %p87
        %p407 = pneg %p111
        %p408 = pneg %p108
        %p409 = pneg %p132
        %p410 = pneg %p129
        %p411 = pneg %p153
        %p412 = pneg %p150
        %p413 = pneg %p174
        %p414 = pneg %p171
        %p415 = pneg %p195
        %p416 = pneg %p192
        %p417 = pneg %p216
        %p418 = pneg %p213
        %p419 = pneg %p237
        %p420 = pneg %p234
        %p421 = pneg %p258
        %p422 = pneg %p255
        %p423 = pneg %p279
        %p424 = pneg %p276
        %p425 = pneg %p300
        %p426 = pneg %p297
        %p427 = pneg %p326
        %p428 = pneg %p323
        %s429 = sand.u32 %s313, 1
        %s430 = scalar_lea.sflag [#allocation3], %s429
        %s431 = sand.u32 %s313, 1
        %s432 = scalar_lea.vmem [#allocation2], %s431
        %p433 = scmp.lt.s32.totalorder %s27, 1
        %s434 = scalar_select %p433, %s27, 1
        %s435 = smul.addr %s434, 4
        %s436 = smul.addr %s435, 8
        %s437 = scalar_lea.vmem %s0, %s436
        %v438 = vld [vmem:[%s437] sm:$0xff]
        %v439 = vld [vmem:[%s437 + $0x8] sm:$0xff]
        %v440 = vld [vmem:[%s437 + $0x10] sm:$0xff]
        %v441 = vld [vmem:[%s437 + $0x18] sm:$0xff]
        %v442 = vld [vmem:[%s1] sm:$0xff]
        %v443 = vld [vmem:[%s1 + $0x8] sm:$0xff]
        %v444 = vld [vmem:[%s1 + $0x10] sm:$0xff]
        %v445 = vld [vmem:[%s1 + $0x18] sm:$0xff]
        %s446 = scalar_lea.vmem %s1, 32
        %v447 = vld [vmem:[%s446] sm:$0xff]
        %v448 = vld [vmem:[%s446 + $0x8] sm:$0xff]
        %v449 = vld [vmem:[%s446 + $0x10] sm:$0xff]
        %v450 = vld [vmem:[%s446 + $0x18] sm:$0xff]
        %s451 = scalar_lea.vmem %s1, 64
        %v452 = vld [vmem:[%s451] sm:$0xff]
        %v453 = vld [vmem:[%s451 + $0x8] sm:$0xff]
        %v454 = vld [vmem:[%s451 + $0x10] sm:$0xff]
        %v455 = vld [vmem:[%s451 + $0x18] sm:$0xff]
        %vm460 = vcmask 1046528
        %v461 = vrot.slane %v438, 1
        %v462 = vrot.slane %v439, 1
        %v463 = vsel %vm460, %v461, %v462
        %v464 = vrot.slane %v440, 1
        %v465 = vsel %vm460, %v462, %v464
        %v466 = vrot.slane %v441, 1
        %v467 = vsel %vm460, %v464, %v466
        %vm468 = vcmask 261120
        %v469 = vsel %vm468, %v463, 0
        %v471 = vsel %vm468, %v465, 0
        %v473 = vsel %vm468, %v467, 0
        %v475 = vsel %vm468, %v466, 0
        %477 = vmatprep.subr.mxu0 0.0
        %478 = vmatpush1.msra.mxu0 %v452
        %479 = vmatprep.subr.mxu0 0.0
        %480 = vmatpush1.msra.mxu0 %v453
        %481 = vmatprep.subr.mxu0 0.0
        %482 = vmatpush1.msra.mxu0 %v454
        %483 = vmatprep.subr.mxu0 0.0
        %484 = vmatpush1.msra.mxu0 %v455
        %485 = vmatprep.subr.mxu0 0.0
        %486 = vmatpush1.msra.mxu0 0.0
        %487 = vmatprep.subr.mxu0 0.0
        %488 = vmatpush1.msra.mxu0 0.0
        %489 = vmatprep.subr.mxu0 0.0
        %490 = vmatpush1.msra.mxu0 0.0
        %491 = vmatprep.subr.mxu0 0.0
        %492 = vmatpush1.msra.mxu0 0.0
        %493 = vmatprep.subr.mxu0 0.0
        %494 = vmatpush1.msra.mxu0 0.0
        %495 = vmatprep.subr.mxu0 0.0
        %496 = vmatpush1.msra.mxu0 0.0
        %497 = vmatprep.subr.mxu0 0.0
        %498 = vmatpush1.msra.mxu0 0.0
        %499 = vmatprep.subr.mxu0 0.0
        %500 = vmatpush1.msra.mxu0 0.0
        %501 = vmatprep.subr.mxu0 0.0
        %502 = vmatpush1.msra.mxu0 0.0
        %503 = vmatprep.subr.mxu0 0.0
        %504 = vmatpush1.msra.mxu0 0.0
        %505 = vmatprep.subr.mxu0 0.0
        %506 = vmatpush1.msra.mxu0 0.0
        %507 = vmatprep.subr.mxu0 0.0
        %508 = vmatpush1.msra.mxu0 0.0
        %509 = vmatprep.subr.mxu0 0.0
        %510 = vmatpush1.msra.mxu0 0.0
        %511 = vmatprep.subr.mxu0 0.0
        %512 = vmatpush1.msra.mxu0 0.0
        %513 = vmatprep.subr.mxu0 0.0
        %514 = vmatpush1.msra.mxu0 0.0
        %515 = vmatprep.subr.mxu0 0.0
        %516 = vmatpush1.msra.mxu0 0.0
        %517 = vmatprep.subr.mxu0 0.0
        %518 = vmatpush1.msra.mxu0 0.0
        %519 = vmatprep.subr.mxu0 0.0
        %520 = vmatpush1.msra.mxu0 0.0
        %521 = vmatprep.subr.mxu0 0.0
        %522 = vmatpush1.msra.mxu0 0.0
        %523 = vmatprep.subr.mxu0 0.0
        %524 = vmatpush1.msra.mxu0 0.0
        %525 = vmatprep.subr.mxu0 0.0
        %526 = vmatpush1.msra.mxu0 0.0
        %527 = vmatprep.subr.mxu0 0.0
        %528 = vmatpush1.msra.mxu0 0.0
        %529 = vmatprep.subr.mxu0 0.0
        %530 = vmatpush1.msra.mxu0 0.0
        %531 = vmatprep.subr.mxu0 0.0
        %532 = vmatpush1.msra.mxu0 0.0
        %533 = vmatprep.subr.mxu0 0.0
        %534 = vmatpush1.msra.mxu0 0.0
        %535 = vmatprep.subr.mxu0 0.0
        %536 = vmatpush1.msra.mxu0 0.0
        %537 = vmatprep.subr.mxu0 0.0
        %538 = vmatpush1.msra.mxu0 0.0
        %539 = vmatprep.subr.mxu0 0.0
        %540 = vmatpush1.msra.mxu0 0.0
        %541 = vmatprep.mubr.f32.mxu0 0.0
        %542 = vmatmul.mubr.f32.gmra.mrb[0].mxu0 %v469
        %v543 = vpop.f32.mrb[0].mxu0
        %v544 = vadd.f32 0.0, %v543
        %v545 = vpop.f32.mrb[0].mxu0
        %546 = vmatprep.mubr.f32.mxu0 0.0
        %547 = vmatmul.mubr.f32.gmra.mrb[0].mxu0 %v471
        %v548 = vpop.f32.mrb[0].mxu0
        %v549 = vadd.f32 0.0, %v548
        %v550 = vpop.f32.mrb[0].mxu0
        %551 = vmatprep.mubr.f32.mxu0 0.0
        %552 = vmatmul.mubr.f32.gmra.mrb[0].mxu0 %v473
        %v553 = vpop.f32.mrb[0].mxu0
        %v554 = vadd.f32 0.0, %v553
        %v555 = vpop.f32.mrb[0].mxu0
        %556 = vmatprep.mubr.f32.mxu0 0.0
        %557 = vmatmul.mubr.f32.gmra.mrb[0].mxu0 %v475
        %v558 = vpop.f32.mrb[0].mxu0
        %v559 = vadd.f32 0.0, %v558
        %v560 = vpop.f32.mrb[0].mxu0
        %561 = vdwg.mxu0
        %v562 = vsel %vm468, %v438, 0
        %v564 = vsel %vm468, %v439, 0
        %v566 = vsel %vm468, %v440, 0
        %v568 = vsel %vm468, %v441, 0
        %570 = vmatprep.subr.mxu0 0.0
        %571 = vmatpush1.msra.mxu0 %v442
        %572 = vmatprep.subr.mxu0 0.0
        %573 = vmatpush1.msra.mxu0 %v443
        %574 = vmatprep.subr.mxu0 0.0
        %575 = vmatpush1.msra.mxu0 %v444
        %576 = vmatprep.subr.mxu0 0.0
        %577 = vmatpush1.msra.mxu0 %v445
        %578 = vmatprep.subr.mxu0 0.0
        %579 = vmatpush1.msra.mxu0 0.0
        %580 = vmatprep.subr.mxu0 0.0
        %581 = vmatpush1.msra.mxu0 0.0
        %582 = vmatprep.subr.mxu0 0.0
        %583 = vmatpush1.msra.mxu0 0.0
        %584 = vmatprep.subr.mxu0 0.0
        %585 = vmatpush1.msra.mxu0 0.0
        %586 = vmatprep.subr.mxu0 0.0
        %587 = vmatpush1.msra.mxu0 0.0
        %588 = vmatprep.subr.mxu0 0.0
        %589 = vmatpush1.msra.mxu0 0.0
        %590 = vmatprep.subr.mxu0 0.0
        %591 = vmatpush1.msra.mxu0 0.0
        %592 = vmatprep.subr.mxu0 0.0
        %593 = vmatpush1.msra.mxu0 0.0
        %594 = vmatprep.subr.mxu0 0.0
        %595 = vmatpush1.msra.mxu0 0.0
        %596 = vmatprep.subr.mxu0 0.0
        %597 = vmatpush1.msra.mxu0 0.0
        %598 = vmatprep.subr.mxu0 0.0
        %599 = vmatpush1.msra.mxu0 0.0
        %600 = vmatprep.subr.mxu0 0.0
        %601 = vmatpush1.msra.mxu0 0.0
        %602 = vmatprep.subr.mxu0 0.0
        %603 = vmatpush1.msra.mxu0 0.0
        %604 = vmatprep.subr.mxu0 0.0
        %605 = vmatpush1.msra.mxu0 0.0
        %606 = vmatprep.subr.mxu0 0.0
        %607 = vmatpush1.msra.mxu0 0.0
        %608 = vmatprep.subr.mxu0 0.0
        %609 = vmatpush1.msra.mxu0 0.0
        %610 = vmatprep.subr.mxu0 0.0
        %611 = vmatpush1.msra.mxu0 0.0
        %612 = vmatprep.subr.mxu0 0.0
        %613 = vmatpush1.msra.mxu0 0.0
        %614 = vmatprep.subr.mxu0 0.0
        %615 = vmatpush1.msra.mxu0 0.0
        %616 = vmatprep.subr.mxu0 0.0
        %617 = vmatpush1.msra.mxu0 0.0
        %618 = vmatprep.subr.mxu0 0.0
        %619 = vmatpush1.msra.mxu0 0.0
        %620 = vmatprep.subr.mxu0 0.0
        %621 = vmatpush1.msra.mxu0 0.0
        %622 = vmatprep.subr.mxu0 0.0
        %623 = vmatpush1.msra.mxu0 0.0
        %624 = vmatprep.subr.mxu0 0.0
        %625 = vmatpush1.msra.mxu0 0.0
        %626 = vmatprep.subr.mxu0 0.0
        %627 = vmatpush1.msra.mxu0 0.0
        %628 = vmatprep.subr.mxu0 0.0
        %629 = vmatpush1.msra.mxu0 0.0
        %630 = vmatprep.subr.mxu0 0.0
        %631 = vmatpush1.msra.mxu0 0.0
        %632 = vmatprep.subr.mxu0 0.0
        %633 = vmatpush1.msra.mxu0 0.0
        %634 = vmatprep.mubr.f32.mxu0 0.0
        %635 = vmatmul.mubr.f32.gmra.mrb[0].mxu0 %v562
        %v636 = vpop.f32.mrb[0].mxu0
        %v637 = vadd.f32 %v544, %v636
        %v638 = vpop.f32.mrb[0].mxu0
        %639 = vmatprep.mubr.f32.mxu0 0.0
        %640 = vmatmul.mubr.f32.gmra.mrb[0].mxu0 %v564
        %v641 = vpop.f32.mrb[0].mxu0
        %v642 = vadd.f32 %v549, %v641
        %v643 = vpop.f32.mrb[0].mxu0
        %644 = vmatprep.mubr.f32.mxu0 0.0
        %645 = vmatmul.mubr.f32.gmra.mrb[0].mxu0 %v566
        %v646 = vpop.f32.mrb[0].mxu0
        %v647 = vadd.f32 %v554, %v646
        %v648 = vpop.f32.mrb[0].mxu0
        %649 = vmatprep.mubr.f32.mxu0 0.0
        %650 = vmatmul.mubr.f32.gmra.mrb[0].mxu0 %v568
        %v651 = vpop.f32.mrb[0].mxu0
        %v652 = vadd.f32 %v559, %v651
        %v653 = vpop.f32.mrb[0].mxu0
        %654 = vdwg.mxu0
        %s655 = scalar_lea.vmem %s1, 96
        %v656 = vld [vmem:[%s655] sm:$0xff]
        %v657 = vld [vmem:[%s655 + $0x8] sm:$0xff]
        %v658 = vld [vmem:[%s655 + $0x10] sm:$0xff]
        %v659 = vld [vmem:[%s655 + $0x18] sm:$0xff]
        %660 = vmatprep.subr.mxu0 0.0
        %661 = vmatpush1.msra.mxu0 %v656
        %662 = vmatprep.subr.mxu0 0.0
        %663 = vmatpush1.msra.mxu0 %v657
        %664 = vmatprep.subr.mxu0 0.0
        %665 = vmatpush1.msra.mxu0 %v658
        %666 = vmatprep.subr.mxu0 0.0
        %667 = vmatpush1.msra.mxu0 %v659
        %668 = vmatprep.subr.mxu0 0.0
        %669 = vmatpush1.msra.mxu0 0.0
        %670 = vmatprep.subr.mxu0 0.0
        %671 = vmatpush1.msra.mxu0 0.0
        %672 = vmatprep.subr.mxu0 0.0
        %673 = vmatpush1.msra.mxu0 0.0
        %674 = vmatprep.subr.mxu0 0.0
        %675 = vmatpush1.msra.mxu0 0.0
        %676 = vmatprep.subr.mxu0 0.0
        %677 = vmatpush1.msra.mxu0 0.0
        %678 = vmatprep.subr.mxu0 0.0
        %679 = vmatpush1.msra.mxu0 0.0
        %680 = vmatprep.subr.mxu0 0.0
        %681 = vmatpush1.msra.mxu0 0.0
        %682 = vmatprep.subr.mxu0 0.0
        %683 = vmatpush1.msra.mxu0 0.0
        %684 = vmatprep.subr.mxu0 0.0
        %685 = vmatpush1.msra.mxu0 0.0
        %686 = vmatprep.subr.mxu0 0.0
        %687 = vmatpush1.msra.mxu0 0.0
        %688 = vmatprep.subr.mxu0 0.0
        %689 = vmatpush1.msra.mxu0 0.0
        %690 = vmatprep.subr.mxu0 0.0
        %691 = vmatpush1.msra.mxu0 0.0
        %692 = vmatprep.subr.mxu0 0.0
        %693 = vmatpush1.msra.mxu0 0.0
        %694 = vmatprep.subr.mxu0 0.0
        %695 = vmatpush1.msra.mxu0 0.0
        %696 = vmatprep.subr.mxu0 0.0
        %697 = vmatpush1.msra.mxu0 0.0
        %698 = vmatprep.subr.mxu0 0.0
        %699 = vmatpush1.msra.mxu0 0.0
        %700 = vmatprep.subr.mxu0 0.0
        %701 = vmatpush1.msra.mxu0 0.0
        %702 = vmatprep.subr.mxu0 0.0
        %703 = vmatpush1.msra.mxu0 0.0
        %704 = vmatprep.subr.mxu0 0.0
        %705 = vmatpush1.msra.mxu0 0.0
        %706 = vmatprep.subr.mxu0 0.0
        %707 = vmatpush1.msra.mxu0 0.0
        %708 = vmatprep.subr.mxu0 0.0
        %709 = vmatpush1.msra.mxu0 0.0
        %710 = vmatprep.subr.mxu0 0.0
        %711 = vmatpush1.msra.mxu0 0.0
        %712 = vmatprep.subr.mxu0 0.0
        %713 = vmatpush1.msra.mxu0 0.0
        %714 = vmatprep.subr.mxu0 0.0
        %715 = vmatpush1.msra.mxu0 0.0
        %716 = vmatprep.subr.mxu0 0.0
        %717 = vmatpush1.msra.mxu0 0.0
        %718 = vmatprep.subr.mxu0 0.0
        %719 = vmatpush1.msra.mxu0 0.0
        %720 = vmatprep.subr.mxu0 0.0
        %721 = vmatpush1.msra.mxu0 0.0
        %722 = vmatprep.subr.mxu0 0.0
        %723 = vmatpush1.msra.mxu0 0.0
        %724 = vmatprep.mubr.f32.mxu0 0.0
        %725 = vmatmul.mubr.f32.gmra.mrb[0].mxu0 %v469
        %v726 = vpop.f32.mrb[0].mxu0
        %v727 = vadd.f32 0.0, %v726
        %v728 = vpop.f32.mrb[0].mxu0
        %729 = vmatprep.mubr.f32.mxu0 0.0
        %730 = vmatmul.mubr.f32.gmra.mrb[0].mxu0 %v471
        %v731 = vpop.f32.mrb[0].mxu0
        %v732 = vadd.f32 0.0, %v731
        %v733 = vpop.f32.mrb[0].mxu0
        %734 = vmatprep.mubr.f32.mxu0 0.0
        %735 = vmatmul.mubr.f32.gmra.mrb[0].mxu0 %v473
        %v736 = vpop.f32.mrb[0].mxu0
        %v737 = vadd.f32 0.0, %v736
        %v738 = vpop.f32.mrb[0].mxu0
        %739 = vmatprep.mubr.f32.mxu0 0.0
        %740 = vmatmul.mubr.f32.gmra.mrb[0].mxu0 %v475
        %v741 = vpop.f32.mrb[0].mxu0
        %v742 = vadd.f32 0.0, %v741
        %v743 = vpop.f32.mrb[0].mxu0
        %744 = vdwg.mxu0
        %745 = vmatprep.subr.mxu0 0.0
        %746 = vmatpush1.msra.mxu0 %v447
        %747 = vmatprep.subr.mxu0 0.0
        %748 = vmatpush1.msra.mxu0 %v448
        %749 = vmatprep.subr.mxu0 0.0
        %750 = vmatpush1.msra.mxu0 %v449
        %751 = vmatprep.subr.mxu0 0.0
        %752 = vmatpush1.msra.mxu0 %v450
        %753 = vmatprep.subr.mxu0 0.0
        %754 = vmatpush1.msra.mxu0 0.0
        %755 = vmatprep.subr.mxu0 0.0
        %756 = vmatpush1.msra.mxu0 0.0
        %757 = vmatprep.subr.mxu0 0.0
        %758 = vmatpush1.msra.mxu0 0.0
        %759 = vmatprep.subr.mxu0 0.0
        %760 = vmatpush1.msra.mxu0 0.0
        %761 = vmatprep.subr.mxu0 0.0
        %762 = vmatpush1.msra.mxu0 0.0
        %763 = vmatprep.subr.mxu0 0.0
        %764 = vmatpush1.msra.mxu0 0.0
        %765 = vmatprep.subr.mxu0 0.0
        %766 = vmatpush1.msra.mxu0 0.0
        %767 = vmatprep.subr.mxu0 0.0
        %768 = vmatpush1.msra.mxu0 0.0
        %769 = vmatprep.subr.mxu0 0.0
        %770 = vmatpush1.msra.mxu0 0.0
        %771 = vmatprep.subr.mxu0 0.0
        %772 = vmatpush1.msra.mxu0 0.0
        %773 = vmatprep.subr.mxu0 0.0
        %774 = vmatpush1.msra.mxu0 0.0
        %775 = vmatprep.subr.mxu0 0.0
        %776 = vmatpush1.msra.mxu0 0.0
        %777 = vmatprep.subr.mxu0 0.0
        %778 = vmatpush1.msra.mxu0 0.0
        %779 = vmatprep.subr.mxu0 0.0
        %780 = vmatpush1.msra.mxu0 0.0
        %781 = vmatprep.subr.mxu0 0.0
        %782 = vmatpush1.msra.mxu0 0.0
        %783 = vmatprep.subr.mxu0 0.0
        %784 = vmatpush1.msra.mxu0 0.0
        %785 = vmatprep.subr.mxu0 0.0
        %786 = vmatpush1.msra.mxu0 0.0
        %787 = vmatprep.subr.mxu0 0.0
        %788 = vmatpush1.msra.mxu0 0.0
        %789 = vmatprep.subr.mxu0 0.0
        %790 = vmatpush1.msra.mxu0 0.0
        %791 = vmatprep.subr.mxu0 0.0
        %792 = vmatpush1.msra.mxu0 0.0
        %793 = vmatprep.subr.mxu0 0.0
        %794 = vmatpush1.msra.mxu0 0.0
        %795 = vmatprep.subr.mxu0 0.0
        %796 = vmatpush1.msra.mxu0 0.0
        %797 = vmatprep.subr.mxu0 0.0
        %798 = vmatpush1.msra.mxu0 0.0
        %799 = vmatprep.subr.mxu0 0.0
        %800 = vmatpush1.msra.mxu0 0.0
        %801 = vmatprep.subr.mxu0 0.0
        %802 = vmatpush1.msra.mxu0 0.0
        %803 = vmatprep.subr.mxu0 0.0
        %804 = vmatpush1.msra.mxu0 0.0
        %805 = vmatprep.subr.mxu0 0.0
        %806 = vmatpush1.msra.mxu0 0.0
        %807 = vmatprep.subr.mxu0 0.0
        %808 = vmatpush1.msra.mxu0 0.0
        %809 = vmatprep.mubr.f32.mxu0 0.0
        %810 = vmatmul.mubr.f32.gmra.mrb[0].mxu0 %v562
        %v811 = vpop.f32.mrb[0].mxu0
        %v812 = vadd.f32 %v727, %v811
        %v813 = vpop.f32.mrb[0].mxu0
        %814 = vmatprep.mubr.f32.mxu0 0.0
        %815 = vmatmul.mubr.f32.gmra.mrb[0].mxu0 %v564
        %v816 = vpop.f32.mrb[0].mxu0
        %v817 = vadd.f32 %v732, %v816
        %v818 = vpop.f32.mrb[0].mxu0
        %819 = vmatprep.mubr.f32.mxu0 0.0
        %820 = vmatmul.mubr.f32.gmra.mrb[0].mxu0 %v566
        %v821 = vpop.f32.mrb[0].mxu0
        %v822 = vadd.f32 %v737, %v821
        %v823 = vpop.f32.mrb[0].mxu0
        %824 = vmatprep.mubr.f32.mxu0 0.0
        %825 = vmatmul.mubr.f32.gmra.mrb[0].mxu0 %v568
        %v826 = vpop.f32.mrb[0].mxu0
        %v827 = vadd.f32 %v742, %v826
        %v828 = vpop.f32.mrb[0].mxu0
        %829 = vdwg.mxu0
        %s830 = scalar_lea.vmem %s1, 128
        %v831 = vld [vmem:[%s830] sm:$0xff]
        %v832 = vld [vmem:[%s830 + $0x8] sm:$0xff]
        %v833 = vld [vmem:[%s830 + $0x10] sm:$0xff]
        %v834 = vld [vmem:[%s830 + $0x18] sm:$0xff]
        %vm835 = vcmask 1045504
        %v836 = vrot.slane %v438, 2
        %v837 = vrot.slane %v439, 2
        %v838 = vsel %vm835, %v836, %v837
        %v839 = vrot.slane %v440, 2
        %v840 = vsel %vm835, %v837, %v839
        %v841 = vrot.slane %v441, 2
        %v842 = vsel %vm835, %v839, %v841
        %v843 = vsel %vm468, %v838, 0
        %v845 = vsel %vm468, %v840, 0
        %v847 = vsel %vm468, %v842, 0
        %v849 = vsel %vm468, %v841, 0
        %851 = vmatprep.subr.mxu0 0.0
        %852 = vmatpush1.msra.mxu0 %v831
        %853 = vmatprep.subr.mxu0 0.0
        %854 = vmatpush1.msra.mxu0 %v832
        %855 = vmatprep.subr.mxu0 0.0
        %856 = vmatpush1.msra.mxu0 %v833
        %857 = vmatprep.subr.mxu0 0.0
        %858 = vmatpush1.msra.mxu0 %v834
        %859 = vmatprep.subr.mxu0 0.0
        %860 = vmatpush1.msra.mxu0 0.0
        %861 = vmatprep.subr.mxu0 0.0
        %862 = vmatpush1.msra.mxu0 0.0
        %863 = vmatprep.subr.mxu0 0.0
        %864 = vmatpush1.msra.mxu0 0.0
        %865 = vmatprep.subr.mxu0 0.0
        %866 = vmatpush1.msra.mxu0 0.0
        %867 = vmatprep.subr.mxu0 0.0
        %868 = vmatpush1.msra.mxu0 0.0
        %869 = vmatprep.subr.mxu0 0.0
        %870 = vmatpush1.msra.mxu0 0.0
        %871 = vmatprep.subr.mxu0 0.0
        %872 = vmatpush1.msra.mxu0 0.0
        %873 = vmatprep.subr.mxu0 0.0
        %874 = vmatpush1.msra.mxu0 0.0
        %875 = vmatprep.subr.mxu0 0.0
        %876 = vmatpush1.msra.mxu0 0.0
        %877 = vmatprep.subr.mxu0 0.0
        %878 = vmatpush1.msra.mxu0 0.0
        %879 = vmatprep.subr.mxu0 0.0
        %880 = vmatpush1.msra.mxu0 0.0
        %881 = vmatprep.subr.mxu0 0.0
        %882 = vmatpush1.msra.mxu0 0.0
        %883 = vmatprep.subr.mxu0 0.0
        %884 = vmatpush1.msra.mxu0 0.0
        %885 = vmatprep.subr.mxu0 0.0
        %886 = vmatpush1.msra.mxu0 0.0
        %887 = vmatprep.subr.mxu0 0.0
        %888 = vmatpush1.msra.mxu0 0.0
        %889 = vmatprep.subr.mxu0 0.0
        %890 = vmatpush1.msra.mxu0 0.0
        %891 = vmatprep.subr.mxu0 0.0
        %892 = vmatpush1.msra.mxu0 0.0
        %893 = vmatprep.subr.mxu0 0.0
        %894 = vmatpush1.msra.mxu0 0.0
        %895 = vmatprep.subr.mxu0 0.0
        %896 = vmatpush1.msra.mxu0 0.0
        %897 = vmatprep.subr.mxu0 0.0
        %898 = vmatpush1.msra.mxu0 0.0
        %899 = vmatprep.subr.mxu0 0.0
        %900 = vmatpush1.msra.mxu0 0.0
        %901 = vmatprep.subr.mxu0 0.0
        %902 = vmatpush1.msra.mxu0 0.0
        %903 = vmatprep.subr.mxu0 0.0
        %904 = vmatpush1.msra.mxu0 0.0
        %905 = vmatprep.subr.mxu0 0.0
        %906 = vmatpush1.msra.mxu0 0.0
        %907 = vmatprep.subr.mxu0 0.0
        %908 = vmatpush1.msra.mxu0 0.0
        %909 = vmatprep.subr.mxu0 0.0
        %910 = vmatpush1.msra.mxu0 0.0
        %911 = vmatprep.subr.mxu0 0.0
        %912 = vmatpush1.msra.mxu0 0.0
        %913 = vmatprep.subr.mxu0 0.0
        %914 = vmatpush1.msra.mxu0 0.0
        %915 = vmatprep.mubr.f32.mxu0 0.0
        %916 = vmatmul.mubr.f32.gmra.mrb[0].mxu0 %v843
        %v917 = vpop.f32.mrb[0].mxu0
        %v918 = vadd.f32 0.0, %v917
        %v919 = vpop.f32.mrb[0].mxu0
        %920 = vmatprep.mubr.f32.mxu0 0.0
        %921 = vmatmul.mubr.f32.gmra.mrb[0].mxu0 %v845
        %v922 = vpop.f32.mrb[0].mxu0
        %v923 = vadd.f32 0.0, %v922
        %v924 = vpop.f32.mrb[0].mxu0
        %925 = vmatprep.mubr.f32.mxu0 0.0
        %926 = vmatmul.mubr.f32.gmra.mrb[0].mxu0 %v847
        %v927 = vpop.f32.mrb[0].mxu0
        %v928 = vadd.f32 0.0, %v927
        %v929 = vpop.f32.mrb[0].mxu0
        %930 = vmatprep.mubr.f32.mxu0 0.0
        %931 = vmatmul.mubr.f32.gmra.mrb[0].mxu0 %v849
        %v932 = vpop.f32.mrb[0].mxu0
        %v933 = vadd.f32 0.0, %v932
        %v934 = vpop.f32.mrb[0].mxu0
        %935 = vdwg.mxu0
        %v936 = vadd.f32 %v637, %v918
        %v937 = vadd.f32 %v642, %v923
        %v938 = vadd.f32 %v647, %v928
        %v939 = vadd.f32 %v652, %v933
        %s940 = scalar_lea.vmem %s1, 160
        %v941 = vld [vmem:[%s940] sm:$0xff]
        %v942 = vld [vmem:[%s940 + $0x8] sm:$0xff]
        %v943 = vld [vmem:[%s940 + $0x10] sm:$0xff]
        %v944 = vld [vmem:[%s940 + $0x18] sm:$0xff]
        %945 = vmatprep.subr.mxu0 0.0
        %946 = vmatpush1.msra.mxu0 %v941
        %947 = vmatprep.subr.mxu0 0.0
        %948 = vmatpush1.msra.mxu0 %v942
        %949 = vmatprep.subr.mxu0 0.0
        %950 = vmatpush1.msra.mxu0 %v943
        %951 = vmatprep.subr.mxu0 0.0
        %952 = vmatpush1.msra.mxu0 %v944
        %953 = vmatprep.subr.mxu0 0.0
        %954 = vmatpush1.msra.mxu0 0.0
        %955 = vmatprep.subr.mxu0 0.0
        %956 = vmatpush1.msra.mxu0 0.0
        %957 = vmatprep.subr.mxu0 0.0
        %958 = vmatpush1.msra.mxu0 0.0
        %959 = vmatprep.subr.mxu0 0.0
        %960 = vmatpush1.msra.mxu0 0.0
        %961 = vmatprep.subr.mxu0 0.0
        %962 = vmatpush1.msra.mxu0 0.0
        %963 = vmatprep.subr.mxu0 0.0
        %964 = vmatpush1.msra.mxu0 0.0
        %965 = vmatprep.subr.mxu0 0.0
        %966 = vmatpush1.msra.mxu0 0.0
        %967 = vmatprep.subr.mxu0 0.0
        %968 = vmatpush1.msra.mxu0 0.0
        %969 = vmatprep.subr.mxu0 0.0
        %970 = vmatpush1.msra.mxu0 0.0
        %971 = vmatprep.subr.mxu0 0.0
        %972 = vmatpush1.msra.mxu0 0.0
        %973 = vmatprep.subr.mxu0 0.0
        %974 = vmatpush1.msra.mxu0 0.0
        %975 = vmatprep.subr.mxu0 0.0
        %976 = vmatpush1.msra.mxu0 0.0
        %977 = vmatprep.subr.mxu0 0.0
        %978 = vmatpush1.msra.mxu0 0.0
        %979 = vmatprep.subr.mxu0 0.0
        %980 = vmatpush1.msra.mxu0 0.0
        %981 = vmatprep.subr.mxu0 0.0
        %982 = vmatpush1.msra.mxu0 0.0
        %983 = vmatprep.subr.mxu0 0.0
        %984 = vmatpush1.msra.mxu0 0.0
        %985 = vmatprep.subr.mxu0 0.0
        %986 = vmatpush1.msra.mxu0 0.0
        %987 = vmatprep.subr.mxu0 0.0
        %988 = vmatpush1.msra.mxu0 0.0
        %989 = vmatprep.subr.mxu0 0.0
        %990 = vmatpush1.msra.mxu0 0.0
        %991 = vmatprep.subr.mxu0 0.0
        %992 = vmatpush1.msra.mxu0 0.0
        %993 = vmatprep.subr.mxu0 0.0
        %994 = vmatpush1.msra.mxu0 0.0
        %995 = vmatprep.subr.mxu0 0.0
        %996 = vmatpush1.msra.mxu0 0.0
        %997 = vmatprep.subr.mxu0 0.0
        %998 = vmatpush1.msra.mxu0 0.0
        %999 = vmatprep.subr.mxu0 0.0
        %1000 = vmatpush1.msra.mxu0 0.0
        %1001 = vmatprep.subr.mxu0 0.0
        %1002 = vmatpush1.msra.mxu0 0.0
        %1003 = vmatprep.subr.mxu0 0.0
        %1004 = vmatpush1.msra.mxu0 0.0
        %1005 = vmatprep.subr.mxu0 0.0
        %1006 = vmatpush1.msra.mxu0 0.0
        %1007 = vmatprep.subr.mxu0 0.0
        %1008 = vmatpush1.msra.mxu0 0.0
        %1009 = vmatprep.mubr.f32.mxu0 0.0
        %1010 = vmatmul.mubr.f32.gmra.mrb[0].mxu0 %v843
        %v1011 = vpop.f32.mrb[0].mxu0
        %v1012 = vadd.f32 0.0, %v1011
        %v1013 = vpop.f32.mrb[0].mxu0
        %1014 = vmatprep.mubr.f32.mxu0 0.0
        %1015 = vmatmul.mubr.f32.gmra.mrb[0].mxu0 %v845
        %v1016 = vpop.f32.mrb[0].mxu0
        %v1017 = vadd.f32 0.0, %v1016
        %v1018 = vpop.f32.mrb[0].mxu0
        %1019 = vmatprep.mubr.f32.mxu0 0.0
        %1020 = vmatmul.mubr.f32.gmra.mrb[0].mxu0 %v847
        %v1021 = vpop.f32.mrb[0].mxu0
        %v1022 = vadd.f32 0.0, %v1021
        %v1023 = vpop.f32.mrb[0].mxu0
        %1024 = vmatprep.mubr.f32.mxu0 0.0
        %1025 = vmatmul.mubr.f32.gmra.mrb[0].mxu0 %v849
        %v1026 = vpop.f32.mrb[0].mxu0
        %v1027 = vadd.f32 0.0, %v1026
        %v1028 = vpop.f32.mrb[0].mxu0
        %1029 = vdwg.mxu0
        %v1030 = vadd.f32 %v812, %v1012
        %v1031 = vadd.f32 %v817, %v1017
        %v1032 = vadd.f32 %v822, %v1022
        %v1033 = vadd.f32 %v827, %v1027
        %s1034 = scalar_lea.vmem %s1, 192
        %v1035 = vld [vmem:[%s1034] sm:$0xff]
        %v1036 = vld [vmem:[%s1034 + $0x8] sm:$0xff]
        %v1037 = vld [vmem:[%s1034 + $0x10] sm:$0xff]
        %v1038 = vld [vmem:[%s1034 + $0x18] sm:$0xff]
        %vm1039 = vcmask 1044480
        %v1040 = vrot.slane %v438, 3
        %v1041 = vrot.slane %v439, 3
        %v1042 = vsel %vm1039, %v1040, %v1041
        %v1043 = vrot.slane %v440, 3
        %v1044 = vsel %vm1039, %v1041, %v1043
        %v1045 = vrot.slane %v441, 3
        %v1046 = vsel %vm1039, %v1043, %v1045
        %v1047 = vsel %vm468, %v1042, 0
        %v1049 = vsel %vm468, %v1044, 0
        %v1051 = vsel %vm468, %v1046, 0
        %v1053 = vsel %vm468, %v1045, 0
        %1055 = vmatprep.subr.mxu0 0.0
        %1056 = vmatpush1.msra.mxu0 %v1035
        %1057 = vmatprep.subr.mxu0 0.0
        %1058 = vmatpush1.msra.mxu0 %v1036
        %1059 = vmatprep.subr.mxu0 0.0
        %1060 = vmatpush1.msra.mxu0 %v1037
        %1061 = vmatprep.subr.mxu0 0.0
        %1062 = vmatpush1.msra.mxu0 %v1038
        %1063 = vmatprep.subr.mxu0 0.0
        %1064 = vmatpush1.msra.mxu0 0.0
        %1065 = vmatprep.subr.mxu0 0.0
        %1066 = vmatpush1.msra.mxu0 0.0
        %1067 = vmatprep.subr.mxu0 0.0
        %1068 = vmatpush1.msra.mxu0 0.0
        %1069 = vmatprep.subr.mxu0 0.0
        %1070 = vmatpush1.msra.mxu0 0.0
        %1071 = vmatprep.subr.mxu0 0.0
        %1072 = vmatpush1.msra.mxu0 0.0
        %1073 = vmatprep.subr.mxu0 0.0
        %1074 = vmatpush1.msra.mxu0 0.0
        %1075 = vmatprep.subr.mxu0 0.0
        %1076 = vmatpush1.msra.mxu0 0.0
        %1077 = vmatprep.subr.mxu0 0.0
        %1078 = vmatpush1.msra.mxu0 0.0
        %1079 = vmatprep.subr.mxu0 0.0
        %1080 = vmatpush1.msra.mxu0 0.0
        %1081 = vmatprep.subr.mxu0 0.0
        %1082 = vmatpush1.msra.mxu0 0.0
        %1083 = vmatprep.subr.mxu0 0.0
        %1084 = vmatpush1.msra.mxu0 0.0
        %1085 = vmatprep.subr.mxu0 0.0
        %1086 = vmatpush1.msra.mxu0 0.0
        %1087 = vmatprep.subr.mxu0 0.0
        %1088 = vmatpush1.msra.mxu0 0.0
        %1089 = vmatprep.subr.mxu0 0.0
        %1090 = vmatpush1.msra.mxu0 0.0
        %1091 = vmatprep.subr.mxu0 0.0
        %1092 = vmatpush1.msra.mxu0 0.0
        %1093 = vmatprep.subr.mxu0 0.0
        %1094 = vmatpush1.msra.mxu0 0.0
        %1095 = vmatprep.subr.mxu0 0.0
        %1096 = vmatpush1.msra.mxu0 0.0
        %1097 = vmatprep.subr.mxu0 0.0
        %1098 = vmatpush1.msra.mxu0 0.0
        %1099 = vmatprep.subr.mxu0 0.0
        %1100 = vmatpush1.msra.mxu0 0.0
        %1101 = vmatprep.subr.mxu0 0.0
        %1102 = vmatpush1.msra.mxu0 0.0
        %1103 = vmatprep.subr.mxu0 0.0
        %1104 = vmatpush1.msra.mxu0 0.0
        %1105 = vmatprep.subr.mxu0 0.0
        %1106 = vmatpush1.msra.mxu0 0.0
        %1107 = vmatprep.subr.mxu0 0.0
        %1108 = vmatpush1.msra.mxu0 0.0
        %1109 = vmatprep.subr.mxu0 0.0
        %1110 = vmatpush1.msra.mxu0 0.0
        %1111 = vmatprep.subr.mxu0 0.0
        %1112 = vmatpush1.msra.mxu0 0.0
        %1113 = vmatprep.subr.mxu0 0.0
        %1114 = vmatpush1.msra.mxu0 0.0
        %1115 = vmatprep.subr.mxu0 0.0
        %1116 = vmatpush1.msra.mxu0 0.0
        %1117 = vmatprep.subr.mxu0 0.0
        %1118 = vmatpush1.msra.mxu0 0.0
        %1119 = vmatprep.mubr.f32.mxu0 0.0
        %1120 = vmatmul.mubr.f32.gmra.mrb[0].mxu0 %v1047
        %v1121 = vpop.f32.mrb[0].mxu0
        %v1122 = vadd.f32 0.0, %v1121
        %v1123 = vpop.f32.mrb[0].mxu0
        %1124 = vmatprep.mubr.f32.mxu0 0.0
        %1125 = vmatmul.mubr.f32.gmra.mrb[0].mxu0 %v1049
        %v1126 = vpop.f32.mrb[0].mxu0
        %v1127 = vadd.f32 0.0, %v1126
        %v1128 = vpop.f32.mrb[0].mxu0
        %1129 = vmatprep.mubr.f32.mxu0 0.0
        %1130 = vmatmul.mubr.f32.gmra.mrb[0].mxu0 %v1051
        %v1131 = vpop.f32.mrb[0].mxu0
        %v1132 = vadd.f32 0.0, %v1131
        %v1133 = vpop.f32.mrb[0].mxu0
        %1134 = vmatprep.mubr.f32.mxu0 0.0
        %1135 = vmatmul.mubr.f32.gmra.mrb[0].mxu0 %v1053
        %v1136 = vpop.f32.mrb[0].mxu0
        %v1137 = vadd.f32 0.0, %v1136
        %v1138 = vpop.f32.mrb[0].mxu0
        %1139 = vdwg.mxu0
        %v1140 = vadd.f32 %v936, %v1122
        %v1141 = vadd.f32 %v937, %v1127
        %v1142 = vadd.f32 %v938, %v1132
        %v1143 = vadd.f32 %v939, %v1137
        %s1144 = scalar_lea.vmem %s1, 224
        %v1145 = vld [vmem:[%s1144] sm:$0xff]
        %v1146 = vld [vmem:[%s1144 + $0x8] sm:$0xff]
        %v1147 = vld [vmem:[%s1144 + $0x10] sm:$0xff]
        %v1148 = vld [vmem:[%s1144 + $0x18] sm:$0xff]
        %1149 = vmatprep.subr.mxu0 0.0
        %1150 = vmatpush1.msra.mxu0 %v1145
        %1151 = vmatprep.subr.mxu0 0.0
        %1152 = vmatpush1.msra.mxu0 %v1146
        %1153 = vmatprep.subr.mxu0 0.0
        %1154 = vmatpush1.msra.mxu0 %v1147
        %1155 = vmatprep.subr.mxu0 0.0
        %1156 = vmatpush1.msra.mxu0 %v1148
        %1157 = vmatprep.subr.mxu0 0.0
        %1158 = vmatpush1.msra.mxu0 0.0
        %1159 = vmatprep.subr.mxu0 0.0
        %1160 = vmatpush1.msra.mxu0 0.0
        %1161 = vmatprep.subr.mxu0 0.0
        %1162 = vmatpush1.msra.mxu0 0.0
        %1163 = vmatprep.subr.mxu0 0.0
        %1164 = vmatpush1.msra.mxu0 0.0
        %1165 = vmatprep.subr.mxu0 0.0
        %1166 = vmatpush1.msra.mxu0 0.0
        %1167 = vmatprep.subr.mxu0 0.0
        %1168 = vmatpush1.msra.mxu0 0.0
        %1169 = vmatprep.subr.mxu0 0.0
        %1170 = vmatpush1.msra.mxu0 0.0
        %1171 = vmatprep.subr.mxu0 0.0
        %1172 = vmatpush1.msra.mxu0 0.0
        %1173 = vmatprep.subr.mxu0 0.0
        %1174 = vmatpush1.msra.mxu0 0.0
        %1175 = vmatprep.subr.mxu0 0.0
        %1176 = vmatpush1.msra.mxu0 0.0
        %1177 = vmatprep.subr.mxu0 0.0
        %1178 = vmatpush1.msra.mxu0 0.0
        %1179 = vmatprep.subr.mxu0 0.0
        %1180 = vmatpush1.msra.mxu0 0.0
        %1181 = vmatprep.subr.mxu0 0.0
        %1182 = vmatpush1.msra.mxu0 0.0
        %1183 = vmatprep.subr.mxu0 0.0
        %1184 = vmatpush1.msra.mxu0 0.0
        %1185 = vmatprep.subr.mxu0 0.0
        %1186 = vmatpush1.msra.mxu0 0.0
        %1187 = vmatprep.subr.mxu0 0.0
        %1188 = vmatpush1.msra.mxu0 0.0
        %1189 = vmatprep.subr.mxu0 0.0
        %1190 = vmatpush1.msra.mxu0 0.0
        %1191 = vmatprep.subr.mxu0 0.0
        %1192 = vmatpush1.msra.mxu0 0.0
        %1193 = vmatprep.subr.mxu0 0.0
        %1194 = vmatpush1.msra.mxu0 0.0
        %1195 = vmatprep.subr.mxu0 0.0
        %1196 = vmatpush1.msra.mxu0 0.0
        %1197 = vmatprep.subr.mxu0 0.0
        %1198 = vmatpush1.msra.mxu0 0.0
        %1199 = vmatprep.subr.mxu0 0.0
        %1200 = vmatpush1.msra.mxu0 0.0
        %1201 = vmatprep.subr.mxu0 0.0
        %1202 = vmatpush1.msra.mxu0 0.0
        %1203 = vmatprep.subr.mxu0 0.0
        %1204 = vmatpush1.msra.mxu0 0.0
        %1205 = vmatprep.subr.mxu0 0.0
        %1206 = vmatpush1.msra.mxu0 0.0
        %1207 = vmatprep.subr.mxu0 0.0
        %1208 = vmatpush1.msra.mxu0 0.0
        %1209 = vmatprep.subr.mxu0 0.0
        %1210 = vmatpush1.msra.mxu0 0.0
        %1211 = vmatprep.subr.mxu0 0.0
        %1212 = vmatpush1.msra.mxu0 0.0
        %1213 = vmatprep.mubr.f32.mxu0 0.0
        %1214 = vmatmul.mubr.f32.gmra.mrb[0].mxu0 %v1047
        %v1215 = vpop.f32.mrb[0].mxu0
        %v1216 = vadd.f32 0.0, %v1215
        %v1217 = vpop.f32.mrb[0].mxu0
        %1218 = vmatprep.mubr.f32.mxu0 0.0
        %1219 = vmatmul.mubr.f32.gmra.mrb[0].mxu0 %v1049
        %v1220 = vpop.f32.mrb[0].mxu0
        %v1221 = vadd.f32 0.0, %v1220
        %v1222 = vpop.f32.mrb[0].mxu0
        %1223 = vmatprep.mubr.f32.mxu0 0.0
        %1224 = vmatmul.mubr.f32.gmra.mrb[0].mxu0 %v1051
        %v1225 = vpop.f32.mrb[0].mxu0
        %v1226 = vadd.f32 0.0, %v1225
        %v1227 = vpop.f32.mrb[0].mxu0
        %1228 = vmatprep.mubr.f32.mxu0 0.0
        %1229 = vmatmul.mubr.f32.gmra.mrb[0].mxu0 %v1053
        %v1230 = vpop.f32.mrb[0].mxu0
        %v1231 = vadd.f32 0.0, %v1230
        %v1232 = vpop.f32.mrb[0].mxu0
        %1233 = vdwg.mxu0
        %v1234 = vadd.f32 %v1030, %v1216
        %v1235 = vadd.f32 %v1031, %v1221
        %v1236 = vadd.f32 %v1032, %v1226
        %v1237 = vadd.f32 %v1033, %v1231
        %s1238 = scalar_lea.vmem %s1, 256
        %v1239 = vld [vmem:[%s1238] sm:$0xff]
        %v1240 = vld [vmem:[%s1238 + $0x8] sm:$0xff]
        %v1241 = vld [vmem:[%s1238 + $0x10] sm:$0xff]
        %v1242 = vld [vmem:[%s1238 + $0x18] sm:$0xff]
        %vm1243 = vcmask 1043456
        %v1244 = vrot.slane %v438, 4
        %v1245 = vrot.slane %v439, 4
        %v1246 = vsel %vm1243, %v1244, %v1245
        %v1247 = vrot.slane %v440, 4
        %v1248 = vsel %vm1243, %v1245, %v1247
        %v1249 = vrot.slane %v441, 4
        %v1250 = vsel %vm1243, %v1247, %v1249
        %v1251 = vsel %vm468, %v1246, 0
        %v1253 = vsel %vm468, %v1248, 0
        %v1255 = vsel %vm468, %v1250, 0
        %v1257 = vsel %vm468, %v1249, 0
        %1259 = vmatprep.subr.mxu0 0.0
        %1260 = vmatpush1.msra.mxu0 %v1239
        %1261 = vmatprep.subr.mxu0 0.0
        %1262 = vmatpush1.msra.mxu0 %v1240
        %1263 = vmatprep.subr.mxu0 0.0
        %1264 = vmatpush1.msra.mxu0 %v1241
        %1265 = vmatprep.subr.mxu0 0.0
        %1266 = vmatpush1.msra.mxu0 %v1242
        %1267 = vmatprep.subr.mxu0 0.0
        %1268 = vmatpush1.msra.mxu0 0.0
        %1269 = vmatprep.subr.mxu0 0.0
        %1270 = vmatpush1.msra.mxu0 0.0
        %1271 = vmatprep.subr.mxu0 0.0
        %1272 = vmatpush1.msra.mxu0 0.0
        %1273 = vmatprep.subr.mxu0 0.0
        %1274 = vmatpush1.msra.mxu0 0.0
        %1275 = vmatprep.subr.mxu0 0.0
        %1276 = vmatpush1.msra.mxu0 0.0
        %1277 = vmatprep.subr.mxu0 0.0
        %1278 = vmatpush1.msra.mxu0 0.0
        %1279 = vmatprep.subr.mxu0 0.0
        %1280 = vmatpush1.msra.mxu0 0.0
        %1281 = vmatprep.subr.mxu0 0.0
        %1282 = vmatpush1.msra.mxu0 0.0
        %1283 = vmatprep.subr.mxu0 0.0
        %1284 = vmatpush1.msra.mxu0 0.0
        %1285 = vmatprep.subr.mxu0 0.0
        %1286 = vmatpush1.msra.mxu0 0.0
        %1287 = vmatprep.subr.mxu0 0.0
        %1288 = vmatpush1.msra.mxu0 0.0
        %1289 = vmatprep.subr.mxu0 0.0
        %1290 = vmatpush1.msra.mxu0 0.0
        %1291 = vmatprep.subr.mxu0 0.0
        %1292 = vmatpush1.msra.mxu0 0.0
        %1293 = vmatprep.subr.mxu0 0.0
        %1294 = vmatpush1.msra.mxu0 0.0
        %1295 = vmatprep.subr.mxu0 0.0
        %1296 = vmatpush1.msra.mxu0 0.0
        %1297 = vmatprep.subr.mxu0 0.0
        %1298 = vmatpush1.msra.mxu0 0.0
        %1299 = vmatprep.subr.mxu0 0.0
        %1300 = vmatpush1.msra.mxu0 0.0
        %1301 = vmatprep.subr.mxu0 0.0
        %1302 = vmatpush1.msra.mxu0 0.0
        %1303 = vmatprep.subr.mxu0 0.0
        %1304 = vmatpush1.msra.mxu0 0.0
        %1305 = vmatprep.subr.mxu0 0.0
        %1306 = vmatpush1.msra.mxu0 0.0
        %1307 = vmatprep.subr.mxu0 0.0
        %1308 = vmatpush1.msra.mxu0 0.0
        %1309 = vmatprep.subr.mxu0 0.0
        %1310 = vmatpush1.msra.mxu0 0.0
        %1311 = vmatprep.subr.mxu0 0.0
        %1312 = vmatpush1.msra.mxu0 0.0
        %1313 = vmatprep.subr.mxu0 0.0
        %1314 = vmatpush1.msra.mxu0 0.0
        %1315 = vmatprep.subr.mxu0 0.0
        %1316 = vmatpush1.msra.mxu0 0.0
        %1317 = vmatprep.subr.mxu0 0.0
        %1318 = vmatpush1.msra.mxu0 0.0
        %1319 = vmatprep.subr.mxu0 0.0
        %1320 = vmatpush1.msra.mxu0 0.0
        %1321 = vmatprep.subr.mxu0 0.0
        %1322 = vmatpush1.msra.mxu0 0.0
        %1323 = vmatprep.mubr.f32.mxu0 0.0
        %1324 = vmatmul.mubr.f32.gmra.mrb[0].mxu0 %v1251
        %v1325 = vpop.f32.mrb[0].mxu0
        %v1326 = vadd.f32 0.0, %v1325
        %v1327 = vpop.f32.mrb[0].mxu0
        %1328 = vmatprep.mubr.f32.mxu0 0.0
        %1329 = vmatmul.mubr.f32.gmra.mrb[0].mxu0 %v1253
        %v1330 = vpop.f32.mrb[0].mxu0
        %v1331 = vadd.f32 0.0, %v1330
        %v1332 = vpop.f32.mrb[0].mxu0
        %1333 = vmatprep.mubr.f32.mxu0 0.0
        %1334 = vmatmul.mubr.f32.gmra.mrb[0].mxu0 %v1255
        %v1335 = vpop.f32.mrb[0].mxu0
        %v1336 = vadd.f32 0.0, %v1335
        %v1337 = vpop.f32.mrb[0].mxu0
        %1338 = vmatprep.mubr.f32.mxu0 0.0
        %1339 = vmatmul.mubr.f32.gmra.mrb[0].mxu0 %v1257
        %v1340 = vpop.f32.mrb[0].mxu0
        %v1341 = vadd.f32 0.0, %v1340
        %v1342 = vpop.f32.mrb[0].mxu0
        %1343 = vdwg.mxu0
        %v1344 = vadd.f32 %v1140, %v1326
        %v1345 = vadd.f32 %v1141, %v1331
        %v1346 = vadd.f32 %v1142, %v1336
        %v1347 = vadd.f32 %v1143, %v1341
        %s1348 = scalar_lea.vmem %s1, 288
        %v1349 = vld [vmem:[%s1348] sm:$0xff]
        %v1350 = vld [vmem:[%s1348 + $0x8] sm:$0xff]
        %v1351 = vld [vmem:[%s1348 + $0x10] sm:$0xff]
        %v1352 = vld [vmem:[%s1348 + $0x18] sm:$0xff]
        %1353 = vmatprep.subr.mxu0 0.0
        %1354 = vmatpush1.msra.mxu0 %v1349
        %1355 = vmatprep.subr.mxu0 0.0
        %1356 = vmatpush1.msra.mxu0 %v1350
        %1357 = vmatprep.subr.mxu0 0.0
        %1358 = vmatpush1.msra.mxu0 %v1351
        %1359 = vmatprep.subr.mxu0 0.0
        %1360 = vmatpush1.msra.mxu0 %v1352
        %1361 = vmatprep.subr.mxu0 0.0
        %1362 = vmatpush1.msra.mxu0 0.0
        %1363 = vmatprep.subr.mxu0 0.0
        %1364 = vmatpush1.msra.mxu0 0.0
        %1365 = vmatprep.subr.mxu0 0.0
        %1366 = vmatpush1.msra.mxu0 0.0
        %1367 = vmatprep.subr.mxu0 0.0
        %1368 = vmatpush1.msra.mxu0 0.0
        %1369 = vmatprep.subr.mxu0 0.0
        %1370 = vmatpush1.msra.mxu0 0.0
        %1371 = vmatprep.subr.mxu0 0.0
        %1372 = vmatpush1.msra.mxu0 0.0
        %1373 = vmatprep.subr.mxu0 0.0
        %1374 = vmatpush1.msra.mxu0 0.0
        %1375 = vmatprep.subr.mxu0 0.0
        %1376 = vmatpush1.msra.mxu0 0.0
        %1377 = vmatprep.subr.mxu0 0.0
        %1378 = vmatpush1.msra.mxu0 0.0
        %1379 = vmatprep.subr.mxu0 0.0
        %1380 = vmatpush1.msra.mxu0 0.0
        %1381 = vmatprep.subr.mxu0 0.0
        %1382 = vmatpush1.msra.mxu0 0.0
        %1383 = vmatprep.subr.mxu0 0.0
        %1384 = vmatpush1.msra.mxu0 0.0
        %1385 = vmatprep.subr.mxu0 0.0
        %1386 = vmatpush1.msra.mxu0 0.0
        %1387 = vmatprep.subr.mxu0 0.0
        %1388 = vmatpush1.msra.mxu0 0.0
        %1389 = vmatprep.subr.mxu0 0.0
        %1390 = vmatpush1.msra.mxu0 0.0
        %1391 = vmatprep.subr.mxu0 0.0
        %1392 = vmatpush1.msra.mxu0 0.0
        %1393 = vmatprep.subr.mxu0 0.0
        %1394 = vmatpush1.msra.mxu0 0.0
        %1395 = vmatprep.subr.mxu0 0.0
        %1396 = vmatpush1.msra.mxu0 0.0
        %1397 = vmatprep.subr.mxu0 0.0
        %1398 = vmatpush1.msra.mxu0 0.0
        %1399 = vmatprep.subr.mxu0 0.0
        %1400 = vmatpush1.msra.mxu0 0.0
        %1401 = vmatprep.subr.mxu0 0.0
        %1402 = vmatpush1.msra.mxu0 0.0
        %1403 = vmatprep.subr.mxu0 0.0
        %1404 = vmatpush1.msra.mxu0 0.0
        %1405 = vmatprep.subr.mxu0 0.0
        %1406 = vmatpush1.msra.mxu0 0.0
        %1407 = vmatprep.subr.mxu0 0.0
        %1408 = vmatpush1.msra.mxu0 0.0
        %1409 = vmatprep.subr.mxu0 0.0
        %1410 = vmatpush1.msra.mxu0 0.0
        %1411 = vmatprep.subr.mxu0 0.0
        %1412 = vmatpush1.msra.mxu0 0.0
        %1413 = vmatprep.subr.mxu0 0.0
        %1414 = vmatpush1.msra.mxu0 0.0
        %1415 = vmatprep.subr.mxu0 0.0
        %1416 = vmatpush1.msra.mxu0 0.0
        %1417 = vmatprep.mubr.f32.mxu0 0.0
        %1418 = vmatmul.mubr.f32.gmra.mrb[0].mxu0 %v1251
        %v1419 = vpop.f32.mrb[0].mxu0
        %v1420 = vadd.f32 0.0, %v1419
        %v1421 = vpop.f32.mrb[0].mxu0
        %1422 = vmatprep.mubr.f32.mxu0 0.0
        %1423 = vmatmul.mubr.f32.gmra.mrb[0].mxu0 %v1253
        %v1424 = vpop.f32.mrb[0].mxu0
        %v1425 = vadd.f32 0.0, %v1424
        %v1426 = vpop.f32.mrb[0].mxu0
        %1427 = vmatprep.mubr.f32.mxu0 0.0
        %1428 = vmatmul.mubr.f32.gmra.mrb[0].mxu0 %v1255
        %v1429 = vpop.f32.mrb[0].mxu0
        %v1430 = vadd.f32 0.0, %v1429
        %v1431 = vpop.f32.mrb[0].mxu0
        %1432 = vmatprep.mubr.f32.mxu0 0.0
        %1433 = vmatmul.mubr.f32.gmra.mrb[0].mxu0 %v1257
        %v1434 = vpop.f32.mrb[0].mxu0
        %v1435 = vadd.f32 0.0, %v1434
        %v1436 = vpop.f32.mrb[0].mxu0
        %1437 = vdwg.mxu0
        %v1438 = vadd.f32 %v1234, %v1420
        %v1439 = vadd.f32 %v1235, %v1425
        %v1440 = vadd.f32 %v1236, %v1430
        %v1441 = vadd.f32 %v1237, %v1435
        %v1442 = vmax.f32 %v1344, %v1438
        %v1443 = vmax.f32 %v1345, %v1439
        %v1444 = vmax.f32 %v1346, %v1440
        %v1445 = vmax.f32 %v1347, %v1441
        %v1446 = vld [vmem:[%s2] sm:$0x1]
        %v1448 = vlaneseq
        %v1449 = vshrl.u32 %v1448, 7
        %v1450 = vsub.s32 0, %v1449
        %v1451 = vrot.slane %v1446, %v1450
        %v1453 = vadd.f32 %v1442, %v1451
        %v1454 = vadd.f32 %v1443, %v1451
        %v1455 = vadd.f32 %v1444, %v1451
        %v1456 = vadd.f32 %v1445, %v1451
        %v1457 = vmax.f32 %v1453, 0.0
        %v1458 = vmax.f32 %v1454, 0.0
        %v1459 = vmax.f32 %v1455, 0.0
        %v1460 = vmax.f32 %v1456, 0.0
        %v1461 = vld [vmem:[%s3] sm:$0xff]
        %v1462 = vld [vmem:[%s3 + $0x8] sm:$0x3f]
        %vm1463 = vcmask 228352
        %v1465 = vsel %vm1463, %v1461, 0
        %v1468 = vsel %vm1463, %v1462, 0
        %v1471 = vsel %vm1243, %v1460, 0
        %1473 = vmatprep.subr.mxu0 0.0
        %1474 = vmatpush1.msra.mxu0 %v1457
        %1475 = vmatprep.subr.mxu0 0.0
        %1476 = vmatpush1.msra.mxu0 %v1458
        %1477 = vmatprep.subr.mxu0 0.0
        %1478 = vmatpush1.msra.mxu0 %v1459
        %1479 = vmatprep.subr.mxu0 0.0
        %1480 = vmatpush1.msra.mxu0 %v1471
        %1481 = vmatprep.subr.mxu0 0.0
        %1482 = vmatpush1.msra.mxu0 0.0
        %1483 = vmatprep.subr.mxu0 0.0
        %1484 = vmatpush1.msra.mxu0 0.0
        %1485 = vmatprep.subr.mxu0 0.0
        %1486 = vmatpush1.msra.mxu0 0.0
        %1487 = vmatprep.subr.mxu0 0.0
        %1488 = vmatpush1.msra.mxu0 0.0
        %1489 = vmatprep.subr.mxu0 0.0
        %1490 = vmatpush1.msra.mxu0 0.0
        %1491 = vmatprep.subr.mxu0 0.0
        %1492 = vmatpush1.msra.mxu0 0.0
        %1493 = vmatprep.subr.mxu0 0.0
        %1494 = vmatpush1.msra.mxu0 0.0
        %1495 = vmatprep.subr.mxu0 0.0
        %1496 = vmatpush1.msra.mxu0 0.0
        %1497 = vmatprep.subr.mxu0 0.0
        %1498 = vmatpush1.msra.mxu0 0.0
        %1499 = vmatprep.subr.mxu0 0.0
        %1500 = vmatpush1.msra.mxu0 0.0
        %1501 = vmatprep.subr.mxu0 0.0
        %1502 = vmatpush1.msra.mxu0 0.0
        %1503 = vmatprep.subr.mxu0 0.0
        %1504 = vmatpush1.msra.mxu0 0.0
        %1505 = vmatprep.subr.mxu0 0.0
        %1506 = vmatpush1.msra.mxu0 0.0
        %1507 = vmatprep.subr.mxu0 0.0
        %1508 = vmatpush1.msra.mxu0 0.0
        %1509 = vmatprep.subr.mxu0 0.0
        %1510 = vmatpush1.msra.mxu0 0.0
        %1511 = vmatprep.subr.mxu0 0.0
        %1512 = vmatpush1.msra.mxu0 0.0
        %1513 = vmatprep.subr.mxu0 0.0
        %1514 = vmatpush1.msra.mxu0 0.0
        %1515 = vmatprep.subr.mxu0 0.0
        %1516 = vmatpush1.msra.mxu0 0.0
        %1517 = vmatprep.subr.mxu0 0.0
        %1518 = vmatpush1.msra.mxu0 0.0
        %1519 = vmatprep.subr.mxu0 0.0
        %1520 = vmatpush1.msra.mxu0 0.0
        %1521 = vmatprep.subr.mxu0 0.0
        %1522 = vmatpush1.msra.mxu0 0.0
        %1523 = vmatprep.subr.mxu0 0.0
        %1524 = vmatpush1.msra.mxu0 0.0
        %1525 = vmatprep.subr.mxu0 0.0
        %1526 = vmatpush1.msra.mxu0 0.0
        %1527 = vmatprep.subr.mxu0 0.0
        %1528 = vmatpush1.msra.mxu0 0.0
        %1529 = vmatprep.subr.mxu0 0.0
        %1530 = vmatpush1.msra.mxu0 0.0
        %1531 = vmatprep.subr.mxu0 0.0
        %1532 = vmatpush1.msra.mxu0 0.0
        %1533 = vmatprep.subr.mxu0 0.0
        %1534 = vmatpush1.msra.mxu0 0.0
        %1535 = vmatprep.subr.mxu0 0.0
        %1536 = vmatpush1.msra.mxu0 0.0
        %1537 = vmatprep.mubr.f32.mxu0 0.0
        %1538 = vmatmul.mubr.f32.gmra.mrb[0].mxu0 %v1465
        %v1539 = vpop.f32.mrb[0].mxu0
        %v1540 = vadd.f32 0.0, %v1539
        %v1541 = vpop.f32.mrb[0].mxu0
        %1542 = vmatprep.mubr.f32.mxu0 0.0
        %1543 = vmatmul.mubr.f32.gmra.mrb[0].mxu0 %v1468
        %v1544 = vpop.f32.mrb[0].mxu0
        %v1545 = vadd.f32 0.0, %v1544
        %v1546 = vpop.f32.mrb[0].mxu0
        %1547 = vdwg.mxu0
        %s1548 = scalar_lea.vmem %s3, 16
        %v1549 = vld [vmem:[%s1548] sm:$0xff]
        %v1550 = vld [vmem:[%s1548 + $0x8] sm:$0x3f]
        %v1552 = vsel %vm1463, %v1549, 0
        %v1555 = vsel %vm1463, %v1550, 0
        %1557 = vmatprep.subr.mxu0 0.0
        %1558 = vmatpush1.msra.mxu0 %v1457
        %1559 = vmatprep.subr.mxu0 0.0
        %1560 = vmatpush1.msra.mxu0 %v1458
        %1561 = vmatprep.subr.mxu0 0.0
        %1562 = vmatpush1.msra.mxu0 %v1459
        %1563 = vmatprep.subr.mxu0 0.0
        %1564 = vmatpush1.msra.mxu0 %v1471
        %1565 = vmatprep.subr.mxu0 0.0
        %1566 = vmatpush1.msra.mxu0 0.0
        %1567 = vmatprep.subr.mxu0 0.0
        %1568 = vmatpush1.msra.mxu0 0.0
        %1569 = vmatprep.subr.mxu0 0.0
        %1570 = vmatpush1.msra.mxu0 0.0
        %1571 = vmatprep.subr.mxu0 0.0
        %1572 = vmatpush1.msra.mxu0 0.0
        %1573 = vmatprep.subr.mxu0 0.0
        %1574 = vmatpush1.msra.mxu0 0.0
        %1575 = vmatprep.subr.mxu0 0.0
        %1576 = vmatpush1.msra.mxu0 0.0
        %1577 = vmatprep.subr.mxu0 0.0
        %1578 = vmatpush1.msra.mxu0 0.0
        %1579 = vmatprep.subr.mxu0 0.0
        %1580 = vmatpush1.msra.mxu0 0.0
        %1581 = vmatprep.subr.mxu0 0.0
        %1582 = vmatpush1.msra.mxu0 0.0
        %1583 = vmatprep.subr.mxu0 0.0
        %1584 = vmatpush1.msra.mxu0 0.0
        %1585 = vmatprep.subr.mxu0 0.0
        %1586 = vmatpush1.msra.mxu0 0.0
        %1587 = vmatprep.subr.mxu0 0.0
        %1588 = vmatpush1.msra.mxu0 0.0
        %1589 = vmatprep.subr.mxu0 0.0
        %1590 = vmatpush1.msra.mxu0 0.0
        %1591 = vmatprep.subr.mxu0 0.0
        %1592 = vmatpush1.msra.mxu0 0.0
        %1593 = vmatprep.subr.mxu0 0.0
        %1594 = vmatpush1.msra.mxu0 0.0
        %1595 = vmatprep.subr.mxu0 0.0
        %1596 = vmatpush1.msra.mxu0 0.0
        %1597 = vmatprep.subr.mxu0 0.0
        %1598 = vmatpush1.msra.mxu0 0.0
        %1599 = vmatprep.subr.mxu0 0.0
        %1600 = vmatpush1.msra.mxu0 0.0
        %1601 = vmatprep.subr.mxu0 0.0
        %1602 = vmatpush1.msra.mxu0 0.0
        %1603 = vmatprep.subr.mxu0 0.0
        %1604 = vmatpush1.msra.mxu0 0.0
        %1605 = vmatprep.subr.mxu0 0.0
        %1606 = vmatpush1.msra.mxu0 0.0
        %1607 = vmatprep.subr.mxu0 0.0
        %1608 = vmatpush1.msra.mxu0 0.0
        %1609 = vmatprep.subr.mxu0 0.0
        %1610 = vmatpush1.msra.mxu0 0.0
        %1611 = vmatprep.subr.mxu0 0.0
        %1612 = vmatpush1.msra.mxu0 0.0
        %1613 = vmatprep.subr.mxu0 0.0
        %1614 = vmatpush1.msra.mxu0 0.0
        %1615 = vmatprep.subr.mxu0 0.0
        %1616 = vmatpush1.msra.mxu0 0.0
        %1617 = vmatprep.subr.mxu0 0.0
        %1618 = vmatpush1.msra.mxu0 0.0
        %1619 = vmatprep.subr.mxu0 0.0
        %1620 = vmatpush1.msra.mxu0 0.0
        %1621 = vmatprep.mubr.f32.mxu0 0.0
        %1622 = vmatmul.mubr.f32.gmra.mrb[0].mxu0 %v1552
        %v1623 = vpop.f32.mrb[0].mxu0
        %v1624 = vadd.f32 0.0, %v1623
        %v1625 = vpop.f32.mrb[0].mxu0
        %1626 = vmatprep.mubr.f32.mxu0 0.0
        %1627 = vmatmul.mubr.f32.gmra.mrb[0].mxu0 %v1555
        %v1628 = vpop.f32.mrb[0].mxu0
        %v1629 = vadd.f32 0.0, %v1628
        %v1630 = vpop.f32.mrb[0].mxu0
        %1631 = vdwg.mxu0
        %v1632 = vmax.f32 %v1540, %v1624
        %v1633 = vmax.f32 %v1545, %v1629
        %v1634 = vld [vmem:[%s4] sm:$0xff]
        %v1635 = vld [vmem:[%s4 + $0x8] sm:$0xff]
        %v1636 = vld [vmem:[%s4 + $0x10] sm:$0xff]
        %v1637 = vld [vmem:[%s4 + $0x18] sm:$0xff]
        %v1638 = vld [vmem:[%s4 + $0x20] sm:$0xff]
        %v1639 = vld [vmem:[%s4 + $0x28] sm:$0xff]
        %v1640 = vld [vmem:[%s4 + $0x30] sm:$0xff]
        %v1641 = vld [vmem:[%s4 + $0x38] sm:$0xff]
        %v1642 = vld [vmem:[%s4 + $0x40] sm:$0xff]
        %v1643 = vld [vmem:[%s4 + $0x48] sm:$0xff]
        %v1644 = vld [vmem:[%s4 + $0x50] sm:$0xf]
        %s1645 = scalar_lea.vmem %s4, 88
        %v1646 = vld [vmem:[%s1645] sm:$0xff]
        %v1647 = vld [vmem:[%s1645 + $0x8] sm:$0xff]
        %v1648 = vld [vmem:[%s1645 + $0x10] sm:$0xff]
        %v1649 = vld [vmem:[%s1645 + $0x18] sm:$0xff]
        %v1650 = vld [vmem:[%s1645 + $0x20] sm:$0xff]
        %v1651 = vld [vmem:[%s1645 + $0x28] sm:$0xff]
        %v1652 = vld [vmem:[%s1645 + $0x30] sm:$0xff]
        %v1653 = vld [vmem:[%s1645 + $0x38] sm:$0xff]
        %v1654 = vld [vmem:[%s1645 + $0x40] sm:$0xff]
        %v1655 = vld [vmem:[%s1645 + $0x48] sm:$0xff]
        %v1656 = vld [vmem:[%s1645 + $0x50] sm:$0xf]
        %s1657 = scalar_lea.vmem %s4, 176
        %v1658 = vld [vmem:[%s1657] sm:$0xff]
        %v1659 = vld [vmem:[%s1657 + $0x8] sm:$0xff]
        %v1660 = vld [vmem:[%s1657 + $0x10] sm:$0xff]
        %v1661 = vld [vmem:[%s1657 + $0x18] sm:$0xff]
        %v1662 = vld [vmem:[%s1657 + $0x20] sm:$0xff]
        %v1663 = vld [vmem:[%s1657 + $0x28] sm:$0xff]
        %v1664 = vld [vmem:[%s1657 + $0x30] sm:$0xff]
        %v1665 = vld [vmem:[%s1657 + $0x38] sm:$0xff]
        %v1666 = vld [vmem:[%s1657 + $0x40] sm:$0xff]
        %v1667 = vld [vmem:[%s1657 + $0x48] sm:$0xff]
        %v1668 = vld [vmem:[%s1657 + $0x50] sm:$0xf]
        %v1671 = vrot.slane %v1632, 1
        %v1672 = vrot.slane %v1633, 1
        %v1673 = vsel %vm460, %v1671, %v1672
        %vm1674 = vcmask 687104
        %v1675 = vsel %vm1674, %v1673, 0
        %v1677 = vsel %vm1674, %v1672, 0
        %v1680 = vsel %vm1243, %v1668, 0
        %1682 = vmatprep.subr.mxu0 0.0
        %1683 = vmatpush1.msra.mxu0 %v1658
        %1684 = vmatprep.subr.mxu0 0.0
        %1685 = vmatpush1.msra.mxu0 %v1659
        %1686 = vmatprep.subr.mxu0 0.0
        %1687 = vmatpush1.msra.mxu0 %v1660
        %1688 = vmatprep.subr.mxu0 0.0
        %1689 = vmatpush1.msra.mxu0 %v1661
        %1690 = vmatprep.subr.mxu0 0.0
        %1691 = vmatpush1.msra.mxu0 %v1662
        %1692 = vmatprep.subr.mxu0 0.0
        %1693 = vmatpush1.msra.mxu0 %v1663
        %1694 = vmatprep.subr.mxu0 0.0
        %1695 = vmatpush1.msra.mxu0 %v1664
        %1696 = vmatprep.subr.mxu0 0.0
        %1697 = vmatpush1.msra.mxu0 %v1665
        %1698 = vmatprep.subr.mxu0 0.0
        %1699 = vmatpush1.msra.mxu0 %v1666
        %1700 = vmatprep.subr.mxu0 0.0
        %1701 = vmatpush1.msra.mxu0 %v1667
        %1702 = vmatprep.subr.mxu0 0.0
        %1703 = vmatpush1.msra.mxu0 %v1680
        %1704 = vmatprep.subr.mxu0 0.0
        %1705 = vmatpush1.msra.mxu0 0.0
        %1706 = vmatprep.subr.mxu0 0.0
        %1707 = vmatpush1.msra.mxu0 0.0
        %1708 = vmatprep.subr.mxu0 0.0
        %1709 = vmatpush1.msra.mxu0 0.0
        %1710 = vmatprep.subr.mxu0 0.0
        %1711 = vmatpush1.msra.mxu0 0.0
        %1712 = vmatprep.subr.mxu0 0.0
        %1713 = vmatpush1.msra.mxu0 0.0
        %1714 = vmatprep.subr.mxu0 0.0
        %1715 = vmatpush1.msra.mxu0 0.0
        %1716 = vmatprep.subr.mxu0 0.0
        %1717 = vmatpush1.msra.mxu0 0.0
        %1718 = vmatprep.subr.mxu0 0.0
        %1719 = vmatpush1.msra.mxu0 0.0
        %1720 = vmatprep.subr.mxu0 0.0
        %1721 = vmatpush1.msra.mxu0 0.0
        %1722 = vmatprep.subr.mxu0 0.0
        %1723 = vmatpush1.msra.mxu0 0.0
        %1724 = vmatprep.subr.mxu0 0.0
        %1725 = vmatpush1.msra.mxu0 0.0
        %1726 = vmatprep.subr.mxu0 0.0
        %1727 = vmatpush1.msra.mxu0 0.0
        %1728 = vmatprep.subr.mxu0 0.0
        %1729 = vmatpush1.msra.mxu0 0.0
        %1730 = vmatprep.subr.mxu0 0.0
        %1731 = vmatpush1.msra.mxu0 0.0
        %1732 = vmatprep.subr.mxu0 0.0
        %1733 = vmatpush1.msra.mxu0 0.0
        %1734 = vmatprep.subr.mxu0 0.0
        %1735 = vmatpush1.msra.mxu0 0.0
        %1736 = vmatprep.subr.mxu0 0.0
        %1737 = vmatpush1.msra.mxu0 0.0
        %1738 = vmatprep.subr.mxu0 0.0
        %1739 = vmatpush1.msra.mxu0 0.0
        %1740 = vmatprep.subr.mxu0 0.0
        %1741 = vmatpush1.msra.mxu0 0.0
        %1742 = vmatprep.subr.mxu0 0.0
        %1743 = vmatpush1.msra.mxu0 0.0
        %1744 = vmatprep.subr.mxu0 0.0
        %1745 = vmatpush1.msra.mxu0 0.0
        %1746 = vmatprep.mubr.f32.mxu0 0.0
        %1747 = vmatmul.mubr.f32.gmra.mrb[0].mxu0 %v1675
        %v1748 = vpop.f32.mrb[0].mxu0
        %v1749 = vadd.f32 0.0, %v1748
        %v1750 = vpop.f32.mrb[0].mxu0
        %1751 = vmatprep.mubr.f32.mxu0 0.0
        %1752 = vmatmul.mubr.f32.gmra.mrb[0].mxu0 %v1677
        %v1753 = vpop.f32.mrb[0].mxu0
        %v1754 = vadd.f32 0.0, %v1753
        %v1755 = vpop.f32.mrb[0].mxu0
        %1756 = vdwg.mxu0
        %v1757 = vsel %vm1674, %v1632, 0
        %v1759 = vsel %vm1674, %v1633, 0
        %v1762 = vsel %vm1243, %v1644, 0
        %1764 = vmatprep.subr.mxu0 0.0
        %1765 = vmatpush1.msra.mxu0 %v1634
        %1766 = vmatprep.subr.mxu0 0.0
        %1767 = vmatpush1.msra.mxu0 %v1635
        %1768 = vmatprep.subr.mxu0 0.0
        %1769 = vmatpush1.msra.mxu0 %v1636
        %1770 = vmatprep.subr.mxu0 0.0
        %1771 = vmatpush1.msra.mxu0 %v1637
        %1772 = vmatprep.subr.mxu0 0.0
        %1773 = vmatpush1.msra.mxu0 %v1638
        %1774 = vmatprep.subr.mxu0 0.0
        %1775 = vmatpush1.msra.mxu0 %v1639
        %1776 = vmatprep.subr.mxu0 0.0
        %1777 = vmatpush1.msra.mxu0 %v1640
        %1778 = vmatprep.subr.mxu0 0.0
        %1779 = vmatpush1.msra.mxu0 %v1641
        %1780 = vmatprep.subr.mxu0 0.0
        %1781 = vmatpush1.msra.mxu0 %v1642
        %1782 = vmatprep.subr.mxu0 0.0
        %1783 = vmatpush1.msra.mxu0 %v1643
        %1784 = vmatprep.subr.mxu0 0.0
        %1785 = vmatpush1.msra.mxu0 %v1762
        %1786 = vmatprep.subr.mxu0 0.0
        %1787 = vmatpush1.msra.mxu0 0.0
        %1788 = vmatprep.subr.mxu0 0.0
        %1789 = vmatpush1.msra.mxu0 0.0
        %1790 = vmatprep.subr.mxu0 0.0
        %1791 = vmatpush1.msra.mxu0 0.0
        %1792 = vmatprep.subr.mxu0 0.0
        %1793 = vmatpush1.msra.mxu0 0.0
        %1794 = vmatprep.subr.mxu0 0.0
        %1795 = vmatpush1.msra.mxu0 0.0
        %1796 = vmatprep.subr.mxu0 0.0
        %1797 = vmatpush1.msra.mxu0 0.0
        %1798 = vmatprep.subr.mxu0 0.0
        %1799 = vmatpush1.msra.mxu0 0.0
        %1800 = vmatprep.subr.mxu0 0.0
        %1801 = vmatpush1.msra.mxu0 0.0
        %1802 = vmatprep.subr.mxu0 0.0
        %1803 = vmatpush1.msra.mxu0 0.0
        %1804 = vmatprep.subr.mxu0 0.0
        %1805 = vmatpush1.msra.mxu0 0.0
        %1806 = vmatprep.subr.mxu0 0.0
        %1807 = vmatpush1.msra.mxu0 0.0
        %1808 = vmatprep.subr.mxu0 0.0
        %1809 = vmatpush1.msra.mxu0 0.0
        %1810 = vmatprep.subr.mxu0 0.0
        %1811 = vmatpush1.msra.mxu0 0.0
        %1812 = vmatprep.subr.mxu0 0.0
        %1813 = vmatpush1.msra.mxu0 0.0
        %1814 = vmatprep.subr.mxu0 0.0
        %1815 = vmatpush1.msra.mxu0 0.0
        %1816 = vmatprep.subr.mxu0 0.0
        %1817 = vmatpush1.msra.mxu0 0.0
        %1818 = vmatprep.subr.mxu0 0.0
        %1819 = vmatpush1.msra.mxu0 0.0
        %1820 = vmatprep.subr.mxu0 0.0
        %1821 = vmatpush1.msra.mxu0 0.0
        %1822 = vmatprep.subr.mxu0 0.0
        %1823 = vmatpush1.msra.mxu0 0.0
        %1824 = vmatprep.subr.mxu0 0.0
        %1825 = vmatpush1.msra.mxu0 0.0
        %1826 = vmatprep.subr.mxu0 0.0
        %1827 = vmatpush1.msra.mxu0 0.0
        %1828 = vmatprep.mubr.f32.mxu0 0.0
        %1829 = vmatmul.mubr.f32.gmra.mrb[0].mxu0 %v1757
        %v1830 = vpop.f32.mrb[0].mxu0
        %v1831 = vadd.f32 %v1749, %v1830
        %v1832 = vpop.f32.mrb[0].mxu0
        %1833 = vmatprep.mubr.f32.mxu0 0.0
        %1834 = vmatmul.mubr.f32.gmra.mrb[0].mxu0 %v1759
        %v1835 = vpop.f32.mrb[0].mxu0
        %v1836 = vadd.f32 %v1754, %v1835
        %v1837 = vpop.f32.mrb[0].mxu0
        %1838 = vdwg.mxu0
        %s1839 = scalar_lea.vmem %s4, 264
        %v1840 = vld [vmem:[%s1839] sm:$0xff]
        %v1841 = vld [vmem:[%s1839 + $0x8] sm:$0xff]
        %v1842 = vld [vmem:[%s1839 + $0x10] sm:$0xff]
        %v1843 = vld [vmem:[%s1839 + $0x18] sm:$0xff]
        %v1844 = vld [vmem:[%s1839 + $0x20] sm:$0xff]
        %v1845 = vld [vmem:[%s1839 + $0x28] sm:$0xff]
        %v1846 = vld [vmem:[%s1839 + $0x30] sm:$0xff]
        %v1847 = vld [vmem:[%s1839 + $0x38] sm:$0xff]
        %v1848 = vld [vmem:[%s1839 + $0x40] sm:$0xff]
        %v1849 = vld [vmem:[%s1839 + $0x48] sm:$0xff]
        %v1850 = vld [vmem:[%s1839 + $0x50] sm:$0xf]
        %v1852 = vsel %vm1243, %v1850, 0
        %1854 = vmatprep.subr.mxu0 0.0
        %1855 = vmatpush1.msra.mxu0 %v1840
        %1856 = vmatprep.subr.mxu0 0.0
        %1857 = vmatpush1.msra.mxu0 %v1841
        %1858 = vmatprep.subr.mxu0 0.0
        %1859 = vmatpush1.msra.mxu0 %v1842
        %1860 = vmatprep.subr.mxu0 0.0
        %1861 = vmatpush1.msra.mxu0 %v1843
        %1862 = vmatprep.subr.mxu0 0.0
        %1863 = vmatpush1.msra.mxu0 %v1844
        %1864 = vmatprep.subr.mxu0 0.0
        %1865 = vmatpush1.msra.mxu0 %v1845
        %1866 = vmatprep.subr.mxu0 0.0
        %1867 = vmatpush1.msra.mxu0 %v1846
        %1868 = vmatprep.subr.mxu0 0.0
        %1869 = vmatpush1.msra.mxu0 %v1847
        %1870 = vmatprep.subr.mxu0 0.0
        %1871 = vmatpush1.msra.mxu0 %v1848
        %1872 = vmatprep.subr.mxu0 0.0
        %1873 = vmatpush1.msra.mxu0 %v1849
        %1874 = vmatprep.subr.mxu0 0.0
        %1875 = vmatpush1.msra.mxu0 %v1852
        %1876 = vmatprep.subr.mxu0 0.0
        %1877 = vmatpush1.msra.mxu0 0.0
        %1878 = vmatprep.subr.mxu0 0.0
        %1879 = vmatpush1.msra.mxu0 0.0
        %1880 = vmatprep.subr.mxu0 0.0
        %1881 = vmatpush1.msra.mxu0 0.0
        %1882 = vmatprep.subr.mxu0 0.0
        %1883 = vmatpush1.msra.mxu0 0.0
        %1884 = vmatprep.subr.mxu0 0.0
        %1885 = vmatpush1.msra.mxu0 0.0
        %1886 = vmatprep.subr.mxu0 0.0
        %1887 = vmatpush1.msra.mxu0 0.0
        %1888 = vmatprep.subr.mxu0 0.0
        %1889 = vmatpush1.msra.mxu0 0.0
        %1890 = vmatprep.subr.mxu0 0.0
        %1891 = vmatpush1.msra.mxu0 0.0
        %1892 = vmatprep.subr.mxu0 0.0
        %1893 = vmatpush1.msra.mxu0 0.0
        %1894 = vmatprep.subr.mxu0 0.0
        %1895 = vmatpush1.msra.mxu0 0.0
        %1896 = vmatprep.subr.mxu0 0.0
        %1897 = vmatpush1.msra.mxu0 0.0
        %1898 = vmatprep.subr.mxu0 0.0
        %1899 = vmatpush1.msra.mxu0 0.0
        %1900 = vmatprep.subr.mxu0 0.0
        %1901 = vmatpush1.msra.mxu0 0.0
        %1902 = vmatprep.subr.mxu0 0.0
        %1903 = vmatpush1.msra.mxu0 0.0
        %1904 = vmatprep.subr.mxu0 0.0
        %1905 = vmatpush1.msra.mxu0 0.0
        %1906 = vmatprep.subr.mxu0 0.0
        %1907 = vmatpush1.msra.mxu0 0.0
        %1908 = vmatprep.subr.mxu0 0.0
        %1909 = vmatpush1.msra.mxu0 0.0
        %1910 = vmatprep.subr.mxu0 0.0
        %1911 = vmatpush1.msra.mxu0 0.0
        %1912 = vmatprep.subr.mxu0 0.0
        %1913 = vmatpush1.msra.mxu0 0.0
        %1914 = vmatprep.subr.mxu0 0.0
        %1915 = vmatpush1.msra.mxu0 0.0
        %1916 = vmatprep.subr.mxu0 0.0
        %1917 = vmatpush1.msra.mxu0 0.0
        %1918 = vmatprep.mubr.f32.mxu0 0.0
        %1919 = vmatmul.mubr.f32.gmra.mrb[0].mxu0 %v1675
        %v1920 = vpop.f32.mrb[0].mxu0
        %v1921 = vadd.f32 0.0, %v1920
        %v1922 = vpop.f32.mrb[0].mxu0
        %1923 = vmatprep.mubr.f32.mxu0 0.0
        %1924 = vmatmul.mubr.f32.gmra.mrb[0].mxu0 %v1677
        %v1925 = vpop.f32.mrb[0].mxu0
        %v1926 = vadd.f32 0.0, %v1925
        %v1927 = vpop.f32.mrb[0].mxu0
        %1928 = vdwg.mxu0
        %v1930 = vsel %vm1243, %v1656, 0
        %1932 = vmatprep.subr.mxu0 0.0
        %1933 = vmatpush1.msra.mxu0 %v1646
        %1934 = vmatprep.subr.mxu0 0.0
        %1935 = vmatpush1.msra.mxu0 %v1647
        %1936 = vmatprep.subr.mxu0 0.0
        %1937 = vmatpush1.msra.mxu0 %v1648
        %1938 = vmatprep.subr.mxu0 0.0
        %1939 = vmatpush1.msra.mxu0 %v1649
        %1940 = vmatprep.subr.mxu0 0.0
        %1941 = vmatpush1.msra.mxu0 %v1650
        %1942 = vmatprep.subr.mxu0 0.0
        %1943 = vmatpush1.msra.mxu0 %v1651
        %1944 = vmatprep.subr.mxu0 0.0
        %1945 = vmatpush1.msra.mxu0 %v1652
        %1946 = vmatprep.subr.mxu0 0.0
        %1947 = vmatpush1.msra.mxu0 %v1653
        %1948 = vmatprep.subr.mxu0 0.0
        %1949 = vmatpush1.msra.mxu0 %v1654
        %1950 = vmatprep.subr.mxu0 0.0
        %1951 = vmatpush1.msra.mxu0 %v1655
        %1952 = vmatprep.subr.mxu0 0.0
        %1953 = vmatpush1.msra.mxu0 %v1930
        %1954 = vmatprep.subr.mxu0 0.0
        %1955 = vmatpush1.msra.mxu0 0.0
        %1956 = vmatprep.subr.mxu0 0.0
        %1957 = vmatpush1.msra.mxu0 0.0
        %1958 = vmatprep.subr.mxu0 0.0
        %1959 = vmatpush1.msra.mxu0 0.0
        %1960 = vmatprep.subr.mxu0 0.0
        %1961 = vmatpush1.msra.mxu0 0.0
        %1962 = vmatprep.subr.mxu0 0.0
        %1963 = vmatpush1.msra.mxu0 0.0
        %1964 = vmatprep.subr.mxu0 0.0
        %1965 = vmatpush1.msra.mxu0 0.0
        %1966 = vmatprep.subr.mxu0 0.0
        %1967 = vmatpush1.msra.mxu0 0.0
        %1968 = vmatprep.subr.mxu0 0.0
        %1969 = vmatpush1.msra.mxu0 0.0
        %1970 = vmatprep.subr.mxu0 0.0
        %1971 = vmatpush1.msra.mxu0 0.0
        %1972 = vmatprep.subr.mxu0 0.0
        %1973 = vmatpush1.msra.mxu0 0.0
        %1974 = vmatprep.subr.mxu0 0.0
        %1975 = vmatpush1.msra.mxu0 0.0
        %1976 = vmatprep.subr.mxu0 0.0
        %1977 = vmatpush1.msra.mxu0 0.0
        %1978 = vmatprep.subr.mxu0 0.0
        %1979 = vmatpush1.msra.mxu0 0.0
        %1980 = vmatprep.subr.mxu0 0.0
        %1981 = vmatpush1.msra.mxu0 0.0
        %1982 = vmatprep.subr.mxu0 0.0
        %1983 = vmatpush1.msra.mxu0 0.0
        %1984 = vmatprep.subr.mxu0 0.0
        %1985 = vmatpush1.msra.mxu0 0.0
        %1986 = vmatprep.subr.mxu0 0.0
        %1987 = vmatpush1.msra.mxu0 0.0
        %1988 = vmatprep.subr.mxu0 0.0
        %1989 = vmatpush1.msra.mxu0 0.0
        %1990 = vmatprep.subr.mxu0 0.0
        %1991 = vmatpush1.msra.mxu0 0.0
        %1992 = vmatprep.subr.mxu0 0.0
        %1993 = vmatpush1.msra.mxu0 0.0
        %1994 = vmatprep.subr.mxu0 0.0
        %1995 = vmatpush1.msra.mxu0 0.0
        %1996 = vmatprep.mubr.f32.mxu0 0.0
        %1997 = vmatmul.mubr.f32.gmra.mrb[0].mxu0 %v1757
        %v1998 = vpop.f32.mrb[0].mxu0
        %v1999 = vadd.f32 %v1921, %v1998
        %v2000 = vpop.f32.mrb[0].mxu0
        %2001 = vmatprep.mubr.f32.mxu0 0.0
        %2002 = vmatmul.mubr.f32.gmra.mrb[0].mxu0 %v1759
        %v2003 = vpop.f32.mrb[0].mxu0
        %v2004 = vadd.f32 %v1926, %v2003
        %v2005 = vpop.f32.mrb[0].mxu0
        %2006 = vdwg.mxu0
        %s2007 = scalar_lea.vmem %s4, 352
        %v2008 = vld [vmem:[%s2007] sm:$0xff]
        %v2009 = vld [vmem:[%s2007 + $0x8] sm:$0xff]
        %v2010 = vld [vmem:[%s2007 + $0x10] sm:$0xff]
        %v2011 = vld [vmem:[%s2007 + $0x18] sm:$0xff]
        %v2012 = vld [vmem:[%s2007 + $0x20] sm:$0xff]
        %v2013 = vld [vmem:[%s2007 + $0x28] sm:$0xff]
        %v2014 = vld [vmem:[%s2007 + $0x30] sm:$0xff]
        %v2015 = vld [vmem:[%s2007 + $0x38] sm:$0xff]
        %v2016 = vld [vmem:[%s2007 + $0x40] sm:$0xff]
        %v2017 = vld [vmem:[%s2007 + $0x48] sm:$0xff]
        %v2018 = vld [vmem:[%s2007 + $0x50] sm:$0xf]
        %v2019 = vrot.slane %v1632, 2
        %v2020 = vrot.slane %v1633, 2
        %v2021 = vsel %vm835, %v2019, %v2020
        %v2022 = vsel %vm1674, %v2021, 0
        %v2024 = vsel %vm1674, %v2020, 0
        %v2027 = vsel %vm1243, %v2018, 0
        %2029 = vmatprep.subr.mxu0 0.0
        %2030 = vmatpush1.msra.mxu0 %v2008
        %2031 = vmatprep.subr.mxu0 0.0
        %2032 = vmatpush1.msra.mxu0 %v2009
        %2033 = vmatprep.subr.mxu0 0.0
        %2034 = vmatpush1.msra.mxu0 %v2010
        %2035 = vmatprep.subr.mxu0 0.0
        %2036 = vmatpush1.msra.mxu0 %v2011
        %2037 = vmatprep.subr.mxu0 0.0
        %2038 = vmatpush1.msra.mxu0 %v2012
        %2039 = vmatprep.subr.mxu0 0.0
        %2040 = vmatpush1.msra.mxu0 %v2013
        %2041 = vmatprep.subr.mxu0 0.0
        %2042 = vmatpush1.msra.mxu0 %v2014
        %2043 = vmatprep.subr.mxu0 0.0
        %2044 = vmatpush1.msra.mxu0 %v2015
        %2045 = vmatprep.subr.mxu0 0.0
        %2046 = vmatpush1.msra.mxu0 %v2016
        %2047 = vmatprep.subr.mxu0 0.0
        %2048 = vmatpush1.msra.mxu0 %v2017
        %2049 = vmatprep.subr.mxu0 0.0
        %2050 = vmatpush1.msra.mxu0 %v2027
        %2051 = vmatprep.subr.mxu0 0.0
        %2052 = vmatpush1.msra.mxu0 0.0
        %2053 = vmatprep.subr.mxu0 0.0
        %2054 = vmatpush1.msra.mxu0 0.0
        %2055 = vmatprep.subr.mxu0 0.0
        %2056 = vmatpush1.msra.mxu0 0.0
        %2057 = vmatprep.subr.mxu0 0.0
        %2058 = vmatpush1.msra.mxu0 0.0
        %2059 = vmatprep.subr.mxu0 0.0
        %2060 = vmatpush1.msra.mxu0 0.0
        %2061 = vmatprep.subr.mxu0 0.0
        %2062 = vmatpush1.msra.mxu0 0.0
        %2063 = vmatprep.subr.mxu0 0.0
        %2064 = vmatpush1.msra.mxu0 0.0
        %2065 = vmatprep.subr.mxu0 0.0
        %2066 = vmatpush1.msra.mxu0 0.0
        %2067 = vmatprep.subr.mxu0 0.0
        %2068 = vmatpush1.msra.mxu0 0.0
        %2069 = vmatprep.subr.mxu0 0.0
        %2070 = vmatpush1.msra.mxu0 0.0
        %2071 = vmatprep.subr.mxu0 0.0
        %2072 = vmatpush1.msra.mxu0 0.0
        %2073 = vmatprep.subr.mxu0 0.0
        %2074 = vmatpush1.msra.mxu0 0.0
        %2075 = vmatprep.subr.mxu0 0.0
        %2076 = vmatpush1.msra.mxu0 0.0
        %2077 = vmatprep.subr.mxu0 0.0
        %2078 = vmatpush1.msra.mxu0 0.0
        %2079 = vmatprep.subr.mxu0 0.0
        %2080 = vmatpush1.msra.mxu0 0.0
        %2081 = vmatprep.subr.mxu0 0.0
        %2082 = vmatpush1.msra.mxu0 0.0
        %2083 = vmatprep.subr.mxu0 0.0
        %2084 = vmatpush1.msra.mxu0 0.0
        %2085 = vmatprep.subr.mxu0 0.0
        %2086 = vmatpush1.msra.mxu0 0.0
        %2087 = vmatprep.subr.mxu0 0.0
        %2088 = vmatpush1.msra.mxu0 0.0
        %2089 = vmatprep.subr.mxu0 0.0
        %2090 = vmatpush1.msra.mxu0 0.0
        %2091 = vmatprep.subr.mxu0 0.0
        %2092 = vmatpush1.msra.mxu0 0.0
        %2093 = vmatprep.mubr.f32.mxu0 0.0
        %2094 = vmatmul.mubr.f32.gmra.mrb[0].mxu0 %v2022
        %v2095 = vpop.f32.mrb[0].mxu0
        %v2096 = vadd.f32 0.0, %v2095
        %v2097 = vpop.f32.mrb[0].mxu0
        %2098 = vmatprep.mubr.f32.mxu0 0.0
        %2099 = vmatmul.mubr.f32.gmra.mrb[0].mxu0 %v2024
        %v2100 = vpop.f32.mrb[0].mxu0
        %v2101 = vadd.f32 0.0, %v2100
        %v2102 = vpop.f32.mrb[0].mxu0
        %2103 = vdwg.mxu0
        %v2104 = vadd.f32 %v1831, %v2096
        %v2105 = vadd.f32 %v1836, %v2101
        %s2106 = scalar_lea.vmem %s4, 440
        %v2107 = vld [vmem:[%s2106] sm:$0xff]
        %v2108 = vld [vmem:[%s2106 + $0x8] sm:$0xff]
        %v2109 = vld [vmem:[%s2106 + $0x10] sm:$0xff]
        %v2110 = vld [vmem:[%s2106 + $0x18] sm:$0xff]
        %v2111 = vld [vmem:[%s2106 + $0x20] sm:$0xff]
        %v2112 = vld [vmem:[%s2106 + $0x28] sm:$0xff]
        %v2113 = vld [vmem:[%s2106 + $0x30] sm:$0xff]
        %v2114 = vld [vmem:[%s2106 + $0x38] sm:$0xff]
        %v2115 = vld [vmem:[%s2106 + $0x40] sm:$0xff]
        %v2116 = vld [vmem:[%s2106 + $0x48] sm:$0xff]
        %v2117 = vld [vmem:[%s2106 + $0x50] sm:$0xf]
        %v2119 = vsel %vm1243, %v2117, 0
        %2121 = vmatprep.subr.mxu0 0.0
        %2122 = vmatpush1.msra.mxu0 %v2107
        %2123 = vmatprep.subr.mxu0 0.0
        %2124 = vmatpush1.msra.mxu0 %v2108
        %2125 = vmatprep.subr.mxu0 0.0
        %2126 = vmatpush1.msra.mxu0 %v2109
        %2127 = vmatprep.subr.mxu0 0.0
        %2128 = vmatpush1.msra.mxu0 %v2110
        %2129 = vmatprep.subr.mxu0 0.0
        %2130 = vmatpush1.msra.mxu0 %v2111
        %2131 = vmatprep.subr.mxu0 0.0
        %2132 = vmatpush1.msra.mxu0 %v2112
        %2133 = vmatprep.subr.mxu0 0.0
        %2134 = vmatpush1.msra.mxu0 %v2113
        %2135 = vmatprep.subr.mxu0 0.0
        %2136 = vmatpush1.msra.mxu0 %v2114
        %2137 = vmatprep.subr.mxu0 0.0
        %2138 = vmatpush1.msra.mxu0 %v2115
        %2139 = vmatprep.subr.mxu0 0.0
        %2140 = vmatpush1.msra.mxu0 %v2116
        %2141 = vmatprep.subr.mxu0 0.0
        %2142 = vmatpush1.msra.mxu0 %v2119
        %2143 = vmatprep.subr.mxu0 0.0
        %2144 = vmatpush1.msra.mxu0 0.0
        %2145 = vmatprep.subr.mxu0 0.0
        %2146 = vmatpush1.msra.mxu0 0.0
        %2147 = vmatprep.subr.mxu0 0.0
        %2148 = vmatpush1.msra.mxu0 0.0
        %2149 = vmatprep.subr.mxu0 0.0
        %2150 = vmatpush1.msra.mxu0 0.0
        %2151 = vmatprep.subr.mxu0 0.0
        %2152 = vmatpush1.msra.mxu0 0.0
        %2153 = vmatprep.subr.mxu0 0.0
        %2154 = vmatpush1.msra.mxu0 0.0
        %2155 = vmatprep.subr.mxu0 0.0
        %2156 = vmatpush1.msra.mxu0 0.0
        %2157 = vmatprep.subr.mxu0 0.0
        %2158 = vmatpush1.msra.mxu0 0.0
        %2159 = vmatprep.subr.mxu0 0.0
        %2160 = vmatpush1.msra.mxu0 0.0
        %2161 = vmatprep.subr.mxu0 0.0
        %2162 = vmatpush1.msra.mxu0 0.0
        %2163 = vmatprep.subr.mxu0 0.0
        %2164 = vmatpush1.msra.mxu0 0.0
        %2165 = vmatprep.subr.mxu0 0.0
        %2166 = vmatpush1.msra.mxu0 0.0
        %2167 = vmatprep.subr.mxu0 0.0
        %2168 = vmatpush1.msra.mxu0 0.0
        %2169 = vmatprep.subr.mxu0 0.0
        %2170 = vmatpush1.msra.mxu0 0.0
        %2171 = vmatprep.subr.mxu0 0.0
        %2172 = vmatpush1.msra.mxu0 0.0
        %2173 = vmatprep.subr.mxu0 0.0
        %2174 = vmatpush1.msra.mxu0 0.0
        %2175 = vmatprep.subr.mxu0 0.0
        %2176 = vmatpush1.msra.mxu0 0.0
        %2177 = vmatprep.subr.mxu0 0.0
        %2178 = vmatpush1.msra.mxu0 0.0
        %2179 = vmatprep.subr.mxu0 0.0
        %2180 = vmatpush1.msra.mxu0 0.0
        %2181 = vmatprep.subr.mxu0 0.0
        %2182 = vmatpush1.msra.mxu0 0.0
        %2183 = vmatprep.subr.mxu0 0.0
        %2184 = vmatpush1.msra.mxu0 0.0
        %2185 = vmatprep.mubr.f32.mxu0 0.0
        %2186 = vmatmul.mubr.f32.gmra.mrb[0].mxu0 %v2022
        %v2187 = vpop.f32.mrb[0].mxu0
        %v2188 = vadd.f32 0.0, %v2187
        %v2189 = vpop.f32.mrb[0].mxu0
        %2190 = vmatprep.mubr.f32.mxu0 0.0
        %2191 = vmatmul.mubr.f32.gmra.mrb[0].mxu0 %v2024
        %v2192 = vpop.f32.mrb[0].mxu0
        %v2193 = vadd.f32 0.0, %v2192
        %v2194 = vpop.f32.mrb[0].mxu0
        %2195 = vdwg.mxu0
        %v2196 = vadd.f32 %v1999, %v2188
        %v2197 = vadd.f32 %v2004, %v2193
        %s2198 = scalar_lea.vmem %s4, 528
        %v2199 = vld [vmem:[%s2198] sm:$0xff]
        %v2200 = vld [vmem:[%s2198 + $0x8] sm:$0xff]
        %v2201 = vld [vmem:[%s2198 + $0x10] sm:$0xff]
        %v2202 = vld [vmem:[%s2198 + $0x18] sm:$0xff]
        %v2203 = vld [vmem:[%s2198 + $0x20] sm:$0xff]
        %v2204 = vld [vmem:[%s2198 + $0x28] sm:$0xff]
        %v2205 = vld [vmem:[%s2198 + $0x30] sm:$0xff]
        %v2206 = vld [vmem:[%s2198 + $0x38] sm:$0xff]
        %v2207 = vld [vmem:[%s2198 + $0x40] sm:$0xff]
        %v2208 = vld [vmem:[%s2198 + $0x48] sm:$0xff]
        %v2209 = vld [vmem:[%s2198 + $0x50] sm:$0xf]
        %v2210 = vrot.slane %v1632, 3
        %v2211 = vrot.slane %v1633, 3
        %v2212 = vsel %vm1039, %v2210, %v2211
        %v2213 = vsel %vm1674, %v2212, 0
        %v2215 = vsel %vm1674, %v2211, 0
        %v2218 = vsel %vm1243, %v2209, 0
        %2220 = vmatprep.subr.mxu0 0.0
        %2221 = vmatpush1.msra.mxu0 %v2199
        %2222 = vmatprep.subr.mxu0 0.0
        %2223 = vmatpush1.msra.mxu0 %v2200
        %2224 = vmatprep.subr.mxu0 0.0
        %2225 = vmatpush1.msra.mxu0 %v2201
        %2226 = vmatprep.subr.mxu0 0.0
        %2227 = vmatpush1.msra.mxu0 %v2202
        %2228 = vmatprep.subr.mxu0 0.0
        %2229 = vmatpush1.msra.mxu0 %v2203
        %2230 = vmatprep.subr.mxu0 0.0
        %2231 = vmatpush1.msra.mxu0 %v2204
        %2232 = vmatprep.subr.mxu0 0.0
        %2233 = vmatpush1.msra.mxu0 %v2205
        %2234 = vmatprep.subr.mxu0 0.0
        %2235 = vmatpush1.msra.mxu0 %v2206
        %2236 = vmatprep.subr.mxu0 0.0
        %2237 = vmatpush1.msra.mxu0 %v2207
        %2238 = vmatprep.subr.mxu0 0.0
        %2239 = vmatpush1.msra.mxu0 %v2208
        %2240 = vmatprep.subr.mxu0 0.0
        %2241 = vmatpush1.msra.mxu0 %v2218
        %2242 = vmatprep.subr.mxu0 0.0
        %2243 = vmatpush1.msra.mxu0 0.0
        %2244 = vmatprep.subr.mxu0 0.0
        %2245 = vmatpush1.msra.mxu0 0.0
        %2246 = vmatprep.subr.mxu0 0.0
        %2247 = vmatpush1.msra.mxu0 0.0
        %2248 = vmatprep.subr.mxu0 0.0
        %2249 = vmatpush1.msra.mxu0 0.0
        %2250 = vmatprep.subr.mxu0 0.0
        %2251 = vmatpush1.msra.mxu0 0.0
        %2252 = vmatprep.subr.mxu0 0.0
        %2253 = vmatpush1.msra.mxu0 0.0
        %2254 = vmatprep.subr.mxu0 0.0
        %2255 = vmatpush1.msra.mxu0 0.0
        %2256 = vmatprep.subr.mxu0 0.0
        %2257 = vmatpush1.msra.mxu0 0.0
        %2258 = vmatprep.subr.mxu0 0.0
        %2259 = vmatpush1.msra.mxu0 0.0
        %2260 = vmatprep.subr.mxu0 0.0
        %2261 = vmatpush1.msra.mxu0 0.0
        %2262 = vmatprep.subr.mxu0 0.0
        %2263 = vmatpush1.msra.mxu0 0.0
        %2264 = vmatprep.subr.mxu0 0.0
        %2265 = vmatpush1.msra.mxu0 0.0
        %2266 = vmatprep.subr.mxu0 0.0
        %2267 = vmatpush1.msra.mxu0 0.0
        %2268 = vmatprep.subr.mxu0 0.0
        %2269 = vmatpush1.msra.mxu0 0.0
        %2270 = vmatprep.subr.mxu0 0.0
        %2271 = vmatpush1.msra.mxu0 0.0
        %2272 = vmatprep.subr.mxu0 0.0
        %2273 = vmatpush1.msra.mxu0 0.0
        %2274 = vmatprep.subr.mxu0 0.0
        %2275 = vmatpush1.msra.mxu0 0.0
        %2276 = vmatprep.subr.mxu0 0.0
        %2277 = vmatpush1.msra.mxu0 0.0
        %2278 = vmatprep.subr.mxu0 0.0
        %2279 = vmatpush1.msra.mxu0 0.0
        %2280 = vmatprep.subr.mxu0 0.0
        %2281 = vmatpush1.msra.mxu0 0.0
        %2282 = vmatprep.subr.mxu0 0.0
        %2283 = vmatpush1.msra.mxu0 0.0
        %2284 = vmatprep.mubr.f32.mxu0 0.0
        %2285 = vmatmul.mubr.f32.gmra.mrb[0].mxu0 %v2213
        %v2286 = vpop.f32.mrb[0].mxu0
        %v2287 = vadd.f32 0.0, %v2286
        %v2288 = vpop.f32.mrb[0].mxu0
        %2289 = vmatprep.mubr.f32.mxu0 0.0
        %2290 = vmatmul.mubr.f32.gmra.mrb[0].mxu0 %v2215
        %v2291 = vpop.f32.mrb[0].mxu0
        %v2292 = vadd.f32 0.0, %v2291
        %v2293 = vpop.f32.mrb[0].mxu0
        %2294 = vdwg.mxu0
        %v2295 = vadd.f32 %v2104, %v2287
        %v2296 = vadd.f32 %v2105, %v2292
        %s2297 = scalar_lea.vmem %s4, 616
        %v2298 = vld [vmem:[%s2297] sm:$0xff]
        %v2299 = vld [vmem:[%s2297 + $0x8] sm:$0xff]
        %v2300 = vld [vmem:[%s2297 + $0x10] sm:$0xff]
        %v2301 = vld [vmem:[%s2297 + $0x18] sm:$0xff]
        %v2302 = vld [vmem:[%s2297 + $0x20] sm:$0xff]
        %v2303 = vld [vmem:[%s2297 + $0x28] sm:$0xff]
        %v2304 = vld [vmem:[%s2297 + $0x30] sm:$0xff]
        %v2305 = vld [vmem:[%s2297 + $0x38] sm:$0xff]
        %v2306 = vld [vmem:[%s2297 + $0x40] sm:$0xff]
        %v2307 = vld [vmem:[%s2297 + $0x48] sm:$0xff]
        %v2308 = vld [vmem:[%s2297 + $0x50] sm:$0xf]
        %v2310 = vsel %vm1243, %v2308, 0
        %2312 = vmatprep.subr.mxu0 0.0
        %2313 = vmatpush1.msra.mxu0 %v2298
        %2314 = vmatprep.subr.mxu0 0.0
        %2315 = vmatpush1.msra.mxu0 %v2299
        %2316 = vmatprep.subr.mxu0 0.0
        %2317 = vmatpush1.msra.mxu0 %v2300
        %2318 = vmatprep.subr.mxu0 0.0
        %2319 = vmatpush1.msra.mxu0 %v2301
        %2320 = vmatprep.subr.mxu0 0.0
        %2321 = vmatpush1.msra.mxu0 %v2302
        %2322 = vmatprep.subr.mxu0 0.0
        %2323 = vmatpush1.msra.mxu0 %v2303
        %2324 = vmatprep.subr.mxu0 0.0
        %2325 = vmatpush1.msra.mxu0 %v2304
        %2326 = vmatprep.subr.mxu0 0.0
        %2327 = vmatpush1.msra.mxu0 %v2305
        %2328 = vmatprep.subr.mxu0 0.0
        %2329 = vmatpush1.msra.mxu0 %v2306
        %2330 = vmatprep.subr.mxu0 0.0
        %2331 = vmatpush1.msra.mxu0 %v2307
        %2332 = vmatprep.subr.mxu0 0.0
        %2333 = vmatpush1.msra.mxu0 %v2310
        %2334 = vmatprep.subr.mxu0 0.0
        %2335 = vmatpush1.msra.mxu0 0.0
        %2336 = vmatprep.subr.mxu0 0.0
        %2337 = vmatpush1.msra.mxu0 0.0
        %2338 = vmatprep.subr.mxu0 0.0
        %2339 = vmatpush1.msra.mxu0 0.0
        %2340 = vmatprep.subr.mxu0 0.0
        %2341 = vmatpush1.msra.mxu0 0.0
        %2342 = vmatprep.subr.mxu0 0.0
        %2343 = vmatpush1.msra.mxu0 0.0
        %2344 = vmatprep.subr.mxu0 0.0
        %2345 = vmatpush1.msra.mxu0 0.0
        %2346 = vmatprep.subr.mxu0 0.0
        %2347 = vmatpush1.msra.mxu0 0.0
        %2348 = vmatprep.subr.mxu0 0.0
        %2349 = vmatpush1.msra.mxu0 0.0
        %2350 = vmatprep.subr.mxu0 0.0
        %2351 = vmatpush1.msra.mxu0 0.0
        %2352 = vmatprep.subr.mxu0 0.0
        %2353 = vmatpush1.msra.mxu0 0.0
        %2354 = vmatprep.subr.mxu0 0.0
        %2355 = vmatpush1.msra.mxu0 0.0
        %2356 = vmatprep.subr.mxu0 0.0
        %2357 = vmatpush1.msra.mxu0 0.0
        %2358 = vmatprep.subr.mxu0 0.0
        %2359 = vmatpush1.msra.mxu0 0.0
        %2360 = vmatprep.subr.mxu0 0.0
        %2361 = vmatpush1.msra.mxu0 0.0
        %2362 = vmatprep.subr.mxu0 0.0
        %2363 = vmatpush1.msra.mxu0 0.0
        %2364 = vmatprep.subr.mxu0 0.0
        %2365 = vmatpush1.msra.mxu0 0.0
        %2366 = vmatprep.subr.mxu0 0.0
        %2367 = vmatpush1.msra.mxu0 0.0
        %2368 = vmatprep.subr.mxu0 0.0
        %2369 = vmatpush1.msra.mxu0 0.0
        %2370 = vmatprep.subr.mxu0 0.0
        %2371 = vmatpush1.msra.mxu0 0.0
        %2372 = vmatprep.subr.mxu0 0.0
        %2373 = vmatpush1.msra.mxu0 0.0
        %2374 = vmatprep.subr.mxu0 0.0
        %2375 = vmatpush1.msra.mxu0 0.0
        %2376 = vmatprep.mubr.f32.mxu0 0.0
        %2377 = vmatmul.mubr.f32.gmra.mrb[0].mxu0 %v2213
        %v2378 = vpop.f32.mrb[0].mxu0
        %v2379 = vadd.f32 0.0, %v2378
        %v2380 = vpop.f32.mrb[0].mxu0
        %2381 = vmatprep.mubr.f32.mxu0 0.0
        %2382 = vmatmul.mubr.f32.gmra.mrb[0].mxu0 %v2215
        %v2383 = vpop.f32.mrb[0].mxu0
        %v2384 = vadd.f32 0.0, %v2383
        %v2385 = vpop.f32.mrb[0].mxu0
        %2386 = vdwg.mxu0
        %v2387 = vadd.f32 %v2196, %v2379
        %v2388 = vadd.f32 %v2197, %v2384
        %s2389 = scalar_lea.vmem %s4, 704
        %v2390 = vld [vmem:[%s2389] sm:$0xff]
        %v2391 = vld [vmem:[%s2389 + $0x8] sm:$0xff]
        %v2392 = vld [vmem:[%s2389 + $0x10] sm:$0xff]
        %v2393 = vld [vmem:[%s2389 + $0x18] sm:$0xff]
        %v2394 = vld [vmem:[%s2389 + $0x20] sm:$0xff]
        %v2395 = vld [vmem:[%s2389 + $0x28] sm:$0xff]
        %v2396 = vld [vmem:[%s2389 + $0x30] sm:$0xff]
        %v2397 = vld [vmem:[%s2389 + $0x38] sm:$0xff]
        %v2398 = vld [vmem:[%s2389 + $0x40] sm:$0xff]
        %v2399 = vld [vmem:[%s2389 + $0x48] sm:$0xff]
        %v2400 = vld [vmem:[%s2389 + $0x50] sm:$0xf]
        %v2401 = vrot.slane %v1632, 4
        %v2402 = vrot.slane %v1633, 4
        %v2403 = vsel %vm1243, %v2401, %v2402
        %v2404 = vsel %vm1674, %v2403, 0
        %v2406 = vsel %vm1674, %v2402, 0
        %v2409 = vsel %vm1243, %v2400, 0
        %2411 = vmatprep.subr.mxu0 0.0
        %2412 = vmatpush1.msra.mxu0 %v2390
        %2413 = vmatprep.subr.mxu0 0.0
        %2414 = vmatpush1.msra.mxu0 %v2391
        %2415 = vmatprep.subr.mxu0 0.0
        %2416 = vmatpush1.msra.mxu0 %v2392
        %2417 = vmatprep.subr.mxu0 0.0
        %2418 = vmatpush1.msra.mxu0 %v2393
        %2419 = vmatprep.subr.mxu0 0.0
        %2420 = vmatpush1.msra.mxu0 %v2394
        %2421 = vmatprep.subr.mxu0 0.0
        %2422 = vmatpush1.msra.mxu0 %v2395
        %2423 = vmatprep.subr.mxu0 0.0
        %2424 = vmatpush1.msra.mxu0 %v2396
        %2425 = vmatprep.subr.mxu0 0.0
        %2426 = vmatpush1.msra.mxu0 %v2397
        %2427 = vmatprep.subr.mxu0 0.0
        %2428 = vmatpush1.msra.mxu0 %v2398
        %2429 = vmatprep.subr.mxu0 0.0
        %2430 = vmatpush1.msra.mxu0 %v2399
        %2431 = vmatprep.subr.mxu0 0.0
        %2432 = vmatpush1.msra.mxu0 %v2409
        %2433 = vmatprep.subr.mxu0 0.0
        %2434 = vmatpush1.msra.mxu0 0.0
        %2435 = vmatprep.subr.mxu0 0.0
        %2436 = vmatpush1.msra.mxu0 0.0
        %2437 = vmatprep.subr.mxu0 0.0
        %2438 = vmatpush1.msra.mxu0 0.0
        %2439 = vmatprep.subr.mxu0 0.0
        %2440 = vmatpush1.msra.mxu0 0.0
        %2441 = vmatprep.subr.mxu0 0.0
        %2442 = vmatpush1.msra.mxu0 0.0
        %2443 = vmatprep.subr.mxu0 0.0
        %2444 = vmatpush1.msra.mxu0 0.0
        %2445 = vmatprep.subr.mxu0 0.0
        %2446 = vmatpush1.msra.mxu0 0.0
        %2447 = vmatprep.subr.mxu0 0.0
        %2448 = vmatpush1.msra.mxu0 0.0
        %2449 = vmatprep.subr.mxu0 0.0
        %2450 = vmatpush1.msra.mxu0 0.0
        %2451 = vmatprep.subr.mxu0 0.0
        %2452 = vmatpush1.msra.mxu0 0.0
        %2453 = vmatprep.subr.mxu0 0.0
        %2454 = vmatpush1.msra.mxu0 0.0
        %2455 = vmatprep.subr.mxu0 0.0
        %2456 = vmatpush1.msra.mxu0 0.0
        %2457 = vmatprep.subr.mxu0 0.0
        %2458 = vmatpush1.msra.mxu0 0.0
        %2459 = vmatprep.subr.mxu0 0.0
        %2460 = vmatpush1.msra.mxu0 0.0
        %2461 = vmatprep.subr.mxu0 0.0
        %2462 = vmatpush1.msra.mxu0 0.0
        %2463 = vmatprep.subr.mxu0 0.0
        %2464 = vmatpush1.msra.mxu0 0.0
        %2465 = vmatprep.subr.mxu0 0.0
        %2466 = vmatpush1.msra.mxu0 0.0
        %2467 = vmatprep.subr.mxu0 0.0
        %2468 = vmatpush1.msra.mxu0 0.0
        %2469 = vmatprep.subr.mxu0 0.0
        %2470 = vmatpush1.msra.mxu0 0.0
        %2471 = vmatprep.subr.mxu0 0.0
        %2472 = vmatpush1.msra.mxu0 0.0
        %2473 = vmatprep.subr.mxu0 0.0
        %2474 = vmatpush1.msra.mxu0 0.0
        %2475 = vmatprep.mubr.f32.mxu0 0.0
        %2476 = vmatmul.mubr.f32.gmra.mrb[0].mxu0 %v2404
        %v2477 = vpop.f32.mrb[0].mxu0
        %v2478 = vadd.f32 0.0, %v2477
        %v2479 = vpop.f32.mrb[0].mxu0
        %2480 = vmatprep.mubr.f32.mxu0 0.0
        %2481 = vmatmul.mubr.f32.gmra.mrb[0].mxu0 %v2406
        %v2482 = vpop.f32.mrb[0].mxu0
        %v2483 = vadd.f32 0.0, %v2482
        %v2484 = vpop.f32.mrb[0].mxu0
        %2485 = vdwg.mxu0
        %v2486 = vadd.f32 %v2295, %v2478
        %v2487 = vadd.f32 %v2296, %v2483
        %s2488 = scalar_lea.vmem %s4, 792
        %v2489 = vld [vmem:[%s2488] sm:$0xff]
        %v2490 = vld [vmem:[%s2488 + $0x8] sm:$0xff]
        %v2491 = vld [vmem:[%s2488 + $0x10] sm:$0xff]
        %v2492 = vld [vmem:[%s2488 + $0x18] sm:$0xff]
        %v2493 = vld [vmem:[%s2488 + $0x20] sm:$0xff]
        %v2494 = vld [vmem:[%s2488 + $0x28] sm:$0xff]
        %v2495 = vld [vmem:[%s2488 + $0x30] sm:$0xff]
        %v2496 = vld [vmem:[%s2488 + $0x38] sm:$0xff]
        %v2497 = vld [vmem:[%s2488 + $0x40] sm:$0xff]
        %v2498 = vld [vmem:[%s2488 + $0x48] sm:$0xff]
        %v2499 = vld [vmem:[%s2488 + $0x50] sm:$0xf]
        %v2501 = vsel %vm1243, %v2499, 0
        %2503 = vmatprep.subr.mxu0 0.0
        %2504 = vmatpush1.msra.mxu0 %v2489
        %2505 = vmatprep.subr.mxu0 0.0
        %2506 = vmatpush1.msra.mxu0 %v2490
        %2507 = vmatprep.subr.mxu0 0.0
        %2508 = vmatpush1.msra.mxu0 %v2491
        %2509 = vmatprep.subr.mxu0 0.0
        %2510 = vmatpush1.msra.mxu0 %v2492
        %2511 = vmatprep.subr.mxu0 0.0
        %2512 = vmatpush1.msra.mxu0 %v2493
        %2513 = vmatprep.subr.mxu0 0.0
        %2514 = vmatpush1.msra.mxu0 %v2494
        %2515 = vmatprep.subr.mxu0 0.0
        %2516 = vmatpush1.msra.mxu0 %v2495
        %2517 = vmatprep.subr.mxu0 0.0
        %2518 = vmatpush1.msra.mxu0 %v2496
        %2519 = vmatprep.subr.mxu0 0.0
        %2520 = vmatpush1.msra.mxu0 %v2497
        %2521 = vmatprep.subr.mxu0 0.0
        %2522 = vmatpush1.msra.mxu0 %v2498
        %2523 = vmatprep.subr.mxu0 0.0
        %2524 = vmatpush1.msra.mxu0 %v2501
        %2525 = vmatprep.subr.mxu0 0.0
        %2526 = vmatpush1.msra.mxu0 0.0
        %2527 = vmatprep.subr.mxu0 0.0
        %2528 = vmatpush1.msra.mxu0 0.0
        %2529 = vmatprep.subr.mxu0 0.0
        %2530 = vmatpush1.msra.mxu0 0.0
        %2531 = vmatprep.subr.mxu0 0.0
        %2532 = vmatpush1.msra.mxu0 0.0
        %2533 = vmatprep.subr.mxu0 0.0
        %2534 = vmatpush1.msra.mxu0 0.0
        %2535 = vmatprep.subr.mxu0 0.0
        %2536 = vmatpush1.msra.mxu0 0.0
        %2537 = vmatprep.subr.mxu0 0.0
        %2538 = vmatpush1.msra.mxu0 0.0
        %2539 = vmatprep.subr.mxu0 0.0
        %2540 = vmatpush1.msra.mxu0 0.0
        %2541 = vmatprep.subr.mxu0 0.0
        %2542 = vmatpush1.msra.mxu0 0.0
        %2543 = vmatprep.subr.mxu0 0.0
        %2544 = vmatpush1.msra.mxu0 0.0
        %2545 = vmatprep.subr.mxu0 0.0
        %2546 = vmatpush1.msra.mxu0 0.0
        %2547 = vmatprep.subr.mxu0 0.0
        %2548 = vmatpush1.msra.mxu0 0.0
        %2549 = vmatprep.subr.mxu0 0.0
        %2550 = vmatpush1.msra.mxu0 0.0
        %2551 = vmatprep.subr.mxu0 0.0
        %2552 = vmatpush1.msra.mxu0 0.0
        %2553 = vmatprep.subr.mxu0 0.0
        %2554 = vmatpush1.msra.mxu0 0.0
        %2555 = vmatprep.subr.mxu0 0.0
        %2556 = vmatpush1.msra.mxu0 0.0
        %2557 = vmatprep.subr.mxu0 0.0
        %2558 = vmatpush1.msra.mxu0 0.0
        %2559 = vmatprep.subr.mxu0 0.0
        %2560 = vmatpush1.msra.mxu0 0.0
        %2561 = vmatprep.subr.mxu0 0.0
        %2562 = vmatpush1.msra.mxu0 0.0
        %2563 = vmatprep.subr.mxu0 0.0
        %2564 = vmatpush1.msra.mxu0 0.0
        %2565 = vmatprep.subr.mxu0 0.0
        %2566 = vmatpush1.msra.mxu0 0.0
        %2567 = vmatprep.mubr.f32.mxu0 0.0
        %2568 = vmatmul.mubr.f32.gmra.mrb[0].mxu0 %v2404
        %v2569 = vpop.f32.mrb[0].mxu0
        %v2570 = vadd.f32 0.0, %v2569
        %v2571 = vpop.f32.mrb[0].mxu0
        %2572 = vmatprep.mubr.f32.mxu0 0.0
        %2573 = vmatmul.mubr.f32.gmra.mrb[0].mxu0 %v2406
        %v2574 = vpop.f32.mrb[0].mxu0
        %v2575 = vadd.f32 0.0, %v2574
        %v2576 = vpop.f32.mrb[0].mxu0
        %2577 = vdwg.mxu0
        %v2578 = vadd.f32 %v2387, %v2570
        %v2579 = vadd.f32 %v2388, %v2575
        %v2580 = vmax.f32 %v2486, %v2578
        %v2581 = vmax.f32 %v2487, %v2579
        %v2582 = vld [vmem:[%s5] sm:$0x1]
        %v2584 = vlaneseq
        %v2585 = vshrl.u32 %v2584, 7
        %v2586 = vsub.s32 0, %v2585
        %v2587 = vrot.slane %v2582, %v2586
        %v2589 = vadd.f32 %v2580, %v2587
        %v2590 = vadd.f32 %v2581, %v2587
        %v2591 = vmax.f32 %v2589, 0.0
        %v2592 = vmax.f32 %v2590, 0.0
        %v2593 = vld [vmem:[%s6] sm:$0x1f]
        %vm2594 = vcmask 80896
        %v2596 = vsel %vm2594, %v2593, 0
        %vm2598 = vcmask 1041408
        %v2600 = vsel %vm2598, %v2592, 0
        %2602 = vmatprep.subr.mxu0 0.0
        %2603 = vmatpush1.msra.mxu0 %v2591
        %2604 = vmatprep.subr.mxu0 0.0
        %2605 = vmatpush1.msra.mxu0 %v2600
        %2606 = vmatprep.subr.mxu0 0.0
        %2607 = vmatpush1.msra.mxu0 0.0
        %2608 = vmatprep.subr.mxu0 0.0
        %2609 = vmatpush1.msra.mxu0 0.0
        %2610 = vmatprep.subr.mxu0 0.0
        %2611 = vmatpush1.msra.mxu0 0.0
        %2612 = vmatprep.subr.mxu0 0.0
        %2613 = vmatpush1.msra.mxu0 0.0
        %2614 = vmatprep.subr.mxu0 0.0
        %2615 = vmatpush1.msra.mxu0 0.0
        %2616 = vmatprep.subr.mxu0 0.0
        %2617 = vmatpush1.msra.mxu0 0.0
        %2618 = vmatprep.subr.mxu0 0.0
        %2619 = vmatpush1.msra.mxu0 0.0
        %2620 = vmatprep.subr.mxu0 0.0
        %2621 = vmatpush1.msra.mxu0 0.0
        %2622 = vmatprep.subr.mxu0 0.0
        %2623 = vmatpush1.msra.mxu0 0.0
        %2624 = vmatprep.subr.mxu0 0.0
        %2625 = vmatpush1.msra.mxu0 0.0
        %2626 = vmatprep.subr.mxu0 0.0
        %2627 = vmatpush1.msra.mxu0 0.0
        %2628 = vmatprep.subr.mxu0 0.0
        %2629 = vmatpush1.msra.mxu0 0.0
        %2630 = vmatprep.subr.mxu0 0.0
        %2631 = vmatpush1.msra.mxu0 0.0
        %2632 = vmatprep.subr.mxu0 0.0
        %2633 = vmatpush1.msra.mxu0 0.0
        %2634 = vmatprep.subr.mxu0 0.0
        %2635 = vmatpush1.msra.mxu0 0.0
        %2636 = vmatprep.subr.mxu0 0.0
        %2637 = vmatpush1.msra.mxu0 0.0
        %2638 = vmatprep.subr.mxu0 0.0
        %2639 = vmatpush1.msra.mxu0 0.0
        %2640 = vmatprep.subr.mxu0 0.0
        %2641 = vmatpush1.msra.mxu0 0.0
        %2642 = vmatprep.subr.mxu0 0.0
        %2643 = vmatpush1.msra.mxu0 0.0
        %2644 = vmatprep.subr.mxu0 0.0
        %2645 = vmatpush1.msra.mxu0 0.0
        %2646 = vmatprep.subr.mxu0 0.0
        %2647 = vmatpush1.msra.mxu0 0.0
        %2648 = vmatprep.subr.mxu0 0.0
        %2649 = vmatpush1.msra.mxu0 0.0
        %2650 = vmatprep.subr.mxu0 0.0
        %2651 = vmatpush1.msra.mxu0 0.0
        %2652 = vmatprep.subr.mxu0 0.0
        %2653 = vmatpush1.msra.mxu0 0.0
        %2654 = vmatprep.subr.mxu0 0.0
        %2655 = vmatpush1.msra.mxu0 0.0
        %2656 = vmatprep.subr.mxu0 0.0
        %2657 = vmatpush1.msra.mxu0 0.0
        %2658 = vmatprep.subr.mxu0 0.0
        %2659 = vmatpush1.msra.mxu0 0.0
        %2660 = vmatprep.subr.mxu0 0.0
        %2661 = vmatpush1.msra.mxu0 0.0
        %2662 = vmatprep.subr.mxu0 0.0
        %2663 = vmatpush1.msra.mxu0 0.0
        %2664 = vmatprep.subr.mxu0 0.0
        %2665 = vmatpush1.msra.mxu0 0.0
        %2666 = vmatprep.mubr.f32.mxu0 0.0
        %2667 = vmatmul.mubr.f32.gmra.mrb[0].mxu0 %v2596
        %v2668 = vpop.f32.mrb[0].mxu0
        %v2669 = vadd.f32 0.0, %v2668
        %v2670 = vpop.f32.mrb[0].mxu0
        %2671 = vdwg.mxu0
        %s2672 = scalar_lea.vmem %s6, 8
        %v2673 = vld [vmem:[%s2672] sm:$0x1f]
        %v2675 = vsel %vm2594, %v2673, 0
        %2677 = vmatprep.subr.mxu0 0.0
        %2678 = vmatpush1.msra.mxu0 %v2591
        %2679 = vmatprep.subr.mxu0 0.0
        %2680 = vmatpush1.msra.mxu0 %v2600
        %2681 = vmatprep.subr.mxu0 0.0
        %2682 = vmatpush1.msra.mxu0 0.0
        %2683 = vmatprep.subr.mxu0 0.0
        %2684 = vmatpush1.msra.mxu0 0.0
        %2685 = vmatprep.subr.mxu0 0.0
        %2686 = vmatpush1.msra.mxu0 0.0
        %2687 = vmatprep.subr.mxu0 0.0
        %2688 = vmatpush1.msra.mxu0 0.0
        %2689 = vmatprep.subr.mxu0 0.0
        %2690 = vmatpush1.msra.mxu0 0.0
        %2691 = vmatprep.subr.mxu0 0.0
        %2692 = vmatpush1.msra.mxu0 0.0
        %2693 = vmatprep.subr.mxu0 0.0
        %2694 = vmatpush1.msra.mxu0 0.0
        %2695 = vmatprep.subr.mxu0 0.0
        %2696 = vmatpush1.msra.mxu0 0.0
        %2697 = vmatprep.subr.mxu0 0.0
        %2698 = vmatpush1.msra.mxu0 0.0
        %2699 = vmatprep.subr.mxu0 0.0
        %2700 = vmatpush1.msra.mxu0 0.0
        %2701 = vmatprep.subr.mxu0 0.0
        %2702 = vmatpush1.msra.mxu0 0.0
        %2703 = vmatprep.subr.mxu0 0.0
        %2704 = vmatpush1.msra.mxu0 0.0
        %2705 = vmatprep.subr.mxu0 0.0
        %2706 = vmatpush1.msra.mxu0 0.0
        %2707 = vmatprep.subr.mxu0 0.0
        %2708 = vmatpush1.msra.mxu0 0.0
        %2709 = vmatprep.subr.mxu0 0.0
        %2710 = vmatpush1.msra.mxu0 0.0
        %2711 = vmatprep.subr.mxu0 0.0
        %2712 = vmatpush1.msra.mxu0 0.0
        %2713 = vmatprep.subr.mxu0 0.0
        %2714 = vmatpush1.msra.mxu0 0.0
        %2715 = vmatprep.subr.mxu0 0.0
        %2716 = vmatpush1.msra.mxu0 0.0
        %2717 = vmatprep.subr.mxu0 0.0
        %2718 = vmatpush1.msra.mxu0 0.0
        %2719 = vmatprep.subr.mxu0 0.0
        %2720 = vmatpush1.msra.mxu0 0.0
        %2721 = vmatprep.subr.mxu0 0.0
        %2722 = vmatpush1.msra.mxu0 0.0
        %2723 = vmatprep.subr.mxu0 0.0
        %2724 = vmatpush1.msra.mxu0 0.0
        %2725 = vmatprep.subr.mxu0 0.0
        %2726 = vmatpush1.msra.mxu0 0.0
        %2727 = vmatprep.subr.mxu0 0.0
        %2728 = vmatpush1.msra.mxu0 0.0
        %2729 = vmatprep.subr.mxu0 0.0
        %2730 = vmatpush1.msra.mxu0 0.0
        %2731 = vmatprep.subr.mxu0 0.0
        %2732 = vmatpush1.msra.mxu0 0.0
        %2733 = vmatprep.subr.mxu0 0.0
        %2734 = vmatpush1.msra.mxu0 0.0
        %2735 = vmatprep.subr.mxu0 0.0
        %2736 = vmatpush1.msra.mxu0 0.0
        %2737 = vmatprep.subr.mxu0 0.0
        %2738 = vmatpush1.msra.mxu0 0.0
        %2739 = vmatprep.subr.mxu0 0.0
        %2740 = vmatpush1.msra.mxu0 0.0
        %2741 = vmatprep.mubr.f32.mxu0 0.0
        %2742 = vmatmul.mubr.f32.gmra.mrb[0].mxu0 %v2675
        %v2743 = vpop.f32.mrb[0].mxu0
        %v2744 = vadd.f32 0.0, %v2743
        %v2745 = vpop.f32.mrb[0].mxu0
        %2746 = vdwg.mxu0
        %v2747 = vmax.f32 %v2669, %v2744
        %v2748 = vld [vmem:[%s8] sm:$0x1]
        %v2749 = vld [vmem:[%s7] sm:$0xff]
        %v2750 = vld [vmem:[%s7 + $0x8] sm:$0xff]
        %v2751 = vld [vmem:[%s7 + $0x10] sm:$0xff]
        %v2752 = vld [vmem:[%s7 + $0x18] sm:$0xff]
        %v2753 = vld [vmem:[%s7 + $0x20] sm:$0xff]
        %v2754 = vld [vmem:[%s7 + $0x28] sm:$0xff]
        %v2755 = vld [vmem:[%s7 + $0x30] sm:$0xff]
        %v2756 = vld [vmem:[%s7 + $0x38] sm:$0xff]
        %v2757 = vld [vmem:[%s7 + $0x40] sm:$0xff]
        %v2758 = vld [vmem:[%s7 + $0x48] sm:$0xff]
        %vm2759 = vcmask 654336
        %v2761 = vsel %vm2759, %v2747, 0
        %2763 = vmatprep.subr.mxu0 0.0
        %2764 = vmatpush1.msra.mxu0 %v2749
        %2765 = vmatprep.subr.mxu0 0.0
        %2766 = vmatpush1.msra.mxu0 %v2750
        %2767 = vmatprep.subr.mxu0 0.0
        %2768 = vmatpush1.msra.mxu0 %v2751
        %2769 = vmatprep.subr.mxu0 0.0
        %2770 = vmatpush1.msra.mxu0 %v2752
        %2771 = vmatprep.subr.mxu0 0.0
        %2772 = vmatpush1.msra.mxu0 %v2753
        %2773 = vmatprep.subr.mxu0 0.0
        %2774 = vmatpush1.msra.mxu0 %v2754
        %2775 = vmatprep.subr.mxu0 0.0
        %2776 = vmatpush1.msra.mxu0 %v2755
        %2777 = vmatprep.subr.mxu0 0.0
        %2778 = vmatpush1.msra.mxu0 %v2756
        %2779 = vmatprep.subr.mxu0 0.0
        %2780 = vmatpush1.msra.mxu0 %v2757
        %2781 = vmatprep.subr.mxu0 0.0
        %2782 = vmatpush1.msra.mxu0 %v2758
        %2783 = vmatprep.subr.mxu0 0.0
        %2784 = vmatpush1.msra.mxu0 0.0
        %2785 = vmatprep.subr.mxu0 0.0
        %2786 = vmatpush1.msra.mxu0 0.0
        %2787 = vmatprep.subr.mxu0 0.0
        %2788 = vmatpush1.msra.mxu0 0.0
        %2789 = vmatprep.subr.mxu0 0.0
        %2790 = vmatpush1.msra.mxu0 0.0
        %2791 = vmatprep.subr.mxu0 0.0
        %2792 = vmatpush1.msra.mxu0 0.0
        %2793 = vmatprep.subr.mxu0 0.0
        %2794 = vmatpush1.msra.mxu0 0.0
        %2795 = vmatprep.subr.mxu0 0.0
        %2796 = vmatpush1.msra.mxu0 0.0
        %2797 = vmatprep.subr.mxu0 0.0
        %2798 = vmatpush1.msra.mxu0 0.0
        %2799 = vmatprep.subr.mxu0 0.0
        %2800 = vmatpush1.msra.mxu0 0.0
        %2801 = vmatprep.subr.mxu0 0.0
        %2802 = vmatpush1.msra.mxu0 0.0
        %2803 = vmatprep.subr.mxu0 0.0
        %2804 = vmatpush1.msra.mxu0 0.0
        %2805 = vmatprep.subr.mxu0 0.0
        %2806 = vmatpush1.msra.mxu0 0.0
        %2807 = vmatprep.subr.mxu0 0.0
        %2808 = vmatpush1.msra.mxu0 0.0
        %2809 = vmatprep.subr.mxu0 0.0
        %2810 = vmatpush1.msra.mxu0 0.0
        %2811 = vmatprep.subr.mxu0 0.0
        %2812 = vmatpush1.msra.mxu0 0.0
        %2813 = vmatprep.subr.mxu0 0.0
        %2814 = vmatpush1.msra.mxu0 0.0
        %2815 = vmatprep.subr.mxu0 0.0
        %2816 = vmatpush1.msra.mxu0 0.0
        %2817 = vmatprep.subr.mxu0 0.0
        %2818 = vmatpush1.msra.mxu0 0.0
        %2819 = vmatprep.subr.mxu0 0.0
        %2820 = vmatpush1.msra.mxu0 0.0
        %2821 = vmatprep.subr.mxu0 0.0
        %2822 = vmatpush1.msra.mxu0 0.0
        %2823 = vmatprep.subr.mxu0 0.0
        %2824 = vmatpush1.msra.mxu0 0.0
        %2825 = vmatprep.subr.mxu0 0.0
        %2826 = vmatpush1.msra.mxu0 0.0
        %2827 = vmatprep.mubr.f32.mxu0 0.0
        %2828 = vmatmul.mubr.f32.gmra.mrb[0].mxu0 %v2761
        %v2829 = vpop.f32.mrb[0].mxu0
        %v2830 = vadd.f32 0.0, %v2829
        %v2831 = vpop.f32.mrb[0].mxu0
        %2832 = vdwg.mxu0
        %v2833 = vadd.f32 %v2748, %v2830
        %s2834 = scalar_lea.vmem %s7, 80
        %v2835 = vld [vmem:[%s2834] sm:$0xff]
        %v2836 = vld [vmem:[%s2834 + $0x8] sm:$0xff]
        %v2837 = vld [vmem:[%s2834 + $0x10] sm:$0xff]
        %v2838 = vld [vmem:[%s2834 + $0x18] sm:$0xff]
        %v2839 = vld [vmem:[%s2834 + $0x20] sm:$0xff]
        %v2840 = vld [vmem:[%s2834 + $0x28] sm:$0xff]
        %v2841 = vld [vmem:[%s2834 + $0x30] sm:$0xff]
        %v2842 = vld [vmem:[%s2834 + $0x38] sm:$0xff]
        %v2843 = vld [vmem:[%s2834 + $0x40] sm:$0xff]
        %v2844 = vld [vmem:[%s2834 + $0x48] sm:$0xff]
        %v2845 = vrot.slane %v2747, 1
        %v2846 = vsel %vm2759, %v2845, 0
        %2848 = vmatprep.subr.mxu0 0.0
        %2849 = vmatpush1.msra.mxu0 %v2835
        %2850 = vmatprep.subr.mxu0 0.0
        %2851 = vmatpush1.msra.mxu0 %v2836
        %2852 = vmatprep.subr.mxu0 0.0
        %2853 = vmatpush1.msra.mxu0 %v2837
        %2854 = vmatprep.subr.mxu0 0.0
        %2855 = vmatpush1.msra.mxu0 %v2838
        %2856 = vmatprep.subr.mxu0 0.0
        %2857 = vmatpush1.msra.mxu0 %v2839
        %2858 = vmatprep.subr.mxu0 0.0
        %2859 = vmatpush1.msra.mxu0 %v2840
        %2860 = vmatprep.subr.mxu0 0.0
        %2861 = vmatpush1.msra.mxu0 %v2841
        %2862 = vmatprep.subr.mxu0 0.0
        %2863 = vmatpush1.msra.mxu0 %v2842
        %2864 = vmatprep.subr.mxu0 0.0
        %2865 = vmatpush1.msra.mxu0 %v2843
        %2866 = vmatprep.subr.mxu0 0.0
        %2867 = vmatpush1.msra.mxu0 %v2844
        %2868 = vmatprep.subr.mxu0 0.0
        %2869 = vmatpush1.msra.mxu0 0.0
        %2870 = vmatprep.subr.mxu0 0.0
        %2871 = vmatpush1.msra.mxu0 0.0
        %2872 = vmatprep.subr.mxu0 0.0
        %2873 = vmatpush1.msra.mxu0 0.0
        %2874 = vmatprep.subr.mxu0 0.0
        %2875 = vmatpush1.msra.mxu0 0.0
        %2876 = vmatprep.subr.mxu0 0.0
        %2877 = vmatpush1.msra.mxu0 0.0
        %2878 = vmatprep.subr.mxu0 0.0
        %2879 = vmatpush1.msra.mxu0 0.0
        %2880 = vmatprep.subr.mxu0 0.0
        %2881 = vmatpush1.msra.mxu0 0.0
        %2882 = vmatprep.subr.mxu0 0.0
        %2883 = vmatpush1.msra.mxu0 0.0
        %2884 = vmatprep.subr.mxu0 0.0
        %2885 = vmatpush1.msra.mxu0 0.0
        %2886 = vmatprep.subr.mxu0 0.0
        %2887 = vmatpush1.msra.mxu0 0.0
        %2888 = vmatprep.subr.mxu0 0.0
        %2889 = vmatpush1.msra.mxu0 0.0
        %2890 = vmatprep.subr.mxu0 0.0
        %2891 = vmatpush1.msra.mxu0 0.0
        %2892 = vmatprep.subr.mxu0 0.0
        %2893 = vmatpush1.msra.mxu0 0.0
        %2894 = vmatprep.subr.mxu0 0.0
        %2895 = vmatpush1.msra.mxu0 0.0
        %2896 = vmatprep.subr.mxu0 0.0
        %2897 = vmatpush1.msra.mxu0 0.0
        %2898 = vmatprep.subr.mxu0 0.0
        %2899 = vmatpush1.msra.mxu0 0.0
        %2900 = vmatprep.subr.mxu0 0.0
        %2901 = vmatpush1.msra.mxu0 0.0
        %2902 = vmatprep.subr.mxu0 0.0
        %2903 = vmatpush1.msra.mxu0 0.0
        %2904 = vmatprep.subr.mxu0 0.0
        %2905 = vmatpush1.msra.mxu0 0.0
        %2906 = vmatprep.subr.mxu0 0.0
        %2907 = vmatpush1.msra.mxu0 0.0
        %2908 = vmatprep.subr.mxu0 0.0
        %2909 = vmatpush1.msra.mxu0 0.0
        %2910 = vmatprep.subr.mxu0 0.0
        %2911 = vmatpush1.msra.mxu0 0.0
        %2912 = vmatprep.mubr.f32.mxu0 0.0
        %2913 = vmatmul.mubr.f32.gmra.mrb[0].mxu0 %v2846
        %v2914 = vpop.f32.mrb[0].mxu0
        %v2915 = vadd.f32 0.0, %v2914
        %v2916 = vpop.f32.mrb[0].mxu0
        %2917 = vdwg.mxu0
        %v2918 = vadd.f32 %v2833, %v2915
        %s2919 = scalar_lea.vmem %s7, 160
        %v2920 = vld [vmem:[%s2919] sm:$0xff]
        %v2921 = vld [vmem:[%s2919 + $0x8] sm:$0xff]
        %v2922 = vld [vmem:[%s2919 + $0x10] sm:$0xff]
        %v2923 = vld [vmem:[%s2919 + $0x18] sm:$0xff]
        %v2924 = vld [vmem:[%s2919 + $0x20] sm:$0xff]
        %v2925 = vld [vmem:[%s2919 + $0x28] sm:$0xff]
        %v2926 = vld [vmem:[%s2919 + $0x30] sm:$0xff]
        %v2927 = vld [vmem:[%s2919 + $0x38] sm:$0xff]
        %v2928 = vld [vmem:[%s2919 + $0x40] sm:$0xff]
        %v2929 = vld [vmem:[%s2919 + $0x48] sm:$0xff]
        %v2930 = vrot.slane %v2747, 2
        %v2931 = vsel %vm2759, %v2930, 0
        %2933 = vmatprep.subr.mxu0 0.0
        %2934 = vmatpush1.msra.mxu0 %v2920
        %2935 = vmatprep.subr.mxu0 0.0
        %2936 = vmatpush1.msra.mxu0 %v2921
        %2937 = vmatprep.subr.mxu0 0.0
        %2938 = vmatpush1.msra.mxu0 %v2922
        %2939 = vmatprep.subr.mxu0 0.0
        %2940 = vmatpush1.msra.mxu0 %v2923
        %2941 = vmatprep.subr.mxu0 0.0
        %2942 = vmatpush1.msra.mxu0 %v2924
        %2943 = vmatprep.subr.mxu0 0.0
        %2944 = vmatpush1.msra.mxu0 %v2925
        %2945 = vmatprep.subr.mxu0 0.0
        %2946 = vmatpush1.msra.mxu0 %v2926
        %2947 = vmatprep.subr.mxu0 0.0
        %2948 = vmatpush1.msra.mxu0 %v2927
        %2949 = vmatprep.subr.mxu0 0.0
        %2950 = vmatpush1.msra.mxu0 %v2928
        %2951 = vmatprep.subr.mxu0 0.0
        %2952 = vmatpush1.msra.mxu0 %v2929
        %2953 = vmatprep.subr.mxu0 0.0
        %2954 = vmatpush1.msra.mxu0 0.0
        %2955 = vmatprep.subr.mxu0 0.0
        %2956 = vmatpush1.msra.mxu0 0.0
        %2957 = vmatprep.subr.mxu0 0.0
        %2958 = vmatpush1.msra.mxu0 0.0
        %2959 = vmatprep.subr.mxu0 0.0
        %2960 = vmatpush1.msra.mxu0 0.0
        %2961 = vmatprep.subr.mxu0 0.0
        %2962 = vmatpush1.msra.mxu0 0.0
        %2963 = vmatprep.subr.mxu0 0.0
        %2964 = vmatpush1.msra.mxu0 0.0
        %2965 = vmatprep.subr.mxu0 0.0
        %2966 = vmatpush1.msra.mxu0 0.0
        %2967 = vmatprep.subr.mxu0 0.0
        %2968 = vmatpush1.msra.mxu0 0.0
        %2969 = vmatprep.subr.mxu0 0.0
        %2970 = vmatpush1.msra.mxu0 0.0
        %2971 = vmatprep.subr.mxu0 0.0
        %2972 = vmatpush1.msra.mxu0 0.0
        %2973 = vmatprep.subr.mxu0 0.0
        %2974 = vmatpush1.msra.mxu0 0.0
        %2975 = vmatprep.subr.mxu0 0.0
        %2976 = vmatpush1.msra.mxu0 0.0
        %2977 = vmatprep.subr.mxu0 0.0
        %2978 = vmatpush1.msra.mxu0 0.0
        %2979 = vmatprep.subr.mxu0 0.0
        %2980 = vmatpush1.msra.mxu0 0.0
        %2981 = vmatprep.subr.mxu0 0.0
        %2982 = vmatpush1.msra.mxu0 0.0
        %2983 = vmatprep.subr.mxu0 0.0
        %2984 = vmatpush1.msra.mxu0 0.0
        %2985 = vmatprep.subr.mxu0 0.0
        %2986 = vmatpush1.msra.mxu0 0.0
        %2987 = vmatprep.subr.mxu0 0.0
        %2988 = vmatpush1.msra.mxu0 0.0
        %2989 = vmatprep.subr.mxu0 0.0
        %2990 = vmatpush1.msra.mxu0 0.0
        %2991 = vmatprep.subr.mxu0 0.0
        %2992 = vmatpush1.msra.mxu0 0.0
        %2993 = vmatprep.subr.mxu0 0.0
        %2994 = vmatpush1.msra.mxu0 0.0
        %2995 = vmatprep.subr.mxu0 0.0
        %2996 = vmatpush1.msra.mxu0 0.0
        %2997 = vmatprep.mubr.f32.mxu0 0.0
        %2998 = vmatmul.mubr.f32.gmra.mrb[0].mxu0 %v2931
        %v2999 = vpop.f32.mrb[0].mxu0
        %v3000 = vadd.f32 0.0, %v2999
        %v3001 = vpop.f32.mrb[0].mxu0
        %3002 = vdwg.mxu0
        %v3003 = vadd.f32 %v2918, %v3000
        %s3004 = scalar_lea.vmem %s7, 240
        %v3005 = vld [vmem:[%s3004] sm:$0xff]
        %v3006 = vld [vmem:[%s3004 + $0x8] sm:$0xff]
        %v3007 = vld [vmem:[%s3004 + $0x10] sm:$0xff]
        %v3008 = vld [vmem:[%s3004 + $0x18] sm:$0xff]
        %v3009 = vld [vmem:[%s3004 + $0x20] sm:$0xff]
        %v3010 = vld [vmem:[%s3004 + $0x28] sm:$0xff]
        %v3011 = vld [vmem:[%s3004 + $0x30] sm:$0xff]
        %v3012 = vld [vmem:[%s3004 + $0x38] sm:$0xff]
        %v3013 = vld [vmem:[%s3004 + $0x40] sm:$0xff]
        %v3014 = vld [vmem:[%s3004 + $0x48] sm:$0xff]
        %v3015 = vrot.slane %v2747, 3
        %v3016 = vsel %vm2759, %v3015, 0
        %3018 = vmatprep.subr.mxu0 0.0
        %3019 = vmatpush1.msra.mxu0 %v3005
        %3020 = vmatprep.subr.mxu0 0.0
        %3021 = vmatpush1.msra.mxu0 %v3006
        %3022 = vmatprep.subr.mxu0 0.0
        %3023 = vmatpush1.msra.mxu0 %v3007
        %3024 = vmatprep.subr.mxu0 0.0
        %3025 = vmatpush1.msra.mxu0 %v3008
        %3026 = vmatprep.subr.mxu0 0.0
        %3027 = vmatpush1.msra.mxu0 %v3009
        %3028 = vmatprep.subr.mxu0 0.0
        %3029 = vmatpush1.msra.mxu0 %v3010
        %3030 = vmatprep.subr.mxu0 0.0
        %3031 = vmatpush1.msra.mxu0 %v3011
        %3032 = vmatprep.subr.mxu0 0.0
        %3033 = vmatpush1.msra.mxu0 %v3012
        %3034 = vmatprep.subr.mxu0 0.0
        %3035 = vmatpush1.msra.mxu0 %v3013
        %3036 = vmatprep.subr.mxu0 0.0
        %3037 = vmatpush1.msra.mxu0 %v3014
        %3038 = vmatprep.subr.mxu0 0.0
        %3039 = vmatpush1.msra.mxu0 0.0
        %3040 = vmatprep.subr.mxu0 0.0
        %3041 = vmatpush1.msra.mxu0 0.0
        %3042 = vmatprep.subr.mxu0 0.0
        %3043 = vmatpush1.msra.mxu0 0.0
        %3044 = vmatprep.subr.mxu0 0.0
        %3045 = vmatpush1.msra.mxu0 0.0
        %3046 = vmatprep.subr.mxu0 0.0
        %3047 = vmatpush1.msra.mxu0 0.0
        %3048 = vmatprep.subr.mxu0 0.0
        %3049 = vmatpush1.msra.mxu0 0.0
        %3050 = vmatprep.subr.mxu0 0.0
        %3051 = vmatpush1.msra.mxu0 0.0
        %3052 = vmatprep.subr.mxu0 0.0
        %3053 = vmatpush1.msra.mxu0 0.0
        %3054 = vmatprep.subr.mxu0 0.0
        %3055 = vmatpush1.msra.mxu0 0.0
        %3056 = vmatprep.subr.mxu0 0.0
        %3057 = vmatpush1.msra.mxu0 0.0
        %3058 = vmatprep.subr.mxu0 0.0
        %3059 = vmatpush1.msra.mxu0 0.0
        %3060 = vmatprep.subr.mxu0 0.0
        %3061 = vmatpush1.msra.mxu0 0.0
        %3062 = vmatprep.subr.mxu0 0.0
        %3063 = vmatpush1.msra.mxu0 0.0
        %3064 = vmatprep.subr.mxu0 0.0
        %3065 = vmatpush1.msra.mxu0 0.0
        %3066 = vmatprep.subr.mxu0 0.0
        %3067 = vmatpush1.msra.mxu0 0.0
        %3068 = vmatprep.subr.mxu0 0.0
        %3069 = vmatpush1.msra.mxu0 0.0
        %3070 = vmatprep.subr.mxu0 0.0
        %3071 = vmatpush1.msra.mxu0 0.0
        %3072 = vmatprep.subr.mxu0 0.0
        %3073 = vmatpush1.msra.mxu0 0.0
        %3074 = vmatprep.subr.mxu0 0.0
        %3075 = vmatpush1.msra.mxu0 0.0
        %3076 = vmatprep.subr.mxu0 0.0
        %3077 = vmatpush1.msra.mxu0 0.0
        %3078 = vmatprep.subr.mxu0 0.0
        %3079 = vmatpush1.msra.mxu0 0.0
        %3080 = vmatprep.subr.mxu0 0.0
        %3081 = vmatpush1.msra.mxu0 0.0
        %3082 = vmatprep.mubr.f32.mxu0 0.0
        %3083 = vmatmul.mubr.f32.gmra.mrb[0].mxu0 %v3016
        %v3084 = vpop.f32.mrb[0].mxu0
        %v3085 = vadd.f32 0.0, %v3084
        %v3086 = vpop.f32.mrb[0].mxu0
        %3087 = vdwg.mxu0
        %v3088 = vadd.f32 %v3003, %v3085
        %s3089 = scalar_lea.vmem %s7, 320
        %v3090 = vld [vmem:[%s3089] sm:$0xff]
        %v3091 = vld [vmem:[%s3089 + $0x8] sm:$0xff]
        %v3092 = vld [vmem:[%s3089 + $0x10] sm:$0xff]
        %v3093 = vld [vmem:[%s3089 + $0x18] sm:$0xff]
        %v3094 = vld [vmem:[%s3089 + $0x20] sm:$0xff]
        %v3095 = vld [vmem:[%s3089 + $0x28] sm:$0xff]
        %v3096 = vld [vmem:[%s3089 + $0x30] sm:$0xff]
        %v3097 = vld [vmem:[%s3089 + $0x38] sm:$0xff]
        %v3098 = vld [vmem:[%s3089 + $0x40] sm:$0xff]
        %v3099 = vld [vmem:[%s3089 + $0x48] sm:$0xff]
        %v3100 = vrot.slane %v2747, 4
        %v3101 = vsel %vm2759, %v3100, 0
        %3103 = vmatprep.subr.mxu0 0.0
        %3104 = vmatpush1.msra.mxu0 %v3090
        %3105 = vmatprep.subr.mxu0 0.0
        %3106 = vmatpush1.msra.mxu0 %v3091
        %3107 = vmatprep.subr.mxu0 0.0
        %3108 = vmatpush1.msra.mxu0 %v3092
        %3109 = vmatprep.subr.mxu0 0.0
        %3110 = vmatpush1.msra.mxu0 %v3093
        %3111 = vmatprep.subr.mxu0 0.0
        %3112 = vmatpush1.msra.mxu0 %v3094
        %3113 = vmatprep.subr.mxu0 0.0
        %3114 = vmatpush1.msra.mxu0 %v3095
        %3115 = vmatprep.subr.mxu0 0.0
        %3116 = vmatpush1.msra.mxu0 %v3096
        %3117 = vmatprep.subr.mxu0 0.0
        %3118 = vmatpush1.msra.mxu0 %v3097
        %3119 = vmatprep.subr.mxu0 0.0
        %3120 = vmatpush1.msra.mxu0 %v3098
        %3121 = vmatprep.subr.mxu0 0.0
        %3122 = vmatpush1.msra.mxu0 %v3099
        %3123 = vmatprep.subr.mxu0 0.0
        %3124 = vmatpush1.msra.mxu0 0.0
        %3125 = vmatprep.subr.mxu0 0.0
        %3126 = vmatpush1.msra.mxu0 0.0
        %3127 = vmatprep.subr.mxu0 0.0
        %3128 = vmatpush1.msra.mxu0 0.0
        %3129 = vmatprep.subr.mxu0 0.0
        %3130 = vmatpush1.msra.mxu0 0.0
        %3131 = vmatprep.subr.mxu0 0.0
        %3132 = vmatpush1.msra.mxu0 0.0
        %3133 = vmatprep.subr.mxu0 0.0
        %3134 = vmatpush1.msra.mxu0 0.0
        %3135 = vmatprep.subr.mxu0 0.0
        %3136 = vmatpush1.msra.mxu0 0.0
        %3137 = vmatprep.subr.mxu0 0.0
        %3138 = vmatpush1.msra.mxu0 0.0
        %3139 = vmatprep.subr.mxu0 0.0
        %3140 = vmatpush1.msra.mxu0 0.0
        %3141 = vmatprep.subr.mxu0 0.0
        %3142 = vmatpush1.msra.mxu0 0.0
        %3143 = vmatprep.subr.mxu0 0.0
        %3144 = vmatpush1.msra.mxu0 0.0
        %3145 = vmatprep.subr.mxu0 0.0
        %3146 = vmatpush1.msra.mxu0 0.0
        %3147 = vmatprep.subr.mxu0 0.0
        %3148 = vmatpush1.msra.mxu0 0.0
        %3149 = vmatprep.subr.mxu0 0.0
        %3150 = vmatpush1.msra.mxu0 0.0
        %3151 = vmatprep.subr.mxu0 0.0
        %3152 = vmatpush1.msra.mxu0 0.0
        %3153 = vmatprep.subr.mxu0 0.0
        %3154 = vmatpush1.msra.mxu0 0.0
        %3155 = vmatprep.subr.mxu0 0.0
        %3156 = vmatpush1.msra.mxu0 0.0
        %3157 = vmatprep.subr.mxu0 0.0
        %3158 = vmatpush1.msra.mxu0 0.0
        %3159 = vmatprep.subr.mxu0 0.0
        %3160 = vmatpush1.msra.mxu0 0.0
        %3161 = vmatprep.subr.mxu0 0.0
        %3162 = vmatpush1.msra.mxu0 0.0
        %3163 = vmatprep.subr.mxu0 0.0
        %3164 = vmatpush1.msra.mxu0 0.0
        %3165 = vmatprep.subr.mxu0 0.0
        %3166 = vmatpush1.msra.mxu0 0.0
        %3167 = vmatprep.mubr.f32.mxu0 0.0
        %3168 = vmatmul.mubr.f32.gmra.mrb[0].mxu0 %v3101
        %v3169 = vpop.f32.mrb[0].mxu0
        %v3170 = vadd.f32 0.0, %v3169
        %v3171 = vpop.f32.mrb[0].mxu0
        %3172 = vdwg.mxu0
        %v3173 = vadd.f32 %v3088, %v3170
        %v3174 = vmax.f32 %v3173, 0.0
        %v3175 = vld [vmem:[%s9] sm:$0xff]
        %v3176 = vld [vmem:[%s9 + $0x8] sm:$0xff]
        %v3177 = vld [vmem:[%s9 + $0x10] sm:$0xff]
        %v3178 = vld [vmem:[%s9 + $0x18] sm:$0xff]
        %v3179 = vld [vmem:[%s9 + $0x20] sm:$0xff]
        %v3180 = vld [vmem:[%s9 + $0x28] sm:$0xff]
        %v3181 = vld [vmem:[%s9 + $0x30] sm:$0xff]
        %v3182 = vld [vmem:[%s9 + $0x38] sm:$0xff]
        %v3183 = vld [vmem:[%s9 + $0x40] sm:$0xff]
        %v3184 = vld [vmem:[%s9 + $0x48] sm:$0xff]
        %v3185 = vld [vmem:[%s9 + $0x50] sm:$0xff]
        %v3186 = vld [vmem:[%s9 + $0x58] sm:$0xff]
        %v3187 = vld [vmem:[%s9 + $0x60] sm:$0xff]
        %v3188 = vld [vmem:[%s9 + $0x68] sm:$0xff]
        %v3189 = vld [vmem:[%s9 + $0x70] sm:$0xff]
        %v3190 = vld [vmem:[%s9 + $0x78] sm:$0xff]
        %v3191 = vld [vmem:[%s10] sm:$0x1]
        %3192 = vmatprep.subr.mxu0 0.0
        %3193 = vmatpush1.msra.mxu0 %v3175
        %3194 = vmatprep.subr.mxu0 0.0
        %3195 = vmatpush1.msra.mxu0 %v3176
        %3196 = vmatprep.subr.mxu0 0.0
        %3197 = vmatpush1.msra.mxu0 %v3177
        %3198 = vmatprep.subr.mxu0 0.0
        %3199 = vmatpush1.msra.mxu0 %v3178
        %3200 = vmatprep.subr.mxu0 0.0
        %3201 = vmatpush1.msra.mxu0 %v3179
        %3202 = vmatprep.subr.mxu0 0.0
        %3203 = vmatpush1.msra.mxu0 %v3180
        %3204 = vmatprep.subr.mxu0 0.0
        %3205 = vmatpush1.msra.mxu0 %v3181
        %3206 = vmatprep.subr.mxu0 0.0
        %3207 = vmatpush1.msra.mxu0 %v3182
        %3208 = vmatprep.subr.mxu0 0.0
        %3209 = vmatpush1.msra.mxu0 %v3183
        %3210 = vmatprep.subr.mxu0 0.0
        %3211 = vmatpush1.msra.mxu0 %v3184
        %3212 = vmatprep.subr.mxu0 0.0
        %3213 = vmatpush1.msra.mxu0 %v3185
        %3214 = vmatprep.subr.mxu0 0.0
        %3215 = vmatpush1.msra.mxu0 %v3186
        %3216 = vmatprep.subr.mxu0 0.0
        %3217 = vmatpush1.msra.mxu0 %v3187
        %3218 = vmatprep.subr.mxu0 0.0
        %3219 = vmatpush1.msra.mxu0 %v3188
        %3220 = vmatprep.subr.mxu0 0.0
        %3221 = vmatpush1.msra.mxu0 %v3189
        %3222 = vmatprep.subr.mxu0 0.0
        %3223 = vmatpush1.msra.mxu0 %v3190
        %3224 = vmatprep.subr.mxu0 0.0
        %3225 = vmatpush1.msra.mxu0 0.0
        %3226 = vmatprep.subr.mxu0 0.0
        %3227 = vmatpush1.msra.mxu0 0.0
        %3228 = vmatprep.subr.mxu0 0.0
        %3229 = vmatpush1.msra.mxu0 0.0
        %3230 = vmatprep.subr.mxu0 0.0
        %3231 = vmatpush1.msra.mxu0 0.0
        %3232 = vmatprep.subr.mxu0 0.0
        %3233 = vmatpush1.msra.mxu0 0.0
        %3234 = vmatprep.subr.mxu0 0.0
        %3235 = vmatpush1.msra.mxu0 0.0
        %3236 = vmatprep.subr.mxu0 0.0
        %3237 = vmatpush1.msra.mxu0 0.0
        %3238 = vmatprep.subr.mxu0 0.0
        %3239 = vmatpush1.msra.mxu0 0.0
        %3240 = vmatprep.subr.mxu0 0.0
        %3241 = vmatpush1.msra.mxu0 0.0
        %3242 = vmatprep.subr.mxu0 0.0
        %3243 = vmatpush1.msra.mxu0 0.0
        %3244 = vmatprep.subr.mxu0 0.0
        %3245 = vmatpush1.msra.mxu0 0.0
        %3246 = vmatprep.subr.mxu0 0.0
        %3247 = vmatpush1.msra.mxu0 0.0
        %3248 = vmatprep.subr.mxu0 0.0
        %3249 = vmatpush1.msra.mxu0 0.0
        %3250 = vmatprep.subr.mxu0 0.0
        %3251 = vmatpush1.msra.mxu0 0.0
        %3252 = vmatprep.subr.mxu0 0.0
        %3253 = vmatpush1.msra.mxu0 0.0
        %3254 = vmatprep.subr.mxu0 0.0
        %3255 = vmatpush1.msra.mxu0 0.0
        %3256 = vmatprep.mubr.f32.mxu0 0.0
        %3257 = vmatmul.mubr.f32.gmra.mrb[0].mxu0 %v3174
        %v3258 = vpop.f32.mrb[0].mxu0
        %v3259 = vadd.f32 %v3191, %v3258
        %v3260 = vpop.f32.mrb[0].mxu0
        %3261 = vdwg.mxu0
        %v3262 = vmax.f32 %v3259, 0.0
        %v3263 = vld [vmem:[%s11] sm:$0xff]
        %v3264 = vld [vmem:[%s11 + $0x8] sm:$0xff]
        %v3265 = vld [vmem:[%s11 + $0x10] sm:$0xff]
        %v3266 = vld [vmem:[%s11 + $0x18] sm:$0xff]
        %v3267 = vld [vmem:[%s11 + $0x20] sm:$0xff]
        %v3268 = vld [vmem:[%s11 + $0x28] sm:$0xff]
        %v3269 = vld [vmem:[%s11 + $0x30] sm:$0xff]
        %v3270 = vld [vmem:[%s11 + $0x38] sm:$0xff]
        %v3271 = vld [vmem:[%s11 + $0x40] sm:$0xff]
        %v3272 = vld [vmem:[%s11 + $0x48] sm:$0xff]
        %v3273 = vld [vmem:[%s11 + $0x50] sm:$0xff]
        %v3274 = vld [vmem:[%s11 + $0x58] sm:$0xff]
        %v3275 = vld [vmem:[%s11 + $0x60] sm:$0xff]
        %v3276 = vld [vmem:[%s11 + $0x68] sm:$0xff]
        %v3277 = vld [vmem:[%s11 + $0x70] sm:$0xff]
        %v3278 = vld [vmem:[%s11 + $0x78] sm:$0xff]
        %v3279 = vld [vmem:[%s12] sm:$0x1]
        %3280 = vmatprep.subr.mxu0 0.0
        %3281 = vmatpush1.msra.mxu0 %v3263
        %3282 = vmatprep.subr.mxu0 0.0
        %3283 = vmatpush1.msra.mxu0 %v3264
        %3284 = vmatprep.subr.mxu0 0.0
        %3285 = vmatpush1.msra.mxu0 %v3265
        %3286 = vmatprep.subr.mxu0 0.0
        %3287 = vmatpush1.msra.mxu0 %v3266
        %3288 = vmatprep.subr.mxu0 0.0
        %3289 = vmatpush1.msra.mxu0 %v3267
        %3290 = vmatprep.subr.mxu0 0.0
        %3291 = vmatpush1.msra.mxu0 %v3268
        %3292 = vmatprep.subr.mxu0 0.0
        %3293 = vmatpush1.msra.mxu0 %v3269
        %3294 = vmatprep.subr.mxu0 0.0
        %3295 = vmatpush1.msra.mxu0 %v3270
        %3296 = vmatprep.subr.mxu0 0.0
        %3297 = vmatpush1.msra.mxu0 %v3271
        %3298 = vmatprep.subr.mxu0 0.0
        %3299 = vmatpush1.msra.mxu0 %v3272
        %3300 = vmatprep.subr.mxu0 0.0
        %3301 = vmatpush1.msra.mxu0 %v3273
        %3302 = vmatprep.subr.mxu0 0.0
        %3303 = vmatpush1.msra.mxu0 %v3274
        %3304 = vmatprep.subr.mxu0 0.0
        %3305 = vmatpush1.msra.mxu0 %v3275
        %3306 = vmatprep.subr.mxu0 0.0
        %3307 = vmatpush1.msra.mxu0 %v3276
        %3308 = vmatprep.subr.mxu0 0.0
        %3309 = vmatpush1.msra.mxu0 %v3277
        %3310 = vmatprep.subr.mxu0 0.0
        %3311 = vmatpush1.msra.mxu0 %v3278
        %3312 = vmatprep.subr.mxu0 0.0
        %3313 = vmatpush1.msra.mxu0 0.0
        %3314 = vmatprep.subr.mxu0 0.0
        %3315 = vmatpush1.msra.mxu0 0.0
        %3316 = vmatprep.subr.mxu0 0.0
        %3317 = vmatpush1.msra.mxu0 0.0
        %3318 = vmatprep.subr.mxu0 0.0
        %3319 = vmatpush1.msra.mxu0 0.0
        %3320 = vmatprep.subr.mxu0 0.0
        %3321 = vmatpush1.msra.mxu0 0.0
        %3322 = vmatprep.subr.mxu0 0.0
        %3323 = vmatpush1.msra.mxu0 0.0
        %3324 = vmatprep.subr.mxu0 0.0
        %3325 = vmatpush1.msra.mxu0 0.0
        %3326 = vmatprep.subr.mxu0 0.0
        %3327 = vmatpush1.msra.mxu0 0.0
        %3328 = vmatprep.subr.mxu0 0.0
        %3329 = vmatpush1.msra.mxu0 0.0
        %3330 = vmatprep.subr.mxu0 0.0
        %3331 = vmatpush1.msra.mxu0 0.0
        %3332 = vmatprep.subr.mxu0 0.0
        %3333 = vmatpush1.msra.mxu0 0.0
        %3334 = vmatprep.subr.mxu0 0.0
        %3335 = vmatpush1.msra.mxu0 0.0
        %3336 = vmatprep.subr.mxu0 0.0
        %3337 = vmatpush1.msra.mxu0 0.0
        %3338 = vmatprep.subr.mxu0 0.0
        %3339 = vmatpush1.msra.mxu0 0.0
        %3340 = vmatprep.subr.mxu0 0.0
        %3341 = vmatpush1.msra.mxu0 0.0
        %3342 = vmatprep.subr.mxu0 0.0
        %3343 = vmatpush1.msra.mxu0 0.0
        %3344 = vmatprep.mubr.f32.mxu0 0.0
        %3345 = vmatmul.mubr.f32.gmra.mrb[0].mxu0 %v3262
        %v3346 = vpop.f32.mrb[0].mxu0
        %v3347 = vadd.f32 %v3279, %v3346
        %v3348 = vpop.f32.mrb[0].mxu0
        %3349 = vdwg.mxu0
        %vm3350 = vcmask 73728
        %3351 = vst.msk [vmem:[%s432] sm:$0x1] %vm3350, %v3347
        %s3352 = sand.u32 %s313, 1
        %s3353 = scalar_lea.sflag [#allocation3], %s3352
        %s3354 = sand.u32 %s313, 1
        %s3355 = scalar_lea.vmem [#allocation2], %s3354
        // Predicated region
        $region73: #{net_forward.1} parent=71 // pred_check
          %p3356 = pneg %p323
        $region74: #{net_forward.1} parent=71 // pred_check_branch
          %3358 = sbr.rel (%p3356) target = $region76
        $region75: #{net_forward.1} parent=71 // pred_region
          %s3360 = ssub.s32 16, 16
          %3361 = vsyncadd %s3353, %s3360
          %s3362 = smul.addr %s27, 16
          %s3363 = scalar_lea.hbm %s13, %s3362
          %s3365 = sshll.u32 %s3355, 4
          %s3366 = int_to_ptr.vmem [resolvable:$true] %s3365
          %3368 = dma.vmem_to_hbm [thread:$0]  %s3366, 16, %s3363, %s3353
        $region76: #{net_forward.1} parent=71 // pred_fallthru
          _
      $region72: #{net_forward.1} parent=5 // pred_fallthru
        _
      %p3369 = scmp.le.s32.totalorder 2, %s22
      // Predicated region
      $region77: #{net_forward.1} parent=5 // pred_check
        %p3370 = pneg %p3369
      $region78: #{net_forward.1} parent=5 // pred_check_branch
        %3372 = sbr.rel (%p3370) target = $region80
      $region79: #{net_forward.1} parent=5 // pred_region
        %s3373 = ssub.s32 %s22, 2
        // Predicated region
        $region81: #{net_forward.1} parent=79 // pred_check
          %p3374 = pneg %p329
        $region82: #{net_forward.1} parent=79 // pred_check_branch
          %3376 = sbr.rel (%p3374) target = $region84
        $region83: #{net_forward.1} parent=79 // pred_region
          %s3377 = sand.u32 %s314, 1
          %s3378 = scalar_lea.sflag [#allocation3], %s3377
          %s3379 = sand.u32 %s314, 1
          %s3380 = scalar_lea.vmem [#allocation2], %s3379
          %3381 = dma.done %s3378, 16
        $region84: #{net_forward.1} parent=79 // pred_fallthru
          _
      $region80: #{net_forward.1} parent=5 // pred_fallthru
        _
    $region6: #{net_forward.1} parent=1 // loop_footer
      %s26 = sadd.s32 1, %s22
    $region7: #{net_forward.1} parent=1 // loop_footer_branch
      %21 = sbr.rel target = $region3
    $region8: #{net_forward.1} parent=1 // loop_exit
      _
    %3382 = vsyncpa [#allocation3], 1
    %s3383 = scalar_lea.sflag [#allocation3], 1
    %3384 = vsyncpa %s3383, 1

</llo_original>
